<compile_context>
chip_gen: v7x
topology: tpu7x:2x2x1
jax: 0.10.0
libtpu: 0.0.40
codegen_flags: <defaults>
</compile_context>

<pallas_src>
import functools

import jax
import jax.numpy as jnp
from jax.experimental import pallas as pl
from jax.experimental.pallas import tpu as pltpu


def _s2d_kernel(x_ref, o_ref, tr_ref, *, block_size):
    """One grid step.

    x_ref : (1, Ct, Ht, bs*W)  NCHW rows; lane index packs (h_in, w):
                               x_ref[0, c, hb, h_in*W + w] = x[b, c, hb*bs + h_in, w]
    o_ref : (1, bs, bs, Ct, Ht, Wb) output block (h_in, w_in major, (hb, wb) minor)
    tr_ref: (W, Ht) VMEM scratch holding one transposed row-slab
    """
    bs = block_size
    ct_n = x_ref.shape[1]
    ht = x_ref.shape[2]
    w = x_ref.shape[3] // bs          # original W
    wb = w // bs                      # output width

    # Small static loops: ct_n <= 8 and bs is a tiny compile-time constant.
    for ct in range(ct_n):
        for h_in in range(bs):
            # Rows with h == hb*bs + h_in: a *contiguous* lane window of width W.
            rows = x_ref[0, ct, :, pl.ds(h_in * w, w)]          # (Ht, W), dense load
            # Move W onto sublanes so the w_in de-interleave is a sublane-strided
            # read (native) instead of a lane-strided one (unsupported/expensive).
            tr_ref[...] = jnp.transpose(rows)                   # (W, Ht), XLU
            for w_in in range(bs):
                sel = tr_ref[pl.ds(w_in, wb, stride=bs), :]     # (Wb, Ht)
                o_ref[0, h_in, w_in, ct, :, :] = jnp.transpose(sel)  # (Ht, Wb), dense

    del ht  # (only used implicitly via shapes)


def _pick_tiles(C, Hb, bs, W, itemsize, block_bytes=1 << 20, max_ct=8):
    """Choose (Ct, Ht) so one block is ~block_bytes (fits v5e/v6e/v7x VMEM budgets)."""
    plane = Hb * bs * W * itemsize            # one full (H, W) channel plane
    if plane <= block_bytes:
        ht = Hb
        ct = 1
        for cand in range(min(C, max_ct), 0, -1):
            if C % cand == 0 and cand * plane <= block_bytes:
                ct = cand
                break
    else:
        ct = 1
        ht = Hb  # fallback (full-dim escape hatch); refined below when possible
        for cand in range(Hb - (Hb % 8), 0, -8):   # multiples of 8 only
            if cand > 0 and Hb % cand == 0 and cand * bs * W * itemsize <= block_bytes:
                ht = cand
                break
    return ct, ht


@functools.partial(jax.jit, static_argnums=(1,))
def space_to_depth(x_nchw, block_size):
    """Pallas implementation of SpaceToDepth.forward (NCHW in, NCHW out)."""
    B, C, H, W = x_nchw.shape
    bs = block_size
    if H % bs != 0 or W % bs != 0:
        raise ValueError("H and W must be divisible by block_size")
    if bs == 1:
        return x_nchw
    Hb, Wb = H // bs, W // bs
    itemsize = jnp.dtype(x_nchw.dtype).itemsize
    Ct, Ht = _pick_tiles(C, Hb, bs, W, itemsize)
    nC, nH = C // Ct, Hb // Ht

    # Metadata-only reshape (no transpose): lane axis packs (h_in, w).
    xv = x_nchw.reshape(B, C, Hb, bs * W)

    out6 = pl.pallas_call(
        functools.partial(_s2d_kernel, block_size=bs),
        out_shape=jax.ShapeDtypeStruct((B, bs, bs, C, Hb, Wb), x_nchw.dtype),
        grid=(B, nC, nH),
        in_specs=[
            pl.BlockSpec((1, Ct, Ht, bs * W), lambda b, c, n: (b, c, n, 0)),
        ],
        out_specs=pl.BlockSpec(
            (1, bs, bs, Ct, Ht, Wb), lambda b, c, n: (b, 0, 0, c, n, 0)
        ),
        scratch_shapes=[pltpu.VMEM((W, Ht), x_nchw.dtype)],
        compiler_params=pltpu.CompilerParams(
            dimension_semantics=("parallel", "parallel", "parallel")
        ),
    )(xv)

    # Metadata-only reshape: (B, bs, bs, C, Hb, Wb) -> (B, bs*bs*C, Hb, Wb)
    # with d = h_in*bs*C + w_in*C + c, exactly the PyTorch module's channel order.
    return out6.reshape(B, bs * bs * C, Hb, Wb)


def space_to_depth_reference(x_nchw, block_size):
    """Pure-JAX reference reproducing the PyTorch module exactly."""
    B, C, H, W = x_nchw.shape
    bs = block_size
    y = jnp.transpose(x_nchw, (0, 2, 3, 1))                  # (B, H, W, C)
    y = y.reshape(B, H // bs, bs, W // bs, bs, C)            # (B, Hb, h_in, Wb, w_in, C)
    y = jnp.transpose(y, (0, 1, 3, 2, 4, 5))                 # (B, Hb, Wb, h_in, w_in, C)
    y = y.reshape(B, H // bs, W // bs, bs * bs * C)          # d = h_in*bs*C + w_in*C + c
    return jnp.transpose(y, (0, 3, 1, 2))                    # (B, d_depth, Hb, Wb)


if __name__ == "__main__":
    block_size = 2
    B, C, H, W = 2, 4, 256, 256   # lane-dense sizes: W=256, Wb=128, Hb=128

    key = jax.random.PRNGKey(0)
    x = jax.random.normal(key, (B, C, H, W), dtype=jnp.float32)

    out = space_to_depth(x, block_size)
    out = jax.block_until_ready(out)

    ref = space_to_depth_reference(x, block_size)

    assert out.shape == (B, C * block_size * block_size, H // block_size, W // block_size), out.shape
    assert out.dtype == x.dtype
    assert jnp.array_equal(out, ref), "Pallas SpaceToDepth mismatch vs reference"

    print("KERNEL_OK")
</pallas_src>

<mosaic_0001>
module attributes {stable_mosaic.version = 11 : i64} {
  func.func @_s2d_kernel(%arg0: i32, %arg1: i32, %arg2: i32, %arg3: memref<1x4x128x512xf32, #tpu.memory_space<vmem>>, %arg4: memref<1x2x2x4x128x128xf32, #tpu.memory_space<vmem>>, %arg5: memref<256x128xf32, #tpu.memory_space<vmem>>) attributes {dimension_semantics = [#tpu.dimension_semantics<parallel>, #tpu.dimension_semantics<parallel>, #tpu.dimension_semantics<parallel>], iteration_bounds = array<i64: 2, 1, 1>, scalar_prefetch = 0 : i64, scratch_operands = 1 : i64, tpu.core_type = #tpu.core_type<tc>, window_params = [{transform_indices = @transform_0, window_bounds = array<i64: 1, 4, 128, 512>}, {transform_indices = @transform_1, window_bounds = array<i64: 1, 2, 2, 4, 128, 128>}]} {
    %c0 = arith.constant 0 : index
    %c0_0 = arith.constant 0 : index
    %c0_1 = arith.constant 0 : index
    %c0_2 = arith.constant 0 : index
    %0 = vector.load %arg3[%c0, %c0_0, %c0_1, %c0_2] : memref<1x4x128x512xf32, #tpu.memory_space<vmem>>, vector<1x1x128x256xf32>
    %1 = vector.shape_cast %0 : vector<1x1x128x256xf32> to vector<128x256xf32>
    %2 = tpu.transpose %1, [1, 0] : vector<128x256xf32> -> vector<256x128xf32>
    %c0_3 = arith.constant 0 : index
    %c0_4 = arith.constant 0 : index
    %3 = vector.load %arg5[%c0_3, %c0_4] : memref<256x128xf32, #tpu.memory_space<vmem>>, vector<256x128xf32>
    tpu.vector_store %arg5[%c0_3, %c0_4], %2 {strides = array<i32>} : memref<256x128xf32, #tpu.memory_space<vmem>>, vector<256x128xf32>,
    %c0_5 = arith.constant 0 : index
    %c0_6 = arith.constant 0 : index
    %4 = tpu.strided_load %arg5[%c0_5, %c0_6] {strides = array<i32: 2, 1>} : memref<256x128xf32, #tpu.memory_space<vmem>>, vector<128x128xf32>
    %5 = tpu.transpose %4, [1, 0] : vector<128x128xf32> -> vector<128x128xf32>
    %c0_7 = arith.constant 0 : index
    %c0_8 = arith.constant 0 : index
    %c0_9 = arith.constant 0 : index
    %c0_10 = arith.constant 0 : index
    %c0_11 = arith.constant 0 : index
    %c0_12 = arith.constant 0 : index
    %6 = vector.load %arg4[%c0_7, %c0_8, %c0_9, %c0_10, %c0_11, %c0_12] : memref<1x2x2x4x128x128xf32, #tpu.memory_space<vmem>>, vector<1x1x1x1x128x128xf32>
    %7 = vector.shape_cast %6 : vector<1x1x1x1x128x128xf32> to vector<128x128xf32>
    %8 = vector.shape_cast %5 : vector<128x128xf32> to vector<1x1x1x1x128x128xf32>
    tpu.vector_store %arg4[%c0_7, %c0_8, %c0_9, %c0_10, %c0_11, %c0_12], %8 {strides = array<i32>} : memref<1x2x2x4x128x128xf32, #tpu.memory_space<vmem>>, vector<1x1x1x1x128x128xf32>,
    %c1 = arith.constant 1 : index
    %c0_13 = arith.constant 0 : index
    %9 = tpu.strided_load %arg5[%c1, %c0_13] {strides = array<i32: 2, 1>} : memref<256x128xf32, #tpu.memory_space<vmem>>, vector<128x128xf32>
    %10 = tpu.transpose %9, [1, 0] : vector<128x128xf32> -> vector<128x128xf32>
    %c0_14 = arith.constant 0 : index
    %c0_15 = arith.constant 0 : index
    %c1_16 = arith.constant 1 : index
    %c0_17 = arith.constant 0 : index
    %c0_18 = arith.constant 0 : index
    %c0_19 = arith.constant 0 : index
    %11 = vector.load %arg4[%c0_14, %c0_15, %c1_16, %c0_17, %c0_18, %c0_19] : memref<1x2x2x4x128x128xf32, #tpu.memory_space<vmem>>, vector<1x1x1x1x128x128xf32>
    %12 = vector.shape_cast %11 : vector<1x1x1x1x128x128xf32> to vector<128x128xf32>
    %13 = vector.shape_cast %10 : vector<128x128xf32> to vector<1x1x1x1x128x128xf32>
    tpu.vector_store %arg4[%c0_14, %c0_15, %c1_16, %c0_17, %c0_18, %c0_19], %13 {strides = array<i32>} : memref<1x2x2x4x128x128xf32, #tpu.memory_space<vmem>>, vector<1x1x1x1x128x128xf32>,
    %c0_20 = arith.constant 0 : index
    %c0_21 = arith.constant 0 : index
    %c0_22 = arith.constant 0 : index
    %c256 = arith.constant 256 : index
    %14 = vector.load %arg3[%c0_20, %c0_21, %c0_22, %c256] : memref<1x4x128x512xf32, #tpu.memory_space<vmem>>, vector<1x1x128x256xf32>
    %15 = vector.shape_cast %14 : vector<1x1x128x256xf32> to vector<128x256xf32>
    %16 = tpu.transpose %15, [1, 0] : vector<128x256xf32> -> vector<256x128xf32>
    %c0_23 = arith.constant 0 : index
    %c0_24 = arith.constant 0 : index
    %17 = vector.load %arg5[%c0_23, %c0_24] : memref<256x128xf32, #tpu.memory_space<vmem>>, vector<256x128xf32>
    tpu.vector_store %arg5[%c0_23, %c0_24], %16 {strides = array<i32>} : memref<256x128xf32, #tpu.memory_space<vmem>>, vector<256x128xf32>,
    %c0_25 = arith.constant 0 : index
    %c0_26 = arith.constant 0 : index
    %18 = tpu.strided_load %arg5[%c0_25, %c0_26] {strides = array<i32: 2, 1>} : memref<256x128xf32, #tpu.memory_space<vmem>>, vector<128x128xf32>
    %19 = tpu.transpose %18, [1, 0] : vector<128x128xf32> -> vector<128x128xf32>
    %c0_27 = arith.constant 0 : index
    %c1_28 = arith.constant 1 : index
    %c0_29 = arith.constant 0 : index
    %c0_30 = arith.constant 0 : index
    %c0_31 = arith.constant 0 : index
    %c0_32 = arith.constant 0 : index
    %20 = vector.load %arg4[%c0_27, %c1_28, %c0_29, %c0_30, %c0_31, %c0_32] : memref<1x2x2x4x128x128xf32, #tpu.memory_space<vmem>>, vector<1x1x1x1x128x128xf32>
    %21 = vector.shape_cast %20 : vector<1x1x1x1x128x128xf32> to vector<128x128xf32>
    %22 = vector.shape_cast %19 : vector<128x128xf32> to vector<1x1x1x1x128x128xf32>
    tpu.vector_store %arg4[%c0_27, %c1_28, %c0_29, %c0_30, %c0_31, %c0_32], %22 {strides = array<i32>} : memref<1x2x2x4x128x128xf32, #tpu.memory_space<vmem>>, vector<1x1x1x1x128x128xf32>,
    %c1_33 = arith.constant 1 : index
    %c0_34 = arith.constant 0 : index
    %23 = tpu.strided_load %arg5[%c1_33, %c0_34] {strides = array<i32: 2, 1>} : memref<256x128xf32, #tpu.memory_space<vmem>>, vector<128x128xf32>
    %24 = tpu.transpose %23, [1, 0] : vector<128x128xf32> -> vector<128x128xf32>
    %c0_35 = arith.constant 0 : index
    %c1_36 = arith.constant 1 : index
    %c1_37 = arith.constant 1 : index
    %c0_38 = arith.constant 0 : index
    %c0_39 = arith.constant 0 : index
    %c0_40 = arith.constant 0 : index
    %25 = vector.load %arg4[%c0_35, %c1_36, %c1_37, %c0_38, %c0_39, %c0_40] : memref<1x2x2x4x128x128xf32, #tpu.memory_space<vmem>>, vector<1x1x1x1x128x128xf32>
    %26 = vector.shape_cast %25 : vector<1x1x1x1x128x128xf32> to vector<128x128xf32>
    %27 = vector.shape_cast %24 : vector<128x128xf32> to vector<1x1x1x1x128x128xf32>
    tpu.vector_store %arg4[%c0_35, %c1_36, %c1_37, %c0_38, %c0_39, %c0_40], %27 {strides = array<i32>} : memref<1x2x2x4x128x128xf32, #tpu.memory_space<vmem>>, vector<1x1x1x1x128x128xf32>,
    %c0_41 = arith.constant 0 : index
    %c1_42 = arith.constant 1 : index
    %c0_43 = arith.constant 0 : index
    %c0_44 = arith.constant 0 : index
    %28 = vector.load %arg3[%c0_41, %c1_42, %c0_43, %c0_44] : memref<1x4x128x512xf32, #tpu.memory_space<vmem>>, vector<1x1x128x256xf32>
    %29 = vector.shape_cast %28 : vector<1x1x128x256xf32> to vector<128x256xf32>
    %30 = tpu.transpose %29, [1, 0] : vector<128x256xf32> -> vector<256x128xf32>
    %c0_45 = arith.constant 0 : index
    %c0_46 = arith.constant 0 : index
    %31 = vector.load %arg5[%c0_45, %c0_46] : memref<256x128xf32, #tpu.memory_space<vmem>>, vector<256x128xf32>
    tpu.vector_store %arg5[%c0_45, %c0_46], %30 {strides = array<i32>} : memref<256x128xf32, #tpu.memory_space<vmem>>, vector<256x128xf32>,
    %c0_47 = arith.constant 0 : index
    %c0_48 = arith.constant 0 : index
    %32 = tpu.strided_load %arg5[%c0_47, %c0_48] {strides = array<i32: 2, 1>} : memref<256x128xf32, #tpu.memory_space<vmem>>, vector<128x128xf32>
    %33 = tpu.transpose %32, [1, 0] : vector<128x128xf32> -> vector<128x128xf32>
    %c0_49 = arith.constant 0 : index
    %c0_50 = arith.constant 0 : index
    %c0_51 = arith.constant 0 : index
    %c1_52 = arith.constant 1 : index
    %c0_53 = arith.constant 0 : index
    %c0_54 = arith.constant 0 : index
    %34 = vector.load %arg4[%c0_49, %c0_50, %c0_51, %c1_52, %c0_53, %c0_54] : memref<1x2x2x4x128x128xf32, #tpu.memory_space<vmem>>, vector<1x1x1x1x128x128xf32>
    %35 = vector.shape_cast %34 : vector<1x1x1x1x128x128xf32> to vector<128x128xf32>
    %36 = vector.shape_cast %33 : vector<128x128xf32> to vector<1x1x1x1x128x128xf32>
    tpu.vector_store %arg4[%c0_49, %c0_50, %c0_51, %c1_52, %c0_53, %c0_54], %36 {strides = array<i32>} : memref<1x2x2x4x128x128xf32, #tpu.memory_space<vmem>>, vector<1x1x1x1x128x128xf32>,
    %c1_55 = arith.constant 1 : index
    %c0_56 = arith.constant 0 : index
    %37 = tpu.strided_load %arg5[%c1_55, %c0_56] {strides = array<i32: 2, 1>} : memref<256x128xf32, #tpu.memory_space<vmem>>, vector<128x128xf32>
    %38 = tpu.transpose %37, [1, 0] : vector<128x128xf32> -> vector<128x128xf32>
    %c0_57 = arith.constant 0 : index
    %c0_58 = arith.constant 0 : index
    %c1_59 = arith.constant 1 : index
    %c1_60 = arith.constant 1 : index
    %c0_61 = arith.constant 0 : index
    %c0_62 = arith.constant 0 : index
    %39 = vector.load %arg4[%c0_57, %c0_58, %c1_59, %c1_60, %c0_61, %c0_62] : memref<1x2x2x4x128x128xf32, #tpu.memory_space<vmem>>, vector<1x1x1x1x128x128xf32>
    %40 = vector.shape_cast %39 : vector<1x1x1x1x128x128xf32> to vector<128x128xf32>
    %41 = vector.shape_cast %38 : vector<128x128xf32> to vector<1x1x1x1x128x128xf32>
    tpu.vector_store %arg4[%c0_57, %c0_58, %c1_59, %c1_60, %c0_61, %c0_62], %41 {strides = array<i32>} : memref<1x2x2x4x128x128xf32, #tpu.memory_space<vmem>>, vector<1x1x1x1x128x128xf32>,
    %c0_63 = arith.constant 0 : index
    %c1_64 = arith.constant 1 : index
    %c0_65 = arith.constant 0 : index
    %c256_66 = arith.constant 256 : index
    %42 = vector.load %arg3[%c0_63, %c1_64, %c0_65, %c256_66] : memref<1x4x128x512xf32, #tpu.memory_space<vmem>>, vector<1x1x128x256xf32>
    %43 = vector.shape_cast %42 : vector<1x1x128x256xf32> to vector<128x256xf32>
    %44 = tpu.transpose %43, [1, 0] : vector<128x256xf32> -> vector<256x128xf32>
    %c0_67 = arith.constant 0 : index
    %c0_68 = arith.constant 0 : index
    %45 = vector.load %arg5[%c0_67, %c0_68] : memref<256x128xf32, #tpu.memory_space<vmem>>, vector<256x128xf32>
    tpu.vector_store %arg5[%c0_67, %c0_68], %44 {strides = array<i32>} : memref<256x128xf32, #tpu.memory_space<vmem>>, vector<256x128xf32>,
    %c0_69 = arith.constant 0 : index
    %c0_70 = arith.constant 0 : index
    %46 = tpu.strided_load %arg5[%c0_69, %c0_70] {strides = array<i32: 2, 1>} : memref<256x128xf32, #tpu.memory_space<vmem>>, vector<128x128xf32>
    %47 = tpu.transpose %46, [1, 0] : vector<128x128xf32> -> vector<128x128xf32>
    %c0_71 = arith.constant 0 : index
    %c1_72 = arith.constant 1 : index
    %c0_73 = arith.constant 0 : index
    %c1_74 = arith.constant 1 : index
    %c0_75 = arith.constant 0 : index
    %c0_76 = arith.constant 0 : index
    %48 = vector.load %arg4[%c0_71, %c1_72, %c0_73, %c1_74, %c0_75, %c0_76] : memref<1x2x2x4x128x128xf32, #tpu.memory_space<vmem>>, vector<1x1x1x1x128x128xf32>
    %49 = vector.shape_cast %48 : vector<1x1x1x1x128x128xf32> to vector<128x128xf32>
    %50 = vector.shape_cast %47 : vector<128x128xf32> to vector<1x1x1x1x128x128xf32>
    tpu.vector_store %arg4[%c0_71, %c1_72, %c0_73, %c1_74, %c0_75, %c0_76], %50 {strides = array<i32>} : memref<1x2x2x4x128x128xf32, #tpu.memory_space<vmem>>, vector<1x1x1x1x128x128xf32>,
    %c1_77 = arith.constant 1 : index
    %c0_78 = arith.constant 0 : index
    %51 = tpu.strided_load %arg5[%c1_77, %c0_78] {strides = array<i32: 2, 1>} : memref<256x128xf32, #tpu.memory_space<vmem>>, vector<128x128xf32>
    %52 = tpu.transpose %51, [1, 0] : vector<128x128xf32> -> vector<128x128xf32>
    %c0_79 = arith.constant 0 : index
    %c1_80 = arith.constant 1 : index
    %c1_81 = arith.constant 1 : index
    %c1_82 = arith.constant 1 : index
    %c0_83 = arith.constant 0 : index
    %c0_84 = arith.constant 0 : index
    %53 = vector.load %arg4[%c0_79, %c1_80, %c1_81, %c1_82, %c0_83, %c0_84] : memref<1x2x2x4x128x128xf32, #tpu.memory_space<vmem>>, vector<1x1x1x1x128x128xf32>
    %54 = vector.shape_cast %53 : vector<1x1x1x1x128x128xf32> to vector<128x128xf32>
    %55 = vector.shape_cast %52 : vector<128x128xf32> to vector<1x1x1x1x128x128xf32>
    tpu.vector_store %arg4[%c0_79, %c1_80, %c1_81, %c1_82, %c0_83, %c0_84], %55 {strides = array<i32>} : memref<1x2x2x4x128x128xf32, #tpu.memory_space<vmem>>, vector<1x1x1x1x128x128xf32>,
    %c0_85 = arith.constant 0 : index
    %c2 = arith.constant 2 : index
    %c0_86 = arith.constant 0 : index
    %c0_87 = arith.constant 0 : index
    %56 = vector.load %arg3[%c0_85, %c2, %c0_86, %c0_87] : memref<1x4x128x512xf32, #tpu.memory_space<vmem>>, vector<1x1x128x256xf32>
    %57 = vector.shape_cast %56 : vector<1x1x128x256xf32> to vector<128x256xf32>
    %58 = tpu.transpose %57, [1, 0] : vector<128x256xf32> -> vector<256x128xf32>
    %c0_88 = arith.constant 0 : index
    %c0_89 = arith.constant 0 : index
    %59 = vector.load %arg5[%c0_88, %c0_89] : memref<256x128xf32, #tpu.memory_space<vmem>>, vector<256x128xf32>
    tpu.vector_store %arg5[%c0_88, %c0_89], %58 {strides = array<i32>} : memref<256x128xf32, #tpu.memory_space<vmem>>, vector<256x128xf32>,
    %c0_90 = arith.constant 0 : index
    %c0_91 = arith.constant 0 : index
    %60 = tpu.strided_load %arg5[%c0_90, %c0_91] {strides = array<i32: 2, 1>} : memref<256x128xf32, #tpu.memory_space<vmem>>, vector<128x128xf32>
    %61 = tpu.transpose %60, [1, 0] : vector<128x128xf32> -> vector<128x128xf32>
    %c0_92 = arith.constant 0 : index
    %c0_93 = arith.constant 0 : index
    %c0_94 = arith.constant 0 : index
    %c2_95 = arith.constant 2 : index
    %c0_96 = arith.constant 0 : index
    %c0_97 = arith.constant 0 : index
    %62 = vector.load %arg4[%c0_92, %c0_93, %c0_94, %c2_95, %c0_96, %c0_97] : memref<1x2x2x4x128x128xf32, #tpu.memory_space<vmem>>, vector<1x1x1x1x128x128xf32>
    %63 = vector.shape_cast %62 : vector<1x1x1x1x128x128xf32> to vector<128x128xf32>
    %64 = vector.shape_cast %61 : vector<128x128xf32> to vector<1x1x1x1x128x128xf32>
    tpu.vector_store %arg4[%c0_92, %c0_93, %c0_94, %c2_95, %c0_96, %c0_97], %64 {strides = array<i32>} : memref<1x2x2x4x128x128xf32, #tpu.memory_space<vmem>>, vector<1x1x1x1x128x128xf32>,
    %c1_98 = arith.constant 1 : index
    %c0_99 = arith.constant 0 : index
    %65 = tpu.strided_load %arg5[%c1_98, %c0_99] {strides = array<i32: 2, 1>} : memref<256x128xf32, #tpu.memory_space<vmem>>, vector<128x128xf32>
    %66 = tpu.transpose %65, [1, 0] : vector<128x128xf32> -> vector<128x128xf32>
    %c0_100 = arith.constant 0 : index
    %c0_101 = arith.constant 0 : index
    %c1_102 = arith.constant 1 : index
    %c2_103 = arith.constant 2 : index
    %c0_104 = arith.constant 0 : index
    %c0_105 = arith.constant 0 : index
    %67 = vector.load %arg4[%c0_100, %c0_101, %c1_102, %c2_103, %c0_104, %c0_105] : memref<1x2x2x4x128x128xf32, #tpu.memory_space<vmem>>, vector<1x1x1x1x128x128xf32>
    %68 = vector.shape_cast %67 : vector<1x1x1x1x128x128xf32> to vector<128x128xf32>
    %69 = vector.shape_cast %66 : vector<128x128xf32> to vector<1x1x1x1x128x128xf32>
    tpu.vector_store %arg4[%c0_100, %c0_101, %c1_102, %c2_103, %c0_104, %c0_105], %69 {strides = array<i32>} : memref<1x2x2x4x128x128xf32, #tpu.memory_space<vmem>>, vector<1x1x1x1x128x128xf32>,
    %c0_106 = arith.constant 0 : index
    %c2_107 = arith.constant 2 : index
    %c0_108 = arith.constant 0 : index
    %c256_109 = arith.constant 256 : index
    %70 = vector.load %arg3[%c0_106, %c2_107, %c0_108, %c256_109] : memref<1x4x128x512xf32, #tpu.memory_space<vmem>>, vector<1x1x128x256xf32>
    %71 = vector.shape_cast %70 : vector<1x1x128x256xf32> to vector<128x256xf32>
    %72 = tpu.transpose %71, [1, 0] : vector<128x256xf32> -> vector<256x128xf32>
    %c0_110 = arith.constant 0 : index
    %c0_111 = arith.constant 0 : index
    %73 = vector.load %arg5[%c0_110, %c0_111] : memref<256x128xf32, #tpu.memory_space<vmem>>, vector<256x128xf32>
    tpu.vector_store %arg5[%c0_110, %c0_111], %72 {strides = array<i32>} : memref<256x128xf32, #tpu.memory_space<vmem>>, vector<256x128xf32>,
    %c0_112 = arith.constant 0 : index
    %c0_113 = arith.constant 0 : index
    %74 = tpu.strided_load %arg5[%c0_112, %c0_113] {strides = array<i32: 2, 1>} : memref<256x128xf32, #tpu.memory_space<vmem>>, vector<128x128xf32>
    %75 = tpu.transpose %74, [1, 0] : vector<128x128xf32> -> vector<128x128xf32>
    %c0_114 = arith.constant 0 : index
    %c1_115 = arith.constant 1 : index
    %c0_116 = arith.constant 0 : index
    %c2_117 = arith.constant 2 : index
    %c0_118 = arith.constant 0 : index
    %c0_119 = arith.constant 0 : index
    %76 = vector.load %arg4[%c0_114, %c1_115, %c0_116, %c2_117, %c0_118, %c0_119] : memref<1x2x2x4x128x128xf32, #tpu.memory_space<vmem>>, vector<1x1x1x1x128x128xf32>
    %77 = vector.shape_cast %76 : vector<1x1x1x1x128x128xf32> to vector<128x128xf32>
    %78 = vector.shape_cast %75 : vector<128x128xf32> to vector<1x1x1x1x128x128xf32>
    tpu.vector_store %arg4[%c0_114, %c1_115, %c0_116, %c2_117, %c0_118, %c0_119], %78 {strides = array<i32>} : memref<1x2x2x4x128x128xf32, #tpu.memory_space<vmem>>, vector<1x1x1x1x128x128xf32>,
    %c1_120 = arith.constant 1 : index
    %c0_121 = arith.constant 0 : index
    %79 = tpu.strided_load %arg5[%c1_120, %c0_121] {strides = array<i32: 2, 1>} : memref<256x128xf32, #tpu.memory_space<vmem>>, vector<128x128xf32>
    %80 = tpu.transpose %79, [1, 0] : vector<128x128xf32> -> vector<128x128xf32>
    %c0_122 = arith.constant 0 : index
    %c1_123 = arith.constant 1 : index
    %c1_124 = arith.constant 1 : index
    %c2_125 = arith.constant 2 : index
    %c0_126 = arith.constant 0 : index
    %c0_127 = arith.constant 0 : index
    %81 = vector.load %arg4[%c0_122, %c1_123, %c1_124, %c2_125, %c0_126, %c0_127] : memref<1x2x2x4x128x128xf32, #tpu.memory_space<vmem>>, vector<1x1x1x1x128x128xf32>
    %82 = vector.shape_cast %81 : vector<1x1x1x1x128x128xf32> to vector<128x128xf32>
    %83 = vector.shape_cast %80 : vector<128x128xf32> to vector<1x1x1x1x128x128xf32>
    tpu.vector_store %arg4[%c0_122, %c1_123, %c1_124, %c2_125, %c0_126, %c0_127], %83 {strides = array<i32>} : memref<1x2x2x4x128x128xf32, #tpu.memory_space<vmem>>, vector<1x1x1x1x128x128xf32>,
    %c0_128 = arith.constant 0 : index
    %c3 = arith.constant 3 : index
    %c0_129 = arith.constant 0 : index
    %c0_130 = arith.constant 0 : index
    %84 = vector.load %arg3[%c0_128, %c3, %c0_129, %c0_130] : memref<1x4x128x512xf32, #tpu.memory_space<vmem>>, vector<1x1x128x256xf32>
    %85 = vector.shape_cast %84 : vector<1x1x128x256xf32> to vector<128x256xf32>
    %86 = tpu.transpose %85, [1, 0] : vector<128x256xf32> -> vector<256x128xf32>
    %c0_131 = arith.constant 0 : index
    %c0_132 = arith.constant 0 : index
    %87 = vector.load %arg5[%c0_131, %c0_132] : memref<256x128xf32, #tpu.memory_space<vmem>>, vector<256x128xf32>
    tpu.vector_store %arg5[%c0_131, %c0_132], %86 {strides = array<i32>} : memref<256x128xf32, #tpu.memory_space<vmem>>, vector<256x128xf32>,
    %c0_133 = arith.constant 0 : index
    %c0_134 = arith.constant 0 : index
    %88 = tpu.strided_load %arg5[%c0_133, %c0_134] {strides = array<i32: 2, 1>} : memref<256x128xf32, #tpu.memory_space<vmem>>, vector<128x128xf32>
    %89 = tpu.transpose %88, [1, 0] : vector<128x128xf32> -> vector<128x128xf32>
    %c0_135 = arith.constant 0 : index
    %c0_136 = arith.constant 0 : index
    %c0_137 = arith.constant 0 : index
    %c3_138 = arith.constant 3 : index
    %c0_139 = arith.constant 0 : index
    %c0_140 = arith.constant 0 : index
    %90 = vector.load %arg4[%c0_135, %c0_136, %c0_137, %c3_138, %c0_139, %c0_140] : memref<1x2x2x4x128x128xf32, #tpu.memory_space<vmem>>, vector<1x1x1x1x128x128xf32>
    %91 = vector.shape_cast %90 : vector<1x1x1x1x128x128xf32> to vector<128x128xf32>
    %92 = vector.shape_cast %89 : vector<128x128xf32> to vector<1x1x1x1x128x128xf32>
    tpu.vector_store %arg4[%c0_135, %c0_136, %c0_137, %c3_138, %c0_139, %c0_140], %92 {strides = array<i32>} : memref<1x2x2x4x128x128xf32, #tpu.memory_space<vmem>>, vector<1x1x1x1x128x128xf32>,
    %c1_141 = arith.constant 1 : index
    %c0_142 = arith.constant 0 : index
    %93 = tpu.strided_load %arg5[%c1_141, %c0_142] {strides = array<i32: 2, 1>} : memref<256x128xf32, #tpu.memory_space<vmem>>, vector<128x128xf32>
    %94 = tpu.transpose %93, [1, 0] : vector<128x128xf32> -> vector<128x128xf32>
    %c0_143 = arith.constant 0 : index
    %c0_144 = arith.constant 0 : index
    %c1_145 = arith.constant 1 : index
    %c3_146 = arith.constant 3 : index
    %c0_147 = arith.constant 0 : index
    %c0_148 = arith.constant 0 : index
    %95 = vector.load %arg4[%c0_143, %c0_144, %c1_145, %c3_146, %c0_147, %c0_148] : memref<1x2x2x4x128x128xf32, #tpu.memory_space<vmem>>, vector<1x1x1x1x128x128xf32>
    %96 = vector.shape_cast %95 : vector<1x1x1x1x128x128xf32> to vector<128x128xf32>
    %97 = vector.shape_cast %94 : vector<128x128xf32> to vector<1x1x1x1x128x128xf32>
    tpu.vector_store %arg4[%c0_143, %c0_144, %c1_145, %c3_146, %c0_147, %c0_148], %97 {strides = array<i32>} : memref<1x2x2x4x128x128xf32, #tpu.memory_space<vmem>>, vector<1x1x1x1x128x128xf32>,
    %c0_149 = arith.constant 0 : index
    %c3_150 = arith.constant 3 : index
    %c0_151 = arith.constant 0 : index
    %c256_152 = arith.constant 256 : index
    %98 = vector.load %arg3[%c0_149, %c3_150, %c0_151, %c256_152] : memref<1x4x128x512xf32, #tpu.memory_space<vmem>>, vector<1x1x128x256xf32>
    %99 = vector.shape_cast %98 : vector<1x1x128x256xf32> to vector<128x256xf32>
    %100 = tpu.transpose %99, [1, 0] : vector<128x256xf32> -> vector<256x128xf32>
    %c0_153 = arith.constant 0 : index
    %c0_154 = arith.constant 0 : index
    %101 = vector.load %arg5[%c0_153, %c0_154] : memref<256x128xf32, #tpu.memory_space<vmem>>, vector<256x128xf32>
    tpu.vector_store %arg5[%c0_153, %c0_154], %100 {strides = array<i32>} : memref<256x128xf32, #tpu.memory_space<vmem>>, vector<256x128xf32>,
    %c0_155 = arith.constant 0 : index
    %c0_156 = arith.constant 0 : index
    %102 = tpu.strided_load %arg5[%c0_155, %c0_156] {strides = array<i32: 2, 1>} : memref<256x128xf32, #tpu.memory_space<vmem>>, vector<128x128xf32>
    %103 = tpu.transpose %102, [1, 0] : vector<128x128xf32> -> vector<128x128xf32>
    %c0_157 = arith.constant 0 : index
    %c1_158 = arith.constant 1 : index
    %c0_159 = arith.constant 0 : index
    %c3_160 = arith.constant 3 : index
    %c0_161 = arith.constant 0 : index
    %c0_162 = arith.constant 0 : index
    %104 = vector.load %arg4[%c0_157, %c1_158, %c0_159, %c3_160, %c0_161, %c0_162] : memref<1x2x2x4x128x128xf32, #tpu.memory_space<vmem>>, vector<1x1x1x1x128x128xf32>
    %105 = vector.shape_cast %104 : vector<1x1x1x1x128x128xf32> to vector<128x128xf32>
    %106 = vector.shape_cast %103 : vector<128x128xf32> to vector<1x1x1x1x128x128xf32>
    tpu.vector_store %arg4[%c0_157, %c1_158, %c0_159, %c3_160, %c0_161, %c0_162], %106 {strides = array<i32>} : memref<1x2x2x4x128x128xf32, #tpu.memory_space<vmem>>, vector<1x1x1x1x128x128xf32>,
    %c1_163 = arith.constant 1 : index
    %c0_164 = arith.constant 0 : index
    %107 = tpu.strided_load %arg5[%c1_163, %c0_164] {strides = array<i32: 2, 1>} : memref<256x128xf32, #tpu.memory_space<vmem>>, vector<128x128xf32>
    %108 = tpu.transpose %107, [1, 0] : vector<128x128xf32> -> vector<128x128xf32>
    %c0_165 = arith.constant 0 : index
    %c1_166 = arith.constant 1 : index
    %c1_167 = arith.constant 1 : index
    %c3_168 = arith.constant 3 : index
    %c0_169 = arith.constant 0 : index
    %c0_170 = arith.constant 0 : index
    %109 = vector.load %arg4[%c0_165, %c1_166, %c1_167, %c3_168, %c0_169, %c0_170] : memref<1x2x2x4x128x128xf32, #tpu.memory_space<vmem>>, vector<1x1x1x1x128x128xf32>
    %110 = vector.shape_cast %109 : vector<1x1x1x1x128x128xf32> to vector<128x128xf32>
    %111 = vector.shape_cast %108 : vector<128x128xf32> to vector<1x1x1x1x128x128xf32>
    tpu.vector_store %arg4[%c0_165, %c1_166, %c1_167, %c3_168, %c0_169, %c0_170], %111 {strides = array<i32>} : memref<1x2x2x4x128x128xf32, #tpu.memory_space<vmem>>, vector<1x1x1x1x128x128xf32>,
    return
  }
  func.func @transform_0(%arg0: i32, %arg1: i32, %arg2: i32) -> (i32, i32, i32, i32) {
    %c0_i32 = arith.constant 0 : i32
    %c0_i32_0 = arith.constant 0 : i32
    return %arg0, %arg1, %arg2, %c0_i32 : i32, i32, i32, i32
  }
  func.func @transform_1(%arg0: i32, %arg1: i32, %arg2: i32) -> (i32, i32, i32, i32, i32, i32) {
    %c0_i32 = arith.constant 0 : i32
    %c0_i32_0 = arith.constant 0 : i32
    %c0_i32_1 = arith.constant 0 : i32
    %c0_i32_2 = arith.constant 0 : i32
    return %arg0, %c0_i32, %c0_i32_0, %arg1, %arg2, %c0_i32_1 : i32, i32, i32, i32, i32, i32
  }
}

</mosaic_0001>

<llo_original>
// kernel: space_to_depth.1
$region0: #{space_to_depth.1}
  #allocation0 [shape = 'u32[]', space=smem, size = 0x4, offset = 0x4, fixed_abs, tag = 'smem constant byte address 0x4 - core index']
  #allocation1 [shape = 'u32[144,128]{1,0:T(1,128)}', space=vmem, size = 0x12000, scoped, tag = 'internal scratch']
  #allocation2 [shape = 'f32[256,128]{1,0:T(8,128)}', space=vmem, size = 0x20000, scoped, tag = 'scratch operand']
  %s0 = inlined_call_operand.vmem [shape: f32[2,4,128,512], index: 0, kind: input, shape index: {}]
  %s1 = inlined_call_operand.hbm [shape: f32[2,2,2,4,128,128], index: 1, kind: output, shape index: {}]
  %s2 = sld [smem:[#allocation0]]
  $region37: #{space_to_depth.1} parent=0
    _
  %s4 = ssub.s32 1, %s2
  %s5 = scalar_select 0, %s4, %s2
  $region1: #{space_to_depth.1} parent=0
    #allocation3 [shape = 'u8[2097152]{0}', space=vmem, size = 0x200000, scoped, tag = 'output window, operand 0']
    #allocation4 [shape = 's32[2]{0}', space=sflag, size = 0x8, scoped, tag = 'scoped memory for space_to_depth.1']
    %6 = vsyncpa [#allocation4], 0
    %s7 = scalar_lea.sflag [#allocation4], 1
    %8 = vsyncpa %s7, 0
    loop: start=0, step=1, limit=4
    $region2: #{space_to_depth.1} parent=1 // loop_pre_header
      _
    $region3: #{space_to_depth.1} parent=1 // loop_header
      %s10 = sphi 0, %s14
      %p11 = scmp.ge.s32.totalorder %s10, 4
      %s17 = sphi 0, %s36
      %s18 = sphi 0, %s32
      %s19 = sphi 0, %s28
      %s20 = sphi 0, %s17
      %s21 = sphi 0, %s18
      %s22 = sphi 0, %s19
      %s23 = sphi 0, %s20
      %s24 = sphi 0, %s21
      %s25 = sphi 0, %s22
      %s43 = sphi 0, %s45
      %s46 = sphi 0, %s43
      %s47 = sphi 0, %s46
      %s63 = sphi 0, %s47
      %s73 = sphi 0, %s75
      %s76 = sphi 0, %s73
      %s77 = sphi 0, %s76
      %s93 = sphi 0, %s77
    $region4: #{space_to_depth.1} parent=1 // loop_header_branch
      %13 = sbr.rel (%p11) target = $region8
    $region5: #{space_to_depth.1} parent=1 // loop_body
      %s15 = ssub.s32 %s10, 1
      %s16 = ssub.s32 %s10, 2
      %s26 = sadd.s32 1, %s19
      %p27 = scmp.ge.s32.totalorder %s26, 1
      %s28 = scalar_select %p27, 0, %s26
      %s29 = sadd.s32 1, %s18
      %s30 = scalar_select %p27, %s29, %s18
      %p31 = scmp.ge.s32.totalorder %s30, 1
      %s32 = scalar_select %p31, 0, %s30
      %s33 = sadd.s32 1, %s17
      %s34 = scalar_select %p31, %s33, %s17
      %p35 = scmp.ge.s32.totalorder %s34, 2
      %s36 = scalar_select %p35, 0, %s34
      %s37 = ssub.s32 %s17, %s36
      %s38 = ssub.s32 %s18, %s32
      %s39 = sor.u32 %s37, %s38
      %s40 = ssub.s32 %s19, %s28
      %s41 = sor.u32 %s39, %s40
      %p42 = scmp.eq.s32.totalorder %s41, 0
      %s44 = sadd.s32 %s43, 1
      %s45 = scalar_select %p42, %s43, %s44
      %p48 = pneg %p42
      %p49 = scmp.eq.s32.totalorder %s10, 1
      %p50 = por %p48, %p49
      %p51 = scmp.ne.s32.totalorder %s43, %s46
      %p52 = scmp.eq.s32.totalorder %s10, 0
      %p53 = por %p51, %p52
      %p54 = scmp.ne.s32.totalorder %s43, %s46
      %p55 = scmp.eq.s32.totalorder %s15, 1
      %p56 = por %p54, %p55
      %p57 = scmp.ne.s32.totalorder %s46, %s47
      %p58 = scmp.eq.s32.totalorder %s15, 0
      %p59 = por %p57, %p58
      %p60 = scmp.ne.s32.totalorder %s46, %s47
      %p61 = scmp.eq.s32.totalorder %s16, 1
      %p62 = por %p60, %p61
      %p64 = scmp.ne.s32.totalorder %s47, %s63
      %p65 = scmp.eq.s32.totalorder %s16, 0
      %p66 = por %p64, %p65
      %s67 = ssub.s32 %s17, %s36
      %s68 = ssub.s32 %s18, %s32
      %s69 = sor.u32 %s67, %s68
      %s70 = ssub.s32 %s19, %s28
      %s71 = sor.u32 %s69, %s70
      %p72 = scmp.eq.s32.totalorder %s71, 0
      %s74 = sadd.s32 %s73, 1
      %s75 = scalar_select %p72, %s73, %s74
      %p78 = pneg %p72
      %p79 = scmp.eq.s32.totalorder %s10, 1
      %p80 = por %p78, %p79
      %p81 = scmp.ne.s32.totalorder %s73, %s76
      %p82 = scmp.eq.s32.totalorder %s10, 0
      %p83 = por %p81, %p82
      %p84 = scmp.ne.s32.totalorder %s73, %s76
      %p85 = scmp.eq.s32.totalorder %s15, 1
      %p86 = por %p84, %p85
      %p87 = scmp.ne.s32.totalorder %s76, %s77
      %p88 = scmp.eq.s32.totalorder %s15, 0
      %p89 = por %p87, %p88
      %p90 = scmp.ne.s32.totalorder %s76, %s77
      %p91 = scmp.eq.s32.totalorder %s16, 1
      %p92 = por %p90, %p91
      %p94 = scmp.ne.s32.totalorder %s77, %s93
      %p95 = scmp.eq.s32.totalorder %s16, 0
      %p96 = por %p94, %p95
      %p97 = scmp.le.s32.totalorder 1, %s10
      %p98 = scmp.lt.s32.totalorder %s10, 3
      %p99 = pnand %p97, %p98
      %p100 = pneg %p99
      // Predicated region
      $region9: #{space_to_depth.1} parent=5 // pred_check
        _
      $region10: #{space_to_depth.1} parent=5 // pred_check_branch
        %102 = sbr.rel (%p99) target = $region12
      $region11: #{space_to_depth.1} parent=5 // pred_region
        %s103 = ssub.s32 %s10, 1
      $region12: #{space_to_depth.1} parent=5 // pred_fallthru
        _
      %p104 = scmp.lt.s32.totalorder %s10, 2
      // Predicated region
      $region13: #{space_to_depth.1} parent=5 // pred_check
        %p105 = pneg %p104
      $region14: #{space_to_depth.1} parent=5 // pred_check_branch
        %107 = sbr.rel (%p105) target = $region16
      $region15: #{space_to_depth.1} parent=5 // pred_region
        // Predicated region
        $region17: #{space_to_depth.1} parent=15 // pred_check
          %p108 = pneg %p53
        $region18: #{space_to_depth.1} parent=15 // pred_check_branch
          %110 = sbr.rel (%p108) target = $region20
        $region19: #{space_to_depth.1} parent=15 // pred_region
          %s111 = smul.u32 4, %s18
          %s112 = smul.u32 16, %s19
          %p113 = scmp.lt.s32.totalorder %s17, 1
          %s114 = scalar_select %p113, %s17, 1
          %p115 = scmp.lt.s32.totalorder %s111, 3
          %s116 = scalar_select %p115, %s111, 3
          %p117 = scmp.lt.s32.totalorder %s112, 15
          %s118 = scalar_select %p117, %s112, 15
          %s119 = smul.addr %s118, 4
          %s120 = smul.addr %s116, 64
          %s121 = sadd.s32 %s119, %s120
          %s122 = smul.addr %s114, 256
          %s123 = sadd.s32 %s121, %s122
          %s124 = smul.addr %s123, 8
          %s125 = scalar_lea.vmem %s0, %s124
          %s126 = smul.u32 4, %s18
          %s127 = smul.u32 16, %s19
        $region20: #{space_to_depth.1} parent=15 // pred_fallthru
          _
      $region16: #{space_to_depth.1} parent=5 // pred_fallthru
        _
      %p128 = scmp.le.s32.totalorder 1, %s10
      %p129 = scmp.lt.s32.totalorder %s10, 3
      %p130 = pnand %p128, %p129
      %p131 = pneg %p130
      // Predicated region
      $region21: #{space_to_depth.1} parent=5 // pred_check
        _
      $region22: #{space_to_depth.1} parent=5 // pred_check_branch
        %133 = sbr.rel (%p130) target = $region24
      $region23: #{space_to_depth.1} parent=5 // pred_region
        %s134 = ssub.s32 %s10, 1
        %s135 = smul.u32 4, %s21
        %s136 = smul.u32 16, %s22
        %p137 = scmp.lt.s32.totalorder %s20, 1
        %s138 = scalar_select %p137, %s20, 1
        %p139 = scmp.lt.s32.totalorder %s135, 3
        %s140 = scalar_select %p139, %s135, 3
        %p141 = scmp.lt.s32.totalorder %s136, 15
        %s142 = scalar_select %p141, %s136, 15
        %s143 = smul.addr %s142, 4
        %s144 = smul.addr %s140, 64
        %s145 = sadd.s32 %s143, %s144
        %s146 = smul.addr %s138, 256
        %s147 = sadd.s32 %s145, %s146
        %s148 = smul.addr %s147, 8
        %s149 = scalar_lea.vmem %s0, %s148
        %p150 = pneg %p59
        %p151 = pneg %p56
        %p152 = pneg %p89
        %p153 = pneg %p86
        %s154 = sand.u32 %s76, 1
        %s155 = scalar_lea.sflag [#allocation4], %s154
        %s156 = sand.u32 %s76, 1
        %s157 = smul.addr %s156, 2048
        %s158 = scalar_lea.vmem [#allocation3], %s157
        %s159 = smul.u32 4, %s21
        %s160 = smul.u32 16, %s22
        %p161 = scmp.lt.s32.totalorder %s20, 1
        %s162 = scalar_select %p161, %s20, 1
        %p163 = scmp.lt.s32.totalorder %s159, 3
        %s164 = scalar_select %p163, %s159, 3
        %p165 = scmp.lt.s32.totalorder %s160, 15
        %s166 = scalar_select %p165, %s160, 15
        %s167 = smul.addr %s166, 4
        %s168 = smul.addr %s164, 64
        %s169 = sadd.s32 %s167, %s168
        %s170 = smul.addr %s162, 256
        %s171 = sadd.s32 %s169, %s170
        %s172 = smul.addr %s171, 8
        %s173 = scalar_lea.vmem %s0, %s172
        %s174 = smul.u32 4, %s21
        %s175 = smul.u32 16, %s22
        %s176 = smul.u32 4, %s21
        %s177 = smul.u32 16, %s22
        %v178 = vld [vmem:[%s173] sm:$0xff]
        %v179 = vld [vmem:[%s173 + $0x8] sm:$0xff]
        %v180 = vld [vmem:[%s173 + $0x20] sm:$0xff]
        %v181 = vld [vmem:[%s173 + $0x28] sm:$0xff]
        %v182 = vld [vmem:[%s173 + $0x40] sm:$0xff]
        %v183 = vld [vmem:[%s173 + $0x48] sm:$0xff]
        %v184 = vld [vmem:[%s173 + $0x60] sm:$0xff]
        %v185 = vld [vmem:[%s173 + $0x68] sm:$0xff]
        %v186 = vld [vmem:[%s173 + $0x80] sm:$0xff]
        %v187 = vld [vmem:[%s173 + $0x88] sm:$0xff]
        %v188 = vld [vmem:[%s173 + $0xa0] sm:$0xff]
        %v189 = vld [vmem:[%s173 + $0xa8] sm:$0xff]
        %v190 = vld [vmem:[%s173 + $0xc0] sm:$0xff]
        %v191 = vld [vmem:[%s173 + $0xc8] sm:$0xff]
        %v192 = vld [vmem:[%s173 + $0xe0] sm:$0xff]
        %v193 = vld [vmem:[%s173 + $0xe8] sm:$0xff]
        %v194 = vld [vmem:[%s173 + $0x100] sm:$0xff]
        %v195 = vld [vmem:[%s173 + $0x108] sm:$0xff]
        %v196 = vld [vmem:[%s173 + $0x120] sm:$0xff]
        %v197 = vld [vmem:[%s173 + $0x128] sm:$0xff]
        %v198 = vld [vmem:[%s173 + $0x140] sm:$0xff]
        %v199 = vld [vmem:[%s173 + $0x148] sm:$0xff]
        %v200 = vld [vmem:[%s173 + $0x160] sm:$0xff]
        %v201 = vld [vmem:[%s173 + $0x168] sm:$0xff]
        %v202 = vld [vmem:[%s173 + $0x180] sm:$0xff]
        %v203 = vld [vmem:[%s173 + $0x188] sm:$0xff]
        %v204 = vld [vmem:[%s173 + $0x1a0] sm:$0xff]
        %v205 = vld [vmem:[%s173 + $0x1a8] sm:$0xff]
        %v206 = vld [vmem:[%s173 + $0x1c0] sm:$0xff]
        %v207 = vld [vmem:[%s173 + $0x1c8] sm:$0xff]
        %v208 = vld [vmem:[%s173 + $0x1e0] sm:$0xff]
        %v209 = vld [vmem:[%s173 + $0x1e8] sm:$0xff]
        %210 = vxpose.xlu0.b32.start [1/16] %v178, 128
        %211 = vxpose.xlu0.b32.cont [2/16] %v180, 128
        %212 = vxpose.xlu0.b32.cont [3/16] %v182, 128
        %213 = vxpose.xlu0.b32.cont [4/16] %v184, 128
        %214 = vxpose.xlu0.b32.cont [5/16] %v186, 128
        %215 = vxpose.xlu0.b32.cont [6/16] %v188, 128
        %216 = vxpose.xlu0.b32.cont [7/16] %v190, 128
        %217 = vxpose.xlu0.b32.cont [8/16] %v192, 128
        %218 = vxpose.xlu0.b32.cont [9/16] %v194, 128
        %219 = vxpose.xlu0.b32.cont [10/16] %v196, 128
        %220 = vxpose.xlu0.b32.cont [11/16] %v198, 128
        %221 = vxpose.xlu0.b32.cont [12/16] %v200, 128
        %222 = vxpose.xlu0.b32.cont [13/16] %v202, 128
        %223 = vxpose.xlu0.b32.cont [14/16] %v204, 128
        %224 = vxpose.xlu0.b32.cont [15/16] %v206, 128
        %225 = vxpose.xlu0.b32.end [16/16] %v208, 128
        %v226 = vpop.trf.xlu0
        %v227 = vpop.trf.xlu0
        %v228 = vpop.trf.xlu0
        %v229 = vpop.trf.xlu0
        %v230 = vpop.trf.xlu0
        %v231 = vpop.trf.xlu0
        %v232 = vpop.trf.xlu0
        %v233 = vpop.trf.xlu0
        %v234 = vpop.trf.xlu0
        %v235 = vpop.trf.xlu0
        %v236 = vpop.trf.xlu0
        %v237 = vpop.trf.xlu0
        %v238 = vpop.trf.xlu0
        %v239 = vpop.trf.xlu0
        %v240 = vpop.trf.xlu0
        %v241 = vpop.trf.xlu0
        %242 = vxpose.xlu0.b32.start [1/16] %v179, 128
        %243 = vxpose.xlu0.b32.cont [2/16] %v181, 128
        %244 = vxpose.xlu0.b32.cont [3/16] %v183, 128
        %245 = vxpose.xlu0.b32.cont [4/16] %v185, 128
        %246 = vxpose.xlu0.b32.cont [5/16] %v187, 128
        %247 = vxpose.xlu0.b32.cont [6/16] %v189, 128
        %248 = vxpose.xlu0.b32.cont [7/16] %v191, 128
        %249 = vxpose.xlu0.b32.cont [8/16] %v193, 128
        %250 = vxpose.xlu0.b32.cont [9/16] %v195, 128
        %251 = vxpose.xlu0.b32.cont [10/16] %v197, 128
        %252 = vxpose.xlu0.b32.cont [11/16] %v199, 128
        %253 = vxpose.xlu0.b32.cont [12/16] %v201, 128
        %254 = vxpose.xlu0.b32.cont [13/16] %v203, 128
        %255 = vxpose.xlu0.b32.cont [14/16] %v205, 128
        %256 = vxpose.xlu0.b32.cont [15/16] %v207, 128
        %257 = vxpose.xlu0.b32.end [16/16] %v209, 128
        %v258 = vpop.trf.xlu0
        %v259 = vpop.trf.xlu0
        %v260 = vpop.trf.xlu0
        %v261 = vpop.trf.xlu0
        %v262 = vpop.trf.xlu0
        %v263 = vpop.trf.xlu0
        %v264 = vpop.trf.xlu0
        %v265 = vpop.trf.xlu0
        %v266 = vpop.trf.xlu0
        %v267 = vpop.trf.xlu0
        %v268 = vpop.trf.xlu0
        %v269 = vpop.trf.xlu0
        %v270 = vpop.trf.xlu0
        %v271 = vpop.trf.xlu0
        %v272 = vpop.trf.xlu0
        %v273 = vpop.trf.xlu0
        %274 = vst [vmem:[#allocation2] sm:$0xff] %v226
        %275 = vst [vmem:[#allocation2 + $0x8] sm:$0xff] %v227
        %276 = vst [vmem:[#allocation2 + $0x10] sm:$0xff] %v228
        %277 = vst [vmem:[#allocation2 + $0x18] sm:$0xff] %v229
        %278 = vst [vmem:[#allocation2 + $0x20] sm:$0xff] %v230
        %279 = vst [vmem:[#allocation2 + $0x28] sm:$0xff] %v231
        %280 = vst [vmem:[#allocation2 + $0x30] sm:$0xff] %v232
        %281 = vst [vmem:[#allocation2 + $0x38] sm:$0xff] %v233
        %282 = vst [vmem:[#allocation2 + $0x40] sm:$0xff] %v234
        %283 = vst [vmem:[#allocation2 + $0x48] sm:$0xff] %v235
        %284 = vst [vmem:[#allocation2 + $0x50] sm:$0xff] %v236
        %285 = vst [vmem:[#allocation2 + $0x58] sm:$0xff] %v237
        %286 = vst [vmem:[#allocation2 + $0x60] sm:$0xff] %v238
        %287 = vst [vmem:[#allocation2 + $0x68] sm:$0xff] %v239
        %288 = vst [vmem:[#allocation2 + $0x70] sm:$0xff] %v240
        %289 = vst [vmem:[#allocation2 + $0x78] sm:$0xff] %v241
        %290 = vst [vmem:[#allocation2 + $0x80] sm:$0xff] %v258
        %291 = vst [vmem:[#allocation2 + $0x88] sm:$0xff] %v259
        %292 = vst [vmem:[#allocation2 + $0x90] sm:$0xff] %v260
        %293 = vst [vmem:[#allocation2 + $0x98] sm:$0xff] %v261
        %294 = vst [vmem:[#allocation2 + $0xa0] sm:$0xff] %v262
        %295 = vst [vmem:[#allocation2 + $0xa8] sm:$0xff] %v263
        %296 = vst [vmem:[#allocation2 + $0xb0] sm:$0xff] %v264
        %297 = vst [vmem:[#allocation2 + $0xb8] sm:$0xff] %v265
        %298 = vst [vmem:[#allocation2 + $0xc0] sm:$0xff] %v266
        %299 = vst [vmem:[#allocation2 + $0xc8] sm:$0xff] %v267
        %300 = vst [vmem:[#allocation2 + $0xd0] sm:$0xff] %v268
        %301 = vst [vmem:[#allocation2 + $0xd8] sm:$0xff] %v269
        %302 = vst [vmem:[#allocation2 + $0xe0] sm:$0xff] %v270
        %303 = vst [vmem:[#allocation2 + $0xe8] sm:$0xff] %v271
        %304 = vst [vmem:[#allocation2 + $0xf0] sm:$0xff] %v272
        %305 = vst [vmem:[#allocation2 + $0xf8] sm:$0xff] %v273
        %v306 = vld [vmem:[#allocation2] ss:$2 sm:$0xff]
        %s307 = scalar_lea.vmem [#allocation2], 16
        %v308 = vld [vmem:[%s307] ss:$2 sm:$0xff]
        %s309 = scalar_lea.vmem [#allocation2], 32
        %v310 = vld [vmem:[%s309] ss:$2 sm:$0xff]
        %s311 = scalar_lea.vmem [#allocation2], 48
        %v312 = vld [vmem:[%s311] ss:$2 sm:$0xff]
        %s313 = scalar_lea.vmem [#allocation2], 64
        %v314 = vld [vmem:[%s313] ss:$2 sm:$0xff]
        %s315 = scalar_lea.vmem [#allocation2], 80
        %v316 = vld [vmem:[%s315] ss:$2 sm:$0xff]
        %s317 = scalar_lea.vmem [#allocation2], 96
        %v318 = vld [vmem:[%s317] ss:$2 sm:$0xff]
        %s319 = scalar_lea.vmem [#allocation2], 112
        %v320 = vld [vmem:[%s319] ss:$2 sm:$0xff]
        %s321 = scalar_lea.vmem [#allocation2], 128
        %v322 = vld [vmem:[%s321] ss:$2 sm:$0xff]
        %s323 = scalar_lea.vmem [#allocation2], 144
        %v324 = vld [vmem:[%s323] ss:$2 sm:$0xff]
        %s325 = scalar_lea.vmem [#allocation2], 160
        %v326 = vld [vmem:[%s325] ss:$2 sm:$0xff]
        %s327 = scalar_lea.vmem [#allocation2], 176
        %v328 = vld [vmem:[%s327] ss:$2 sm:$0xff]
        %s329 = scalar_lea.vmem [#allocation2], 192
        %v330 = vld [vmem:[%s329] ss:$2 sm:$0xff]
        %s331 = scalar_lea.vmem [#allocation2], 208
        %v332 = vld [vmem:[%s331] ss:$2 sm:$0xff]
        %s333 = scalar_lea.vmem [#allocation2], 224
        %v334 = vld [vmem:[%s333] ss:$2 sm:$0xff]
        %s335 = scalar_lea.vmem [#allocation2], 240
        %v336 = vld [vmem:[%s335] ss:$2 sm:$0xff]
        %337 = vxpose.xlu0.b32.start [1/16] %v306, 128
        %338 = vxpose.xlu0.b32.cont [2/16] %v308, 128
        %339 = vxpose.xlu0.b32.cont [3/16] %v310, 128
        %340 = vxpose.xlu0.b32.cont [4/16] %v312, 128
        %341 = vxpose.xlu0.b32.cont [5/16] %v314, 128
        %342 = vxpose.xlu0.b32.cont [6/16] %v316, 128
        %343 = vxpose.xlu0.b32.cont [7/16] %v318, 128
        %344 = vxpose.xlu0.b32.cont [8/16] %v320, 128
        %345 = vxpose.xlu0.b32.cont [9/16] %v322, 128
        %346 = vxpose.xlu0.b32.cont [10/16] %v324, 128
        %347 = vxpose.xlu0.b32.cont [11/16] %v326, 128
        %348 = vxpose.xlu0.b32.cont [12/16] %v328, 128
        %349 = vxpose.xlu0.b32.cont [13/16] %v330, 128
        %350 = vxpose.xlu0.b32.cont [14/16] %v332, 128
        %351 = vxpose.xlu0.b32.cont [15/16] %v334, 128
        %352 = vxpose.xlu0.b32.end [16/16] %v336, 128
        %v353 = vpop.trf.xlu0
        %v354 = vpop.trf.xlu0
        %v355 = vpop.trf.xlu0
        %v356 = vpop.trf.xlu0
        %v357 = vpop.trf.xlu0
        %v358 = vpop.trf.xlu0
        %v359 = vpop.trf.xlu0
        %v360 = vpop.trf.xlu0
        %v361 = vpop.trf.xlu0
        %v362 = vpop.trf.xlu0
        %v363 = vpop.trf.xlu0
        %v364 = vpop.trf.xlu0
        %v365 = vpop.trf.xlu0
        %v366 = vpop.trf.xlu0
        %v367 = vpop.trf.xlu0
        %v368 = vpop.trf.xlu0
        %369 = vst [vmem:[%s158] sm:$0xff] %v353
        %370 = vst [vmem:[%s158 + $0x8] sm:$0xff] %v354
        %371 = vst [vmem:[%s158 + $0x10] sm:$0xff] %v355
        %372 = vst [vmem:[%s158 + $0x18] sm:$0xff] %v356
        %373 = vst [vmem:[%s158 + $0x20] sm:$0xff] %v357
        %374 = vst [vmem:[%s158 + $0x28] sm:$0xff] %v358
        %375 = vst [vmem:[%s158 + $0x30] sm:$0xff] %v359
        %376 = vst [vmem:[%s158 + $0x38] sm:$0xff] %v360
        %377 = vst [vmem:[%s158 + $0x40] sm:$0xff] %v361
        %378 = vst [vmem:[%s158 + $0x48] sm:$0xff] %v362
        %379 = vst [vmem:[%s158 + $0x50] sm:$0xff] %v363
        %380 = vst [vmem:[%s158 + $0x58] sm:$0xff] %v364
        %381 = vst [vmem:[%s158 + $0x60] sm:$0xff] %v365
        %382 = vst [vmem:[%s158 + $0x68] sm:$0xff] %v366
        %383 = vst [vmem:[%s158 + $0x70] sm:$0xff] %v367
        %384 = vst [vmem:[%s158 + $0x78] sm:$0xff] %v368
        %s385 = scalar_lea.vmem [#allocation2], 1
        %v386 = vld [vmem:[%s385] ss:$2 sm:$0xff]
        %s387 = scalar_lea.vmem [#allocation2], 17
        %v388 = vld [vmem:[%s387] ss:$2 sm:$0xff]
        %s389 = scalar_lea.vmem [#allocation2], 33
        %v390 = vld [vmem:[%s389] ss:$2 sm:$0xff]
        %s391 = scalar_lea.vmem [#allocation2], 49
        %v392 = vld [vmem:[%s391] ss:$2 sm:$0xff]
        %s393 = scalar_lea.vmem [#allocation2], 65
        %v394 = vld [vmem:[%s393] ss:$2 sm:$0xff]
        %s395 = scalar_lea.vmem [#allocation2], 81
        %v396 = vld [vmem:[%s395] ss:$2 sm:$0xff]
        %s397 = scalar_lea.vmem [#allocation2], 97
        %v398 = vld [vmem:[%s397] ss:$2 sm:$0xff]
        %s399 = scalar_lea.vmem [#allocation2], 113
        %v400 = vld [vmem:[%s399] ss:$2 sm:$0xff]
        %s401 = scalar_lea.vmem [#allocation2], 129
        %v402 = vld [vmem:[%s401] ss:$2 sm:$0xff]
        %s403 = scalar_lea.vmem [#allocation2], 145
        %v404 = vld [vmem:[%s403] ss:$2 sm:$0xff]
        %s405 = scalar_lea.vmem [#allocation2], 161
        %v406 = vld [vmem:[%s405] ss:$2 sm:$0xff]
        %s407 = scalar_lea.vmem [#allocation2], 177
        %v408 = vld [vmem:[%s407] ss:$2 sm:$0xff]
        %s409 = scalar_lea.vmem [#allocation2], 193
        %v410 = vld [vmem:[%s409] ss:$2 sm:$0xff]
        %s411 = scalar_lea.vmem [#allocation2], 209
        %v412 = vld [vmem:[%s411] ss:$2 sm:$0xff]
        %s413 = scalar_lea.vmem [#allocation2], 225
        %v414 = vld [vmem:[%s413] ss:$2 sm:$0xff]
        %s415 = scalar_lea.vmem [#allocation2], 241
        %v416 = vld [vmem:[%s415] ss:$2 sm:$0xff]
        %417 = vxpose.xlu0.b32.start [1/16] %v386, 128
        %418 = vxpose.xlu0.b32.cont [2/16] %v388, 128
        %419 = vxpose.xlu0.b32.cont [3/16] %v390, 128
        %420 = vxpose.xlu0.b32.cont [4/16] %v392, 128
        %421 = vxpose.xlu0.b32.cont [5/16] %v394, 128
        %422 = vxpose.xlu0.b32.cont [6/16] %v396, 128
        %423 = vxpose.xlu0.b32.cont [7/16] %v398, 128
        %424 = vxpose.xlu0.b32.cont [8/16] %v400, 128
        %425 = vxpose.xlu0.b32.cont [9/16] %v402, 128
        %426 = vxpose.xlu0.b32.cont [10/16] %v404, 128
        %427 = vxpose.xlu0.b32.cont [11/16] %v406, 128
        %428 = vxpose.xlu0.b32.cont [12/16] %v408, 128
        %429 = vxpose.xlu0.b32.cont [13/16] %v410, 128
        %430 = vxpose.xlu0.b32.cont [14/16] %v412, 128
        %431 = vxpose.xlu0.b32.cont [15/16] %v414, 128
        %432 = vxpose.xlu0.b32.end [16/16] %v416, 128
        %v433 = vpop.trf.xlu0
        %v434 = vpop.trf.xlu0
        %v435 = vpop.trf.xlu0
        %v436 = vpop.trf.xlu0
        %v437 = vpop.trf.xlu0
        %v438 = vpop.trf.xlu0
        %v439 = vpop.trf.xlu0
        %v440 = vpop.trf.xlu0
        %v441 = vpop.trf.xlu0
        %v442 = vpop.trf.xlu0
        %v443 = vpop.trf.xlu0
        %v444 = vpop.trf.xlu0
        %v445 = vpop.trf.xlu0
        %v446 = vpop.trf.xlu0
        %v447 = vpop.trf.xlu0
        %v448 = vpop.trf.xlu0
        %s449 = scalar_lea.vmem %s158, 512 [#allocation3]
        %450 = vst [vmem:[%s449] sm:$0xff] %v433
        %451 = vst [vmem:[%s449 + $0x8] sm:$0xff] %v434
        %452 = vst [vmem:[%s449 + $0x10] sm:$0xff] %v435
        %453 = vst [vmem:[%s449 + $0x18] sm:$0xff] %v436
        %454 = vst [vmem:[%s449 + $0x20] sm:$0xff] %v437
        %455 = vst [vmem:[%s449 + $0x28] sm:$0xff] %v438
        %456 = vst [vmem:[%s449 + $0x30] sm:$0xff] %v439
        %457 = vst [vmem:[%s449 + $0x38] sm:$0xff] %v440
        %458 = vst [vmem:[%s449 + $0x40] sm:$0xff] %v441
        %459 = vst [vmem:[%s449 + $0x48] sm:$0xff] %v442
        %460 = vst [vmem:[%s449 + $0x50] sm:$0xff] %v443
        %461 = vst [vmem:[%s449 + $0x58] sm:$0xff] %v444
        %462 = vst [vmem:[%s449 + $0x60] sm:$0xff] %v445
        %463 = vst [vmem:[%s449 + $0x68] sm:$0xff] %v446
        %464 = vst [vmem:[%s449 + $0x70] sm:$0xff] %v447
        %465 = vst [vmem:[%s449 + $0x78] sm:$0xff] %v448
        %v466 = vld [vmem:[%s173 + $0x10] sm:$0xff]
        %v467 = vld [vmem:[%s173 + $0x18] sm:$0xff]
        %v468 = vld [vmem:[%s173 + $0x30] sm:$0xff]
        %v469 = vld [vmem:[%s173 + $0x38] sm:$0xff]
        %v470 = vld [vmem:[%s173 + $0x50] sm:$0xff]
        %v471 = vld [vmem:[%s173 + $0x58] sm:$0xff]
        %v472 = vld [vmem:[%s173 + $0x70] sm:$0xff]
        %v473 = vld [vmem:[%s173 + $0x78] sm:$0xff]
        %v474 = vld [vmem:[%s173 + $0x90] sm:$0xff]
        %v475 = vld [vmem:[%s173 + $0x98] sm:$0xff]
        %v476 = vld [vmem:[%s173 + $0xb0] sm:$0xff]
        %v477 = vld [vmem:[%s173 + $0xb8] sm:$0xff]
        %v478 = vld [vmem:[%s173 + $0xd0] sm:$0xff]
        %v479 = vld [vmem:[%s173 + $0xd8] sm:$0xff]
        %v480 = vld [vmem:[%s173 + $0xf0] sm:$0xff]
        %v481 = vld [vmem:[%s173 + $0xf8] sm:$0xff]
        %v482 = vld [vmem:[%s173 + $0x110] sm:$0xff]
        %v483 = vld [vmem:[%s173 + $0x118] sm:$0xff]
        %v484 = vld [vmem:[%s173 + $0x130] sm:$0xff]
        %v485 = vld [vmem:[%s173 + $0x138] sm:$0xff]
        %v486 = vld [vmem:[%s173 + $0x150] sm:$0xff]
        %v487 = vld [vmem:[%s173 + $0x158] sm:$0xff]
        %v488 = vld [vmem:[%s173 + $0x170] sm:$0xff]
        %v489 = vld [vmem:[%s173 + $0x178] sm:$0xff]
        %v490 = vld [vmem:[%s173 + $0x190] sm:$0xff]
        %v491 = vld [vmem:[%s173 + $0x198] sm:$0xff]
        %v492 = vld [vmem:[%s173 + $0x1b0] sm:$0xff]
        %v493 = vld [vmem:[%s173 + $0x1b8] sm:$0xff]
        %v494 = vld [vmem:[%s173 + $0x1d0] sm:$0xff]
        %v495 = vld [vmem:[%s173 + $0x1d8] sm:$0xff]
        %v496 = vld [vmem:[%s173 + $0x1f0] sm:$0xff]
        %v497 = vld [vmem:[%s173 + $0x1f8] sm:$0xff]
        %498 = vxpose.xlu0.b32.start [1/16] %v466, 128
        %499 = vxpose.xlu0.b32.cont [2/16] %v468, 128
        %500 = vxpose.xlu0.b32.cont [3/16] %v470, 128
        %501 = vxpose.xlu0.b32.cont [4/16] %v472, 128
        %502 = vxpose.xlu0.b32.cont [5/16] %v474, 128
        %503 = vxpose.xlu0.b32.cont [6/16] %v476, 128
        %504 = vxpose.xlu0.b32.cont [7/16] %v478, 128
        %505 = vxpose.xlu0.b32.cont [8/16] %v480, 128
        %506 = vxpose.xlu0.b32.cont [9/16] %v482, 128
        %507 = vxpose.xlu0.b32.cont [10/16] %v484, 128
        %508 = vxpose.xlu0.b32.cont [11/16] %v486, 128
        %509 = vxpose.xlu0.b32.cont [12/16] %v488, 128
        %510 = vxpose.xlu0.b32.cont [13/16] %v490, 128
        %511 = vxpose.xlu0.b32.cont [14/16] %v492, 128
        %512 = vxpose.xlu0.b32.cont [15/16] %v494, 128
        %513 = vxpose.xlu0.b32.end [16/16] %v496, 128
        %v514 = vpop.trf.xlu0
        %v515 = vpop.trf.xlu0
        %v516 = vpop.trf.xlu0
        %v517 = vpop.trf.xlu0
        %v518 = vpop.trf.xlu0
        %v519 = vpop.trf.xlu0
        %v520 = vpop.trf.xlu0
        %v521 = vpop.trf.xlu0
        %v522 = vpop.trf.xlu0
        %v523 = vpop.trf.xlu0
        %v524 = vpop.trf.xlu0
        %v525 = vpop.trf.xlu0
        %v526 = vpop.trf.xlu0
        %v527 = vpop.trf.xlu0
        %v528 = vpop.trf.xlu0
        %v529 = vpop.trf.xlu0
        %530 = vxpose.xlu0.b32.start [1/16] %v467, 128
        %531 = vxpose.xlu0.b32.cont [2/16] %v469, 128
        %532 = vxpose.xlu0.b32.cont [3/16] %v471, 128
        %533 = vxpose.xlu0.b32.cont [4/16] %v473, 128
        %534 = vxpose.xlu0.b32.cont [5/16] %v475, 128
        %535 = vxpose.xlu0.b32.cont [6/16] %v477, 128
        %536 = vxpose.xlu0.b32.cont [7/16] %v479, 128
        %537 = vxpose.xlu0.b32.cont [8/16] %v481, 128
        %538 = vxpose.xlu0.b32.cont [9/16] %v483, 128
        %539 = vxpose.xlu0.b32.cont [10/16] %v485, 128
        %540 = vxpose.xlu0.b32.cont [11/16] %v487, 128
        %541 = vxpose.xlu0.b32.cont [12/16] %v489, 128
        %542 = vxpose.xlu0.b32.cont [13/16] %v491, 128
        %543 = vxpose.xlu0.b32.cont [14/16] %v493, 128
        %544 = vxpose.xlu0.b32.cont [15/16] %v495, 128
        %545 = vxpose.xlu0.b32.end [16/16] %v497, 128
        %v546 = vpop.trf.xlu0
        %v547 = vpop.trf.xlu0
        %v548 = vpop.trf.xlu0
        %v549 = vpop.trf.xlu0
        %v550 = vpop.trf.xlu0
        %v551 = vpop.trf.xlu0
        %v552 = vpop.trf.xlu0
        %v553 = vpop.trf.xlu0
        %v554 = vpop.trf.xlu0
        %v555 = vpop.trf.xlu0
        %v556 = vpop.trf.xlu0
        %v557 = vpop.trf.xlu0
        %v558 = vpop.trf.xlu0
        %v559 = vpop.trf.xlu0
        %v560 = vpop.trf.xlu0
        %v561 = vpop.trf.xlu0
        %562 = vst [vmem:[#allocation2] sm:$0xff] %v514
        %563 = vst [vmem:[#allocation2 + $0x8] sm:$0xff] %v515
        %564 = vst [vmem:[#allocation2 + $0x10] sm:$0xff] %v516
        %565 = vst [vmem:[#allocation2 + $0x18] sm:$0xff] %v517
        %566 = vst [vmem:[#allocation2 + $0x20] sm:$0xff] %v518
        %567 = vst [vmem:[#allocation2 + $0x28] sm:$0xff] %v519
        %568 = vst [vmem:[#allocation2 + $0x30] sm:$0xff] %v520
        %569 = vst [vmem:[#allocation2 + $0x38] sm:$0xff] %v521
        %570 = vst [vmem:[#allocation2 + $0x40] sm:$0xff] %v522
        %571 = vst [vmem:[#allocation2 + $0x48] sm:$0xff] %v523
        %572 = vst [vmem:[#allocation2 + $0x50] sm:$0xff] %v524
        %573 = vst [vmem:[#allocation2 + $0x58] sm:$0xff] %v525
        %574 = vst [vmem:[#allocation2 + $0x60] sm:$0xff] %v526
        %575 = vst [vmem:[#allocation2 + $0x68] sm:$0xff] %v527
        %576 = vst [vmem:[#allocation2 + $0x70] sm:$0xff] %v528
        %577 = vst [vmem:[#allocation2 + $0x78] sm:$0xff] %v529
        %578 = vst [vmem:[#allocation2 + $0x80] sm:$0xff] %v546
        %579 = vst [vmem:[#allocation2 + $0x88] sm:$0xff] %v547
        %580 = vst [vmem:[#allocation2 + $0x90] sm:$0xff] %v548
        %581 = vst [vmem:[#allocation2 + $0x98] sm:$0xff] %v549
        %582 = vst [vmem:[#allocation2 + $0xa0] sm:$0xff] %v550
        %583 = vst [vmem:[#allocation2 + $0xa8] sm:$0xff] %v551
        %584 = vst [vmem:[#allocation2 + $0xb0] sm:$0xff] %v552
        %585 = vst [vmem:[#allocation2 + $0xb8] sm:$0xff] %v553
        %586 = vst [vmem:[#allocation2 + $0xc0] sm:$0xff] %v554
        %587 = vst [vmem:[#allocation2 + $0xc8] sm:$0xff] %v555
        %588 = vst [vmem:[#allocation2 + $0xd0] sm:$0xff] %v556
        %589 = vst [vmem:[#allocation2 + $0xd8] sm:$0xff] %v557
        %590 = vst [vmem:[#allocation2 + $0xe0] sm:$0xff] %v558
        %591 = vst [vmem:[#allocation2 + $0xe8] sm:$0xff] %v559
        %592 = vst [vmem:[#allocation2 + $0xf0] sm:$0xff] %v560
        %593 = vst [vmem:[#allocation2 + $0xf8] sm:$0xff] %v561
        %v594 = vld [vmem:[#allocation2] ss:$2 sm:$0xff]
        %v595 = vld [vmem:[%s307] ss:$2 sm:$0xff]
        %v596 = vld [vmem:[%s309] ss:$2 sm:$0xff]
        %v597 = vld [vmem:[%s311] ss:$2 sm:$0xff]
        %v598 = vld [vmem:[%s313] ss:$2 sm:$0xff]
        %v599 = vld [vmem:[%s315] ss:$2 sm:$0xff]
        %v600 = vld [vmem:[%s317] ss:$2 sm:$0xff]
        %v601 = vld [vmem:[%s319] ss:$2 sm:$0xff]
        %v602 = vld [vmem:[%s321] ss:$2 sm:$0xff]
        %v603 = vld [vmem:[%s323] ss:$2 sm:$0xff]
        %v604 = vld [vmem:[%s325] ss:$2 sm:$0xff]
        %v605 = vld [vmem:[%s327] ss:$2 sm:$0xff]
        %v606 = vld [vmem:[%s329] ss:$2 sm:$0xff]
        %v607 = vld [vmem:[%s331] ss:$2 sm:$0xff]
        %v608 = vld [vmem:[%s333] ss:$2 sm:$0xff]
        %v609 = vld [vmem:[%s335] ss:$2 sm:$0xff]
        %610 = vxpose.xlu0.b32.start [1/16] %v594, 128
        %611 = vxpose.xlu0.b32.cont [2/16] %v595, 128
        %612 = vxpose.xlu0.b32.cont [3/16] %v596, 128
        %613 = vxpose.xlu0.b32.cont [4/16] %v597, 128
        %614 = vxpose.xlu0.b32.cont [5/16] %v598, 128
        %615 = vxpose.xlu0.b32.cont [6/16] %v599, 128
        %616 = vxpose.xlu0.b32.cont [7/16] %v600, 128
        %617 = vxpose.xlu0.b32.cont [8/16] %v601, 128
        %618 = vxpose.xlu0.b32.cont [9/16] %v602, 128
        %619 = vxpose.xlu0.b32.cont [10/16] %v603, 128
        %620 = vxpose.xlu0.b32.cont [11/16] %v604, 128
        %621 = vxpose.xlu0.b32.cont [12/16] %v605, 128
        %622 = vxpose.xlu0.b32.cont [13/16] %v606, 128
        %623 = vxpose.xlu0.b32.cont [14/16] %v607, 128
        %624 = vxpose.xlu0.b32.cont [15/16] %v608, 128
        %625 = vxpose.xlu0.b32.end [16/16] %v609, 128
        %v626 = vpop.trf.xlu0
        %v627 = vpop.trf.xlu0
        %v628 = vpop.trf.xlu0
        %v629 = vpop.trf.xlu0
        %v630 = vpop.trf.xlu0
        %v631 = vpop.trf.xlu0
        %v632 = vpop.trf.xlu0
        %v633 = vpop.trf.xlu0
        %v634 = vpop.trf.xlu0
        %v635 = vpop.trf.xlu0
        %v636 = vpop.trf.xlu0
        %v637 = vpop.trf.xlu0
        %v638 = vpop.trf.xlu0
        %v639 = vpop.trf.xlu0
        %v640 = vpop.trf.xlu0
        %v641 = vpop.trf.xlu0
        %s642 = scalar_lea.vmem %s158, 1024 [#allocation3]
        %643 = vst [vmem:[%s642] sm:$0xff] %v626
        %644 = vst [vmem:[%s642 + $0x8] sm:$0xff] %v627
        %645 = vst [vmem:[%s642 + $0x10] sm:$0xff] %v628
        %646 = vst [vmem:[%s642 + $0x18] sm:$0xff] %v629
        %647 = vst [vmem:[%s642 + $0x20] sm:$0xff] %v630
        %648 = vst [vmem:[%s642 + $0x28] sm:$0xff] %v631
        %649 = vst [vmem:[%s642 + $0x30] sm:$0xff] %v632
        %650 = vst [vmem:[%s642 + $0x38] sm:$0xff] %v633
        %651 = vst [vmem:[%s642 + $0x40] sm:$0xff] %v634
        %652 = vst [vmem:[%s642 + $0x48] sm:$0xff] %v635
        %653 = vst [vmem:[%s642 + $0x50] sm:$0xff] %v636
        %654 = vst [vmem:[%s642 + $0x58] sm:$0xff] %v637
        %655 = vst [vmem:[%s642 + $0x60] sm:$0xff] %v638
        %656 = vst [vmem:[%s642 + $0x68] sm:$0xff] %v639
        %657 = vst [vmem:[%s642 + $0x70] sm:$0xff] %v640
        %658 = vst [vmem:[%s642 + $0x78] sm:$0xff] %v641
        %v659 = vld [vmem:[%s385] ss:$2 sm:$0xff]
        %v660 = vld [vmem:[%s387] ss:$2 sm:$0xff]
        %v661 = vld [vmem:[%s389] ss:$2 sm:$0xff]
        %v662 = vld [vmem:[%s391] ss:$2 sm:$0xff]
        %v663 = vld [vmem:[%s393] ss:$2 sm:$0xff]
        %v664 = vld [vmem:[%s395] ss:$2 sm:$0xff]
        %v665 = vld [vmem:[%s397] ss:$2 sm:$0xff]
        %v666 = vld [vmem:[%s399] ss:$2 sm:$0xff]
        %v667 = vld [vmem:[%s401] ss:$2 sm:$0xff]
        %v668 = vld [vmem:[%s403] ss:$2 sm:$0xff]
        %v669 = vld [vmem:[%s405] ss:$2 sm:$0xff]
        %v670 = vld [vmem:[%s407] ss:$2 sm:$0xff]
        %v671 = vld [vmem:[%s409] ss:$2 sm:$0xff]
        %v672 = vld [vmem:[%s411] ss:$2 sm:$0xff]
        %v673 = vld [vmem:[%s413] ss:$2 sm:$0xff]
        %v674 = vld [vmem:[%s415] ss:$2 sm:$0xff]
        %675 = vxpose.xlu0.b32.start [1/16] %v659, 128
        %676 = vxpose.xlu0.b32.cont [2/16] %v660, 128
        %677 = vxpose.xlu0.b32.cont [3/16] %v661, 128
        %678 = vxpose.xlu0.b32.cont [4/16] %v662, 128
        %679 = vxpose.xlu0.b32.cont [5/16] %v663, 128
        %680 = vxpose.xlu0.b32.cont [6/16] %v664, 128
        %681 = vxpose.xlu0.b32.cont [7/16] %v665, 128
        %682 = vxpose.xlu0.b32.cont [8/16] %v666, 128
        %683 = vxpose.xlu0.b32.cont [9/16] %v667, 128
        %684 = vxpose.xlu0.b32.cont [10/16] %v668, 128
        %685 = vxpose.xlu0.b32.cont [11/16] %v669, 128
        %686 = vxpose.xlu0.b32.cont [12/16] %v670, 128
        %687 = vxpose.xlu0.b32.cont [13/16] %v671, 128
        %688 = vxpose.xlu0.b32.cont [14/16] %v672, 128
        %689 = vxpose.xlu0.b32.cont [15/16] %v673, 128
        %690 = vxpose.xlu0.b32.end [16/16] %v674, 128
        %v691 = vpop.trf.xlu0
        %v692 = vpop.trf.xlu0
        %v693 = vpop.trf.xlu0
        %v694 = vpop.trf.xlu0
        %v695 = vpop.trf.xlu0
        %v696 = vpop.trf.xlu0
        %v697 = vpop.trf.xlu0
        %v698 = vpop.trf.xlu0
        %v699 = vpop.trf.xlu0
        %v700 = vpop.trf.xlu0
        %v701 = vpop.trf.xlu0
        %v702 = vpop.trf.xlu0
        %v703 = vpop.trf.xlu0
        %v704 = vpop.trf.xlu0
        %v705 = vpop.trf.xlu0
        %v706 = vpop.trf.xlu0
        %s707 = scalar_lea.vmem %s158, 1536 [#allocation3]
        %708 = vst [vmem:[%s707] sm:$0xff] %v691
        %709 = vst [vmem:[%s707 + $0x8] sm:$0xff] %v692
        %710 = vst [vmem:[%s707 + $0x10] sm:$0xff] %v693
        %711 = vst [vmem:[%s707 + $0x18] sm:$0xff] %v694
        %712 = vst [vmem:[%s707 + $0x20] sm:$0xff] %v695
        %713 = vst [vmem:[%s707 + $0x28] sm:$0xff] %v696
        %714 = vst [vmem:[%s707 + $0x30] sm:$0xff] %v697
        %715 = vst [vmem:[%s707 + $0x38] sm:$0xff] %v698
        %716 = vst [vmem:[%s707 + $0x40] sm:$0xff] %v699
        %717 = vst [vmem:[%s707 + $0x48] sm:$0xff] %v700
        %718 = vst [vmem:[%s707 + $0x50] sm:$0xff] %v701
        %719 = vst [vmem:[%s707 + $0x58] sm:$0xff] %v702
        %720 = vst [vmem:[%s707 + $0x60] sm:$0xff] %v703
        %721 = vst [vmem:[%s707 + $0x68] sm:$0xff] %v704
        %722 = vst [vmem:[%s707 + $0x70] sm:$0xff] %v705
        %723 = vst [vmem:[%s707 + $0x78] sm:$0xff] %v706
        %s724 = scalar_lea.vmem %s173, 512
        %v725 = vld [vmem:[%s724] sm:$0xff]
        %v726 = vld [vmem:[%s724 + $0x8] sm:$0xff]
        %v727 = vld [vmem:[%s724 + $0x20] sm:$0xff]
        %v728 = vld [vmem:[%s724 + $0x28] sm:$0xff]
        %v729 = vld [vmem:[%s724 + $0x40] sm:$0xff]
        %v730 = vld [vmem:[%s724 + $0x48] sm:$0xff]
        %v731 = vld [vmem:[%s724 + $0x60] sm:$0xff]
        %v732 = vld [vmem:[%s724 + $0x68] sm:$0xff]
        %v733 = vld [vmem:[%s724 + $0x80] sm:$0xff]
        %v734 = vld [vmem:[%s724 + $0x88] sm:$0xff]
        %v735 = vld [vmem:[%s724 + $0xa0] sm:$0xff]
        %v736 = vld [vmem:[%s724 + $0xa8] sm:$0xff]
        %v737 = vld [vmem:[%s724 + $0xc0] sm:$0xff]
        %v738 = vld [vmem:[%s724 + $0xc8] sm:$0xff]
        %v739 = vld [vmem:[%s724 + $0xe0] sm:$0xff]
        %v740 = vld [vmem:[%s724 + $0xe8] sm:$0xff]
        %v741 = vld [vmem:[%s724 + $0x100] sm:$0xff]
        %v742 = vld [vmem:[%s724 + $0x108] sm:$0xff]
        %v743 = vld [vmem:[%s724 + $0x120] sm:$0xff]
        %v744 = vld [vmem:[%s724 + $0x128] sm:$0xff]
        %v745 = vld [vmem:[%s724 + $0x140] sm:$0xff]
        %v746 = vld [vmem:[%s724 + $0x148] sm:$0xff]
        %v747 = vld [vmem:[%s724 + $0x160] sm:$0xff]
        %v748 = vld [vmem:[%s724 + $0x168] sm:$0xff]
        %v749 = vld [vmem:[%s724 + $0x180] sm:$0xff]
        %v750 = vld [vmem:[%s724 + $0x188] sm:$0xff]
        %v751 = vld [vmem:[%s724 + $0x1a0] sm:$0xff]
        %v752 = vld [vmem:[%s724 + $0x1a8] sm:$0xff]
        %v753 = vld [vmem:[%s724 + $0x1c0] sm:$0xff]
        %v754 = vld [vmem:[%s724 + $0x1c8] sm:$0xff]
        %v755 = vld [vmem:[%s724 + $0x1e0] sm:$0xff]
        %v756 = vld [vmem:[%s724 + $0x1e8] sm:$0xff]
        %757 = vxpose.xlu0.b32.start [1/16] %v725, 128
        %758 = vxpose.xlu0.b32.cont [2/16] %v727, 128
        %759 = vxpose.xlu0.b32.cont [3/16] %v729, 128
        %760 = vxpose.xlu0.b32.cont [4/16] %v731, 128
        %761 = vxpose.xlu0.b32.cont [5/16] %v733, 128
        %762 = vxpose.xlu0.b32.cont [6/16] %v735, 128
        %763 = vxpose.xlu0.b32.cont [7/16] %v737, 128
        %764 = vxpose.xlu0.b32.cont [8/16] %v739, 128
        %765 = vxpose.xlu0.b32.cont [9/16] %v741, 128
        %766 = vxpose.xlu0.b32.cont [10/16] %v743, 128
        %767 = vxpose.xlu0.b32.cont [11/16] %v745, 128
        %768 = vxpose.xlu0.b32.cont [12/16] %v747, 128
        %769 = vxpose.xlu0.b32.cont [13/16] %v749, 128
        %770 = vxpose.xlu0.b32.cont [14/16] %v751, 128
        %771 = vxpose.xlu0.b32.cont [15/16] %v753, 128
        %772 = vxpose.xlu0.b32.end [16/16] %v755, 128
        %v773 = vpop.trf.xlu0
        %v774 = vpop.trf.xlu0
        %v775 = vpop.trf.xlu0
        %v776 = vpop.trf.xlu0
        %v777 = vpop.trf.xlu0
        %v778 = vpop.trf.xlu0
        %v779 = vpop.trf.xlu0
        %v780 = vpop.trf.xlu0
        %v781 = vpop.trf.xlu0
        %v782 = vpop.trf.xlu0
        %v783 = vpop.trf.xlu0
        %v784 = vpop.trf.xlu0
        %v785 = vpop.trf.xlu0
        %v786 = vpop.trf.xlu0
        %v787 = vpop.trf.xlu0
        %v788 = vpop.trf.xlu0
        %789 = vxpose.xlu0.b32.start [1/16] %v726, 128
        %790 = vxpose.xlu0.b32.cont [2/16] %v728, 128
        %791 = vxpose.xlu0.b32.cont [3/16] %v730, 128
        %792 = vxpose.xlu0.b32.cont [4/16] %v732, 128
        %793 = vxpose.xlu0.b32.cont [5/16] %v734, 128
        %794 = vxpose.xlu0.b32.cont [6/16] %v736, 128
        %795 = vxpose.xlu0.b32.cont [7/16] %v738, 128
        %796 = vxpose.xlu0.b32.cont [8/16] %v740, 128
        %797 = vxpose.xlu0.b32.cont [9/16] %v742, 128
        %798 = vxpose.xlu0.b32.cont [10/16] %v744, 128
        %799 = vxpose.xlu0.b32.cont [11/16] %v746, 128
        %800 = vxpose.xlu0.b32.cont [12/16] %v748, 128
        %801 = vxpose.xlu0.b32.cont [13/16] %v750, 128
        %802 = vxpose.xlu0.b32.cont [14/16] %v752, 128
        %803 = vxpose.xlu0.b32.cont [15/16] %v754, 128
        %804 = vxpose.xlu0.b32.end [16/16] %v756, 128
        %v805 = vpop.trf.xlu0
        %v806 = vpop.trf.xlu0
        %v807 = vpop.trf.xlu0
        %v808 = vpop.trf.xlu0
        %v809 = vpop.trf.xlu0
        %v810 = vpop.trf.xlu0
        %v811 = vpop.trf.xlu0
        %v812 = vpop.trf.xlu0
        %v813 = vpop.trf.xlu0
        %v814 = vpop.trf.xlu0
        %v815 = vpop.trf.xlu0
        %v816 = vpop.trf.xlu0
        %v817 = vpop.trf.xlu0
        %v818 = vpop.trf.xlu0
        %v819 = vpop.trf.xlu0
        %v820 = vpop.trf.xlu0
        %821 = vst [vmem:[#allocation2] sm:$0xff] %v773
        %822 = vst [vmem:[#allocation2 + $0x8] sm:$0xff] %v774
        %823 = vst [vmem:[#allocation2 + $0x10] sm:$0xff] %v775
        %824 = vst [vmem:[#allocation2 + $0x18] sm:$0xff] %v776
        %825 = vst [vmem:[#allocation2 + $0x20] sm:$0xff] %v777
        %826 = vst [vmem:[#allocation2 + $0x28] sm:$0xff] %v778
        %827 = vst [vmem:[#allocation2 + $0x30] sm:$0xff] %v779
        %828 = vst [vmem:[#allocation2 + $0x38] sm:$0xff] %v780
        %829 = vst [vmem:[#allocation2 + $0x40] sm:$0xff] %v781
        %830 = vst [vmem:[#allocation2 + $0x48] sm:$0xff] %v782
        %831 = vst [vmem:[#allocation2 + $0x50] sm:$0xff] %v783
        %832 = vst [vmem:[#allocation2 + $0x58] sm:$0xff] %v784
        %833 = vst [vmem:[#allocation2 + $0x60] sm:$0xff] %v785
        %834 = vst [vmem:[#allocation2 + $0x68] sm:$0xff] %v786
        %835 = vst [vmem:[#allocation2 + $0x70] sm:$0xff] %v787
        %836 = vst [vmem:[#allocation2 + $0x78] sm:$0xff] %v788
        %837 = vst [vmem:[#allocation2 + $0x80] sm:$0xff] %v805
        %838 = vst [vmem:[#allocation2 + $0x88] sm:$0xff] %v806
        %839 = vst [vmem:[#allocation2 + $0x90] sm:$0xff] %v807
        %840 = vst [vmem:[#allocation2 + $0x98] sm:$0xff] %v808
        %841 = vst [vmem:[#allocation2 + $0xa0] sm:$0xff] %v809
        %842 = vst [vmem:[#allocation2 + $0xa8] sm:$0xff] %v810
        %843 = vst [vmem:[#allocation2 + $0xb0] sm:$0xff] %v811
        %844 = vst [vmem:[#allocation2 + $0xb8] sm:$0xff] %v812
        %845 = vst [vmem:[#allocation2 + $0xc0] sm:$0xff] %v813
        %846 = vst [vmem:[#allocation2 + $0xc8] sm:$0xff] %v814
        %847 = vst [vmem:[#allocation2 + $0xd0] sm:$0xff] %v815
        %848 = vst [vmem:[#allocation2 + $0xd8] sm:$0xff] %v816
        %849 = vst [vmem:[#allocation2 + $0xe0] sm:$0xff] %v817
        %850 = vst [vmem:[#allocation2 + $0xe8] sm:$0xff] %v818
        %851 = vst [vmem:[#allocation2 + $0xf0] sm:$0xff] %v819
        %852 = vst [vmem:[#allocation2 + $0xf8] sm:$0xff] %v820
        %v853 = vld [vmem:[#allocation2] ss:$2 sm:$0xff]
        %v854 = vld [vmem:[%s307] ss:$2 sm:$0xff]
        %v855 = vld [vmem:[%s309] ss:$2 sm:$0xff]
        %v856 = vld [vmem:[%s311] ss:$2 sm:$0xff]
        %v857 = vld [vmem:[%s313] ss:$2 sm:$0xff]
        %v858 = vld [vmem:[%s315] ss:$2 sm:$0xff]
        %v859 = vld [vmem:[%s317] ss:$2 sm:$0xff]
        %v860 = vld [vmem:[%s319] ss:$2 sm:$0xff]
        %v861 = vld [vmem:[%s321] ss:$2 sm:$0xff]
        %v862 = vld [vmem:[%s323] ss:$2 sm:$0xff]
        %v863 = vld [vmem:[%s325] ss:$2 sm:$0xff]
        %v864 = vld [vmem:[%s327] ss:$2 sm:$0xff]
        %v865 = vld [vmem:[%s329] ss:$2 sm:$0xff]
        %v866 = vld [vmem:[%s331] ss:$2 sm:$0xff]
        %v867 = vld [vmem:[%s333] ss:$2 sm:$0xff]
        %v868 = vld [vmem:[%s335] ss:$2 sm:$0xff]
        %869 = vxpose.xlu0.b32.start [1/16] %v853, 128
        %870 = vxpose.xlu0.b32.cont [2/16] %v854, 128
        %871 = vxpose.xlu0.b32.cont [3/16] %v855, 128
        %872 = vxpose.xlu0.b32.cont [4/16] %v856, 128
        %873 = vxpose.xlu0.b32.cont [5/16] %v857, 128
        %874 = vxpose.xlu0.b32.cont [6/16] %v858, 128
        %875 = vxpose.xlu0.b32.cont [7/16] %v859, 128
        %876 = vxpose.xlu0.b32.cont [8/16] %v860, 128
        %877 = vxpose.xlu0.b32.cont [9/16] %v861, 128
        %878 = vxpose.xlu0.b32.cont [10/16] %v862, 128
        %879 = vxpose.xlu0.b32.cont [11/16] %v863, 128
        %880 = vxpose.xlu0.b32.cont [12/16] %v864, 128
        %881 = vxpose.xlu0.b32.cont [13/16] %v865, 128
        %882 = vxpose.xlu0.b32.cont [14/16] %v866, 128
        %883 = vxpose.xlu0.b32.cont [15/16] %v867, 128
        %884 = vxpose.xlu0.b32.end [16/16] %v868, 128
        %v885 = vpop.trf.xlu0
        %v886 = vpop.trf.xlu0
        %v887 = vpop.trf.xlu0
        %v888 = vpop.trf.xlu0
        %v889 = vpop.trf.xlu0
        %v890 = vpop.trf.xlu0
        %v891 = vpop.trf.xlu0
        %v892 = vpop.trf.xlu0
        %v893 = vpop.trf.xlu0
        %v894 = vpop.trf.xlu0
        %v895 = vpop.trf.xlu0
        %v896 = vpop.trf.xlu0
        %v897 = vpop.trf.xlu0
        %v898 = vpop.trf.xlu0
        %v899 = vpop.trf.xlu0
        %v900 = vpop.trf.xlu0
        %s901 = scalar_lea.vmem %s158, 128 [#allocation3]
        %902 = vst [vmem:[%s901] sm:$0xff] %v885
        %903 = vst [vmem:[%s901 + $0x8] sm:$0xff] %v886
        %904 = vst [vmem:[%s901 + $0x10] sm:$0xff] %v887
        %905 = vst [vmem:[%s901 + $0x18] sm:$0xff] %v888
        %906 = vst [vmem:[%s901 + $0x20] sm:$0xff] %v889
        %907 = vst [vmem:[%s901 + $0x28] sm:$0xff] %v890
        %908 = vst [vmem:[%s901 + $0x30] sm:$0xff] %v891
        %909 = vst [vmem:[%s901 + $0x38] sm:$0xff] %v892
        %910 = vst [vmem:[%s901 + $0x40] sm:$0xff] %v893
        %911 = vst [vmem:[%s901 + $0x48] sm:$0xff] %v894
        %912 = vst [vmem:[%s901 + $0x50] sm:$0xff] %v895
        %913 = vst [vmem:[%s901 + $0x58] sm:$0xff] %v896
        %914 = vst [vmem:[%s901 + $0x60] sm:$0xff] %v897
        %915 = vst [vmem:[%s901 + $0x68] sm:$0xff] %v898
        %916 = vst [vmem:[%s901 + $0x70] sm:$0xff] %v899
        %917 = vst [vmem:[%s901 + $0x78] sm:$0xff] %v900
        %v918 = vld [vmem:[%s385] ss:$2 sm:$0xff]
        %v919 = vld [vmem:[%s387] ss:$2 sm:$0xff]
        %v920 = vld [vmem:[%s389] ss:$2 sm:$0xff]
        %v921 = vld [vmem:[%s391] ss:$2 sm:$0xff]
        %v922 = vld [vmem:[%s393] ss:$2 sm:$0xff]
        %v923 = vld [vmem:[%s395] ss:$2 sm:$0xff]
        %v924 = vld [vmem:[%s397] ss:$2 sm:$0xff]
        %v925 = vld [vmem:[%s399] ss:$2 sm:$0xff]
        %v926 = vld [vmem:[%s401] ss:$2 sm:$0xff]
        %v927 = vld [vmem:[%s403] ss:$2 sm:$0xff]
        %v928 = vld [vmem:[%s405] ss:$2 sm:$0xff]
        %v929 = vld [vmem:[%s407] ss:$2 sm:$0xff]
        %v930 = vld [vmem:[%s409] ss:$2 sm:$0xff]
        %v931 = vld [vmem:[%s411] ss:$2 sm:$0xff]
        %v932 = vld [vmem:[%s413] ss:$2 sm:$0xff]
        %v933 = vld [vmem:[%s415] ss:$2 sm:$0xff]
        %934 = vxpose.xlu0.b32.start [1/16] %v918, 128
        %935 = vxpose.xlu0.b32.cont [2/16] %v919, 128
        %936 = vxpose.xlu0.b32.cont [3/16] %v920, 128
        %937 = vxpose.xlu0.b32.cont [4/16] %v921, 128
        %938 = vxpose.xlu0.b32.cont [5/16] %v922, 128
        %939 = vxpose.xlu0.b32.cont [6/16] %v923, 128
        %940 = vxpose.xlu0.b32.cont [7/16] %v924, 128
        %941 = vxpose.xlu0.b32.cont [8/16] %v925, 128
        %942 = vxpose.xlu0.b32.cont [9/16] %v926, 128
        %943 = vxpose.xlu0.b32.cont [10/16] %v927, 128
        %944 = vxpose.xlu0.b32.cont [11/16] %v928, 128
        %945 = vxpose.xlu0.b32.cont [12/16] %v929, 128
        %946 = vxpose.xlu0.b32.cont [13/16] %v930, 128
        %947 = vxpose.xlu0.b32.cont [14/16] %v931, 128
        %948 = vxpose.xlu0.b32.cont [15/16] %v932, 128
        %949 = vxpose.xlu0.b32.end [16/16] %v933, 128
        %v950 = vpop.trf.xlu0
        %v951 = vpop.trf.xlu0
        %v952 = vpop.trf.xlu0
        %v953 = vpop.trf.xlu0
        %v954 = vpop.trf.xlu0
        %v955 = vpop.trf.xlu0
        %v956 = vpop.trf.xlu0
        %v957 = vpop.trf.xlu0
        %v958 = vpop.trf.xlu0
        %v959 = vpop.trf.xlu0
        %v960 = vpop.trf.xlu0
        %v961 = vpop.trf.xlu0
        %v962 = vpop.trf.xlu0
        %v963 = vpop.trf.xlu0
        %v964 = vpop.trf.xlu0
        %v965 = vpop.trf.xlu0
        %s966 = scalar_lea.vmem %s158, 640 [#allocation3]
        %967 = vst [vmem:[%s966] sm:$0xff] %v950
        %968 = vst [vmem:[%s966 + $0x8] sm:$0xff] %v951
        %969 = vst [vmem:[%s966 + $0x10] sm:$0xff] %v952
        %970 = vst [vmem:[%s966 + $0x18] sm:$0xff] %v953
        %971 = vst [vmem:[%s966 + $0x20] sm:$0xff] %v954
        %972 = vst [vmem:[%s966 + $0x28] sm:$0xff] %v955
        %973 = vst [vmem:[%s966 + $0x30] sm:$0xff] %v956
        %974 = vst [vmem:[%s966 + $0x38] sm:$0xff] %v957
        %975 = vst [vmem:[%s966 + $0x40] sm:$0xff] %v958
        %976 = vst [vmem:[%s966 + $0x48] sm:$0xff] %v959
        %977 = vst [vmem:[%s966 + $0x50] sm:$0xff] %v960
        %978 = vst [vmem:[%s966 + $0x58] sm:$0xff] %v961
        %979 = vst [vmem:[%s966 + $0x60] sm:$0xff] %v962
        %980 = vst [vmem:[%s966 + $0x68] sm:$0xff] %v963
        %981 = vst [vmem:[%s966 + $0x70] sm:$0xff] %v964
        %982 = vst [vmem:[%s966 + $0x78] sm:$0xff] %v965
        %v983 = vld [vmem:[%s724 + $0x10] sm:$0xff]
        %v984 = vld [vmem:[%s724 + $0x18] sm:$0xff]
        %v985 = vld [vmem:[%s724 + $0x30] sm:$0xff]
        %v986 = vld [vmem:[%s724 + $0x38] sm:$0xff]
        %v987 = vld [vmem:[%s724 + $0x50] sm:$0xff]
        %v988 = vld [vmem:[%s724 + $0x58] sm:$0xff]
        %v989 = vld [vmem:[%s724 + $0x70] sm:$0xff]
        %v990 = vld [vmem:[%s724 + $0x78] sm:$0xff]
        %v991 = vld [vmem:[%s724 + $0x90] sm:$0xff]
        %v992 = vld [vmem:[%s724 + $0x98] sm:$0xff]
        %v993 = vld [vmem:[%s724 + $0xb0] sm:$0xff]
        %v994 = vld [vmem:[%s724 + $0xb8] sm:$0xff]
        %v995 = vld [vmem:[%s724 + $0xd0] sm:$0xff]
        %v996 = vld [vmem:[%s724 + $0xd8] sm:$0xff]
        %v997 = vld [vmem:[%s724 + $0xf0] sm:$0xff]
        %v998 = vld [vmem:[%s724 + $0xf8] sm:$0xff]
        %v999 = vld [vmem:[%s724 + $0x110] sm:$0xff]
        %v1000 = vld [vmem:[%s724 + $0x118] sm:$0xff]
        %v1001 = vld [vmem:[%s724 + $0x130] sm:$0xff]
        %v1002 = vld [vmem:[%s724 + $0x138] sm:$0xff]
        %v1003 = vld [vmem:[%s724 + $0x150] sm:$0xff]
        %v1004 = vld [vmem:[%s724 + $0x158] sm:$0xff]
        %v1005 = vld [vmem:[%s724 + $0x170] sm:$0xff]
        %v1006 = vld [vmem:[%s724 + $0x178] sm:$0xff]
        %v1007 = vld [vmem:[%s724 + $0x190] sm:$0xff]
        %v1008 = vld [vmem:[%s724 + $0x198] sm:$0xff]
        %v1009 = vld [vmem:[%s724 + $0x1b0] sm:$0xff]
        %v1010 = vld [vmem:[%s724 + $0x1b8] sm:$0xff]
        %v1011 = vld [vmem:[%s724 + $0x1d0] sm:$0xff]
        %v1012 = vld [vmem:[%s724 + $0x1d8] sm:$0xff]
        %v1013 = vld [vmem:[%s724 + $0x1f0] sm:$0xff]
        %v1014 = vld [vmem:[%s724 + $0x1f8] sm:$0xff]
        %1015 = vxpose.xlu0.b32.start [1/16] %v983, 128
        %1016 = vxpose.xlu0.b32.cont [2/16] %v985, 128
        %1017 = vxpose.xlu0.b32.cont [3/16] %v987, 128
        %1018 = vxpose.xlu0.b32.cont [4/16] %v989, 128
        %1019 = vxpose.xlu0.b32.cont [5/16] %v991, 128
        %1020 = vxpose.xlu0.b32.cont [6/16] %v993, 128
        %1021 = vxpose.xlu0.b32.cont [7/16] %v995, 128
        %1022 = vxpose.xlu0.b32.cont [8/16] %v997, 128
        %1023 = vxpose.xlu0.b32.cont [9/16] %v999, 128
        %1024 = vxpose.xlu0.b32.cont [10/16] %v1001, 128
        %1025 = vxpose.xlu0.b32.cont [11/16] %v1003, 128
        %1026 = vxpose.xlu0.b32.cont [12/16] %v1005, 128
        %1027 = vxpose.xlu0.b32.cont [13/16] %v1007, 128
        %1028 = vxpose.xlu0.b32.cont [14/16] %v1009, 128
        %1029 = vxpose.xlu0.b32.cont [15/16] %v1011, 128
        %1030 = vxpose.xlu0.b32.end [16/16] %v1013, 128
        %v1031 = vpop.trf.xlu0
        %v1032 = vpop.trf.xlu0
        %v1033 = vpop.trf.xlu0
        %v1034 = vpop.trf.xlu0
        %v1035 = vpop.trf.xlu0
        %v1036 = vpop.trf.xlu0
        %v1037 = vpop.trf.xlu0
        %v1038 = vpop.trf.xlu0
        %v1039 = vpop.trf.xlu0
        %v1040 = vpop.trf.xlu0
        %v1041 = vpop.trf.xlu0
        %v1042 = vpop.trf.xlu0
        %v1043 = vpop.trf.xlu0
        %v1044 = vpop.trf.xlu0
        %v1045 = vpop.trf.xlu0
        %v1046 = vpop.trf.xlu0
        %1047 = vxpose.xlu0.b32.start [1/16] %v984, 128
        %1048 = vxpose.xlu0.b32.cont [2/16] %v986, 128
        %1049 = vxpose.xlu0.b32.cont [3/16] %v988, 128
        %1050 = vxpose.xlu0.b32.cont [4/16] %v990, 128
        %1051 = vxpose.xlu0.b32.cont [5/16] %v992, 128
        %1052 = vxpose.xlu0.b32.cont [6/16] %v994, 128
        %1053 = vxpose.xlu0.b32.cont [7/16] %v996, 128
        %1054 = vxpose.xlu0.b32.cont [8/16] %v998, 128
        %1055 = vxpose.xlu0.b32.cont [9/16] %v1000, 128
        %1056 = vxpose.xlu0.b32.cont [10/16] %v1002, 128
        %1057 = vxpose.xlu0.b32.cont [11/16] %v1004, 128
        %1058 = vxpose.xlu0.b32.cont [12/16] %v1006, 128
        %1059 = vxpose.xlu0.b32.cont [13/16] %v1008, 128
        %1060 = vxpose.xlu0.b32.cont [14/16] %v1010, 128
        %1061 = vxpose.xlu0.b32.cont [15/16] %v1012, 128
        %1062 = vxpose.xlu0.b32.end [16/16] %v1014, 128
        %v1063 = vpop.trf.xlu0
        %v1064 = vpop.trf.xlu0
        %v1065 = vpop.trf.xlu0
        %v1066 = vpop.trf.xlu0
        %v1067 = vpop.trf.xlu0
        %v1068 = vpop.trf.xlu0
        %v1069 = vpop.trf.xlu0
        %v1070 = vpop.trf.xlu0
        %v1071 = vpop.trf.xlu0
        %v1072 = vpop.trf.xlu0
        %v1073 = vpop.trf.xlu0
        %v1074 = vpop.trf.xlu0
        %v1075 = vpop.trf.xlu0
        %v1076 = vpop.trf.xlu0
        %v1077 = vpop.trf.xlu0
        %v1078 = vpop.trf.xlu0
        %1079 = vst [vmem:[#allocation2] sm:$0xff] %v1031
        %1080 = vst [vmem:[#allocation2 + $0x8] sm:$0xff] %v1032
        %1081 = vst [vmem:[#allocation2 + $0x10] sm:$0xff] %v1033
        %1082 = vst [vmem:[#allocation2 + $0x18] sm:$0xff] %v1034
        %1083 = vst [vmem:[#allocation2 + $0x20] sm:$0xff] %v1035
        %1084 = vst [vmem:[#allocation2 + $0x28] sm:$0xff] %v1036
        %1085 = vst [vmem:[#allocation2 + $0x30] sm:$0xff] %v1037
        %1086 = vst [vmem:[#allocation2 + $0x38] sm:$0xff] %v1038
        %1087 = vst [vmem:[#allocation2 + $0x40] sm:$0xff] %v1039
        %1088 = vst [vmem:[#allocation2 + $0x48] sm:$0xff] %v1040
        %1089 = vst [vmem:[#allocation2 + $0x50] sm:$0xff] %v1041
        %1090 = vst [vmem:[#allocation2 + $0x58] sm:$0xff] %v1042
        %1091 = vst [vmem:[#allocation2 + $0x60] sm:$0xff] %v1043
        %1092 = vst [vmem:[#allocation2 + $0x68] sm:$0xff] %v1044
        %1093 = vst [vmem:[#allocation2 + $0x70] sm:$0xff] %v1045
        %1094 = vst [vmem:[#allocation2 + $0x78] sm:$0xff] %v1046
        %1095 = vst [vmem:[#allocation2 + $0x80] sm:$0xff] %v1063
        %1096 = vst [vmem:[#allocation2 + $0x88] sm:$0xff] %v1064
        %1097 = vst [vmem:[#allocation2 + $0x90] sm:$0xff] %v1065
        %1098 = vst [vmem:[#allocation2 + $0x98] sm:$0xff] %v1066
        %1099 = vst [vmem:[#allocation2 + $0xa0] sm:$0xff] %v1067
        %1100 = vst [vmem:[#allocation2 + $0xa8] sm:$0xff] %v1068
        %1101 = vst [vmem:[#allocation2 + $0xb0] sm:$0xff] %v1069
        %1102 = vst [vmem:[#allocation2 + $0xb8] sm:$0xff] %v1070
        %1103 = vst [vmem:[#allocation2 + $0xc0] sm:$0xff] %v1071
        %1104 = vst [vmem:[#allocation2 + $0xc8] sm:$0xff] %v1072
        %1105 = vst [vmem:[#allocation2 + $0xd0] sm:$0xff] %v1073
        %1106 = vst [vmem:[#allocation2 + $0xd8] sm:$0xff] %v1074
        %1107 = vst [vmem:[#allocation2 + $0xe0] sm:$0xff] %v1075
        %1108 = vst [vmem:[#allocation2 + $0xe8] sm:$0xff] %v1076
        %1109 = vst [vmem:[#allocation2 + $0xf0] sm:$0xff] %v1077
        %1110 = vst [vmem:[#allocation2 + $0xf8] sm:$0xff] %v1078
        %v1111 = vld [vmem:[#allocation2] ss:$2 sm:$0xff]
        %v1112 = vld [vmem:[%s307] ss:$2 sm:$0xff]
        %v1113 = vld [vmem:[%s309] ss:$2 sm:$0xff]
        %v1114 = vld [vmem:[%s311] ss:$2 sm:$0xff]
        %v1115 = vld [vmem:[%s313] ss:$2 sm:$0xff]
        %v1116 = vld [vmem:[%s315] ss:$2 sm:$0xff]
        %v1117 = vld [vmem:[%s317] ss:$2 sm:$0xff]
        %v1118 = vld [vmem:[%s319] ss:$2 sm:$0xff]
        %v1119 = vld [vmem:[%s321] ss:$2 sm:$0xff]
        %v1120 = vld [vmem:[%s323] ss:$2 sm:$0xff]
        %v1121 = vld [vmem:[%s325] ss:$2 sm:$0xff]
        %v1122 = vld [vmem:[%s327] ss:$2 sm:$0xff]
        %v1123 = vld [vmem:[%s329] ss:$2 sm:$0xff]
        %v1124 = vld [vmem:[%s331] ss:$2 sm:$0xff]
        %v1125 = vld [vmem:[%s333] ss:$2 sm:$0xff]
        %v1126 = vld [vmem:[%s335] ss:$2 sm:$0xff]
        %1127 = vxpose.xlu0.b32.start [1/16] %v1111, 128
        %1128 = vxpose.xlu0.b32.cont [2/16] %v1112, 128
        %1129 = vxpose.xlu0.b32.cont [3/16] %v1113, 128
        %1130 = vxpose.xlu0.b32.cont [4/16] %v1114, 128
        %1131 = vxpose.xlu0.b32.cont [5/16] %v1115, 128
        %1132 = vxpose.xlu0.b32.cont [6/16] %v1116, 128
        %1133 = vxpose.xlu0.b32.cont [7/16] %v1117, 128
        %1134 = vxpose.xlu0.b32.cont [8/16] %v1118, 128
        %1135 = vxpose.xlu0.b32.cont [9/16] %v1119, 128
        %1136 = vxpose.xlu0.b32.cont [10/16] %v1120, 128
        %1137 = vxpose.xlu0.b32.cont [11/16] %v1121, 128
        %1138 = vxpose.xlu0.b32.cont [12/16] %v1122, 128
        %1139 = vxpose.xlu0.b32.cont [13/16] %v1123, 128
        %1140 = vxpose.xlu0.b32.cont [14/16] %v1124, 128
        %1141 = vxpose.xlu0.b32.cont [15/16] %v1125, 128
        %1142 = vxpose.xlu0.b32.end [16/16] %v1126, 128
        %v1143 = vpop.trf.xlu0
        %v1144 = vpop.trf.xlu0
        %v1145 = vpop.trf.xlu0
        %v1146 = vpop.trf.xlu0
        %v1147 = vpop.trf.xlu0
        %v1148 = vpop.trf.xlu0
        %v1149 = vpop.trf.xlu0
        %v1150 = vpop.trf.xlu0
        %v1151 = vpop.trf.xlu0
        %v1152 = vpop.trf.xlu0
        %v1153 = vpop.trf.xlu0
        %v1154 = vpop.trf.xlu0
        %v1155 = vpop.trf.xlu0
        %v1156 = vpop.trf.xlu0
        %v1157 = vpop.trf.xlu0
        %v1158 = vpop.trf.xlu0
        %s1159 = scalar_lea.vmem %s158, 1152 [#allocation3]
        %1160 = vst [vmem:[%s1159] sm:$0xff] %v1143
        %1161 = vst [vmem:[%s1159 + $0x8] sm:$0xff] %v1144
        %1162 = vst [vmem:[%s1159 + $0x10] sm:$0xff] %v1145
        %1163 = vst [vmem:[%s1159 + $0x18] sm:$0xff] %v1146
        %1164 = vst [vmem:[%s1159 + $0x20] sm:$0xff] %v1147
        %1165 = vst [vmem:[%s1159 + $0x28] sm:$0xff] %v1148
        %1166 = vst [vmem:[%s1159 + $0x30] sm:$0xff] %v1149
        %1167 = vst [vmem:[%s1159 + $0x38] sm:$0xff] %v1150
        %1168 = vst [vmem:[%s1159 + $0x40] sm:$0xff] %v1151
        %1169 = vst [vmem:[%s1159 + $0x48] sm:$0xff] %v1152
        %1170 = vst [vmem:[%s1159 + $0x50] sm:$0xff] %v1153
        %1171 = vst [vmem:[%s1159 + $0x58] sm:$0xff] %v1154
        %1172 = vst [vmem:[%s1159 + $0x60] sm:$0xff] %v1155
        %1173 = vst [vmem:[%s1159 + $0x68] sm:$0xff] %v1156
        %1174 = vst [vmem:[%s1159 + $0x70] sm:$0xff] %v1157
        %1175 = vst [vmem:[%s1159 + $0x78] sm:$0xff] %v1158
        %v1176 = vld [vmem:[%s385] ss:$2 sm:$0xff]
        %v1177 = vld [vmem:[%s387] ss:$2 sm:$0xff]
        %v1178 = vld [vmem:[%s389] ss:$2 sm:$0xff]
        %v1179 = vld [vmem:[%s391] ss:$2 sm:$0xff]
        %v1180 = vld [vmem:[%s393] ss:$2 sm:$0xff]
        %v1181 = vld [vmem:[%s395] ss:$2 sm:$0xff]
        %v1182 = vld [vmem:[%s397] ss:$2 sm:$0xff]
        %v1183 = vld [vmem:[%s399] ss:$2 sm:$0xff]
        %v1184 = vld [vmem:[%s401] ss:$2 sm:$0xff]
        %v1185 = vld [vmem:[%s403] ss:$2 sm:$0xff]
        %v1186 = vld [vmem:[%s405] ss:$2 sm:$0xff]
        %v1187 = vld [vmem:[%s407] ss:$2 sm:$0xff]
        %v1188 = vld [vmem:[%s409] ss:$2 sm:$0xff]
        %v1189 = vld [vmem:[%s411] ss:$2 sm:$0xff]
        %v1190 = vld [vmem:[%s413] ss:$2 sm:$0xff]
        %v1191 = vld [vmem:[%s415] ss:$2 sm:$0xff]
        %1192 = vxpose.xlu0.b32.start [1/16] %v1176, 128
        %1193 = vxpose.xlu0.b32.cont [2/16] %v1177, 128
        %1194 = vxpose.xlu0.b32.cont [3/16] %v1178, 128
        %1195 = vxpose.xlu0.b32.cont [4/16] %v1179, 128
        %1196 = vxpose.xlu0.b32.cont [5/16] %v1180, 128
        %1197 = vxpose.xlu0.b32.cont [6/16] %v1181, 128
        %1198 = vxpose.xlu0.b32.cont [7/16] %v1182, 128
        %1199 = vxpose.xlu0.b32.cont [8/16] %v1183, 128
        %1200 = vxpose.xlu0.b32.cont [9/16] %v1184, 128
        %1201 = vxpose.xlu0.b32.cont [10/16] %v1185, 128
        %1202 = vxpose.xlu0.b32.cont [11/16] %v1186, 128
        %1203 = vxpose.xlu0.b32.cont [12/16] %v1187, 128
        %1204 = vxpose.xlu0.b32.cont [13/16] %v1188, 128
        %1205 = vxpose.xlu0.b32.cont [14/16] %v1189, 128
        %1206 = vxpose.xlu0.b32.cont [15/16] %v1190, 128
        %1207 = vxpose.xlu0.b32.end [16/16] %v1191, 128
        %v1208 = vpop.trf.xlu0
        %v1209 = vpop.trf.xlu0
        %v1210 = vpop.trf.xlu0
        %v1211 = vpop.trf.xlu0
        %v1212 = vpop.trf.xlu0
        %v1213 = vpop.trf.xlu0
        %v1214 = vpop.trf.xlu0
        %v1215 = vpop.trf.xlu0
        %v1216 = vpop.trf.xlu0
        %v1217 = vpop.trf.xlu0
        %v1218 = vpop.trf.xlu0
        %v1219 = vpop.trf.xlu0
        %v1220 = vpop.trf.xlu0
        %v1221 = vpop.trf.xlu0
        %v1222 = vpop.trf.xlu0
        %v1223 = vpop.trf.xlu0
        %s1224 = scalar_lea.vmem %s158, 1664 [#allocation3]
        %1225 = vst [vmem:[%s1224] sm:$0xff] %v1208
        %1226 = vst [vmem:[%s1224 + $0x8] sm:$0xff] %v1209
        %1227 = vst [vmem:[%s1224 + $0x10] sm:$0xff] %v1210
        %1228 = vst [vmem:[%s1224 + $0x18] sm:$0xff] %v1211
        %1229 = vst [vmem:[%s1224 + $0x20] sm:$0xff] %v1212
        %1230 = vst [vmem:[%s1224 + $0x28] sm:$0xff] %v1213
        %1231 = vst [vmem:[%s1224 + $0x30] sm:$0xff] %v1214
        %1232 = vst [vmem:[%s1224 + $0x38] sm:$0xff] %v1215
        %1233 = vst [vmem:[%s1224 + $0x40] sm:$0xff] %v1216
        %1234 = vst [vmem:[%s1224 + $0x48] sm:$0xff] %v1217
        %1235 = vst [vmem:[%s1224 + $0x50] sm:$0xff] %v1218
        %1236 = vst [vmem:[%s1224 + $0x58] sm:$0xff] %v1219
        %1237 = vst [vmem:[%s1224 + $0x60] sm:$0xff] %v1220
        %1238 = vst [vmem:[%s1224 + $0x68] sm:$0xff] %v1221
        %1239 = vst [vmem:[%s1224 + $0x70] sm:$0xff] %v1222
        %1240 = vst [vmem:[%s1224 + $0x78] sm:$0xff] %v1223
        %s1241 = scalar_lea.vmem %s173, 1024
        %v1242 = vld [vmem:[%s1241] sm:$0xff]
        %v1243 = vld [vmem:[%s1241 + $0x8] sm:$0xff]
        %v1244 = vld [vmem:[%s1241 + $0x20] sm:$0xff]
        %v1245 = vld [vmem:[%s1241 + $0x28] sm:$0xff]
        %v1246 = vld [vmem:[%s1241 + $0x40] sm:$0xff]
        %v1247 = vld [vmem:[%s1241 + $0x48] sm:$0xff]
        %v1248 = vld [vmem:[%s1241 + $0x60] sm:$0xff]
        %v1249 = vld [vmem:[%s1241 + $0x68] sm:$0xff]
        %v1250 = vld [vmem:[%s1241 + $0x80] sm:$0xff]
        %v1251 = vld [vmem:[%s1241 + $0x88] sm:$0xff]
        %v1252 = vld [vmem:[%s1241 + $0xa0] sm:$0xff]
        %v1253 = vld [vmem:[%s1241 + $0xa8] sm:$0xff]
        %v1254 = vld [vmem:[%s1241 + $0xc0] sm:$0xff]
        %v1255 = vld [vmem:[%s1241 + $0xc8] sm:$0xff]
        %v1256 = vld [vmem:[%s1241 + $0xe0] sm:$0xff]
        %v1257 = vld [vmem:[%s1241 + $0xe8] sm:$0xff]
        %v1258 = vld [vmem:[%s1241 + $0x100] sm:$0xff]
        %v1259 = vld [vmem:[%s1241 + $0x108] sm:$0xff]
        %v1260 = vld [vmem:[%s1241 + $0x120] sm:$0xff]
        %v1261 = vld [vmem:[%s1241 + $0x128] sm:$0xff]
        %v1262 = vld [vmem:[%s1241 + $0x140] sm:$0xff]
        %v1263 = vld [vmem:[%s1241 + $0x148] sm:$0xff]
        %v1264 = vld [vmem:[%s1241 + $0x160] sm:$0xff]
        %v1265 = vld [vmem:[%s1241 + $0x168] sm:$0xff]
        %v1266 = vld [vmem:[%s1241 + $0x180] sm:$0xff]
        %v1267 = vld [vmem:[%s1241 + $0x188] sm:$0xff]
        %v1268 = vld [vmem:[%s1241 + $0x1a0] sm:$0xff]
        %v1269 = vld [vmem:[%s1241 + $0x1a8] sm:$0xff]
        %v1270 = vld [vmem:[%s1241 + $0x1c0] sm:$0xff]
        %v1271 = vld [vmem:[%s1241 + $0x1c8] sm:$0xff]
        %v1272 = vld [vmem:[%s1241 + $0x1e0] sm:$0xff]
        %v1273 = vld [vmem:[%s1241 + $0x1e8] sm:$0xff]
        %1274 = vxpose.xlu0.b32.start [1/16] %v1242, 128
        %1275 = vxpose.xlu0.b32.cont [2/16] %v1244, 128
        %1276 = vxpose.xlu0.b32.cont [3/16] %v1246, 128
        %1277 = vxpose.xlu0.b32.cont [4/16] %v1248, 128
        %1278 = vxpose.xlu0.b32.cont [5/16] %v1250, 128
        %1279 = vxpose.xlu0.b32.cont [6/16] %v1252, 128
        %1280 = vxpose.xlu0.b32.cont [7/16] %v1254, 128
        %1281 = vxpose.xlu0.b32.cont [8/16] %v1256, 128
        %1282 = vxpose.xlu0.b32.cont [9/16] %v1258, 128
        %1283 = vxpose.xlu0.b32.cont [10/16] %v1260, 128
        %1284 = vxpose.xlu0.b32.cont [11/16] %v1262, 128
        %1285 = vxpose.xlu0.b32.cont [12/16] %v1264, 128
        %1286 = vxpose.xlu0.b32.cont [13/16] %v1266, 128
        %1287 = vxpose.xlu0.b32.cont [14/16] %v1268, 128
        %1288 = vxpose.xlu0.b32.cont [15/16] %v1270, 128
        %1289 = vxpose.xlu0.b32.end [16/16] %v1272, 128
        %v1290 = vpop.trf.xlu0
        %v1291 = vpop.trf.xlu0
        %v1292 = vpop.trf.xlu0
        %v1293 = vpop.trf.xlu0
        %v1294 = vpop.trf.xlu0
        %v1295 = vpop.trf.xlu0
        %v1296 = vpop.trf.xlu0
        %v1297 = vpop.trf.xlu0
        %v1298 = vpop.trf.xlu0
        %v1299 = vpop.trf.xlu0
        %v1300 = vpop.trf.xlu0
        %v1301 = vpop.trf.xlu0
        %v1302 = vpop.trf.xlu0
        %v1303 = vpop.trf.xlu0
        %v1304 = vpop.trf.xlu0
        %v1305 = vpop.trf.xlu0
        %1306 = vxpose.xlu0.b32.start [1/16] %v1243, 128
        %1307 = vxpose.xlu0.b32.cont [2/16] %v1245, 128
        %1308 = vxpose.xlu0.b32.cont [3/16] %v1247, 128
        %1309 = vxpose.xlu0.b32.cont [4/16] %v1249, 128
        %1310 = vxpose.xlu0.b32.cont [5/16] %v1251, 128
        %1311 = vxpose.xlu0.b32.cont [6/16] %v1253, 128
        %1312 = vxpose.xlu0.b32.cont [7/16] %v1255, 128
        %1313 = vxpose.xlu0.b32.cont [8/16] %v1257, 128
        %1314 = vxpose.xlu0.b32.cont [9/16] %v1259, 128
        %1315 = vxpose.xlu0.b32.cont [10/16] %v1261, 128
        %1316 = vxpose.xlu0.b32.cont [11/16] %v1263, 128
        %1317 = vxpose.xlu0.b32.cont [12/16] %v1265, 128
        %1318 = vxpose.xlu0.b32.cont [13/16] %v1267, 128
        %1319 = vxpose.xlu0.b32.cont [14/16] %v1269, 128
        %1320 = vxpose.xlu0.b32.cont [15/16] %v1271, 128
        %1321 = vxpose.xlu0.b32.end [16/16] %v1273, 128
        %v1322 = vpop.trf.xlu0
        %v1323 = vpop.trf.xlu0
        %v1324 = vpop.trf.xlu0
        %v1325 = vpop.trf.xlu0
        %v1326 = vpop.trf.xlu0
        %v1327 = vpop.trf.xlu0
        %v1328 = vpop.trf.xlu0
        %v1329 = vpop.trf.xlu0
        %v1330 = vpop.trf.xlu0
        %v1331 = vpop.trf.xlu0
        %v1332 = vpop.trf.xlu0
        %v1333 = vpop.trf.xlu0
        %v1334 = vpop.trf.xlu0
        %v1335 = vpop.trf.xlu0
        %v1336 = vpop.trf.xlu0
        %v1337 = vpop.trf.xlu0
        %1338 = vst [vmem:[#allocation2] sm:$0xff] %v1290
        %1339 = vst [vmem:[#allocation2 + $0x8] sm:$0xff] %v1291
        %1340 = vst [vmem:[#allocation2 + $0x10] sm:$0xff] %v1292
        %1341 = vst [vmem:[#allocation2 + $0x18] sm:$0xff] %v1293
        %1342 = vst [vmem:[#allocation2 + $0x20] sm:$0xff] %v1294
        %1343 = vst [vmem:[#allocation2 + $0x28] sm:$0xff] %v1295
        %1344 = vst [vmem:[#allocation2 + $0x30] sm:$0xff] %v1296
        %1345 = vst [vmem:[#allocation2 + $0x38] sm:$0xff] %v1297
        %1346 = vst [vmem:[#allocation2 + $0x40] sm:$0xff] %v1298
        %1347 = vst [vmem:[#allocation2 + $0x48] sm:$0xff] %v1299
        %1348 = vst [vmem:[#allocation2 + $0x50] sm:$0xff] %v1300
        %1349 = vst [vmem:[#allocation2 + $0x58] sm:$0xff] %v1301
        %1350 = vst [vmem:[#allocation2 + $0x60] sm:$0xff] %v1302
        %1351 = vst [vmem:[#allocation2 + $0x68] sm:$0xff] %v1303
        %1352 = vst [vmem:[#allocation2 + $0x70] sm:$0xff] %v1304
        %1353 = vst [vmem:[#allocation2 + $0x78] sm:$0xff] %v1305
        %1354 = vst [vmem:[#allocation2 + $0x80] sm:$0xff] %v1322
        %1355 = vst [vmem:[#allocation2 + $0x88] sm:$0xff] %v1323
        %1356 = vst [vmem:[#allocation2 + $0x90] sm:$0xff] %v1324
        %1357 = vst [vmem:[#allocation2 + $0x98] sm:$0xff] %v1325
        %1358 = vst [vmem:[#allocation2 + $0xa0] sm:$0xff] %v1326
        %1359 = vst [vmem:[#allocation2 + $0xa8] sm:$0xff] %v1327
        %1360 = vst [vmem:[#allocation2 + $0xb0] sm:$0xff] %v1328
        %1361 = vst [vmem:[#allocation2 + $0xb8] sm:$0xff] %v1329
        %1362 = vst [vmem:[#allocation2 + $0xc0] sm:$0xff] %v1330
        %1363 = vst [vmem:[#allocation2 + $0xc8] sm:$0xff] %v1331
        %1364 = vst [vmem:[#allocation2 + $0xd0] sm:$0xff] %v1332
        %1365 = vst [vmem:[#allocation2 + $0xd8] sm:$0xff] %v1333
        %1366 = vst [vmem:[#allocation2 + $0xe0] sm:$0xff] %v1334
        %1367 = vst [vmem:[#allocation2 + $0xe8] sm:$0xff] %v1335
        %1368 = vst [vmem:[#allocation2 + $0xf0] sm:$0xff] %v1336
        %1369 = vst [vmem:[#allocation2 + $0xf8] sm:$0xff] %v1337
        %v1370 = vld [vmem:[#allocation2] ss:$2 sm:$0xff]
        %v1371 = vld [vmem:[%s307] ss:$2 sm:$0xff]
        %v1372 = vld [vmem:[%s309] ss:$2 sm:$0xff]
        %v1373 = vld [vmem:[%s311] ss:$2 sm:$0xff]
        %v1374 = vld [vmem:[%s313] ss:$2 sm:$0xff]
        %v1375 = vld [vmem:[%s315] ss:$2 sm:$0xff]
        %v1376 = vld [vmem:[%s317] ss:$2 sm:$0xff]
        %v1377 = vld [vmem:[%s319] ss:$2 sm:$0xff]
        %v1378 = vld [vmem:[%s321] ss:$2 sm:$0xff]
        %v1379 = vld [vmem:[%s323] ss:$2 sm:$0xff]
        %v1380 = vld [vmem:[%s325] ss:$2 sm:$0xff]
        %v1381 = vld [vmem:[%s327] ss:$2 sm:$0xff]
        %v1382 = vld [vmem:[%s329] ss:$2 sm:$0xff]
        %v1383 = vld [vmem:[%s331] ss:$2 sm:$0xff]
        %v1384 = vld [vmem:[%s333] ss:$2 sm:$0xff]
        %v1385 = vld [vmem:[%s335] ss:$2 sm:$0xff]
        %1386 = vxpose.xlu0.b32.start [1/16] %v1370, 128
        %1387 = vxpose.xlu0.b32.cont [2/16] %v1371, 128
        %1388 = vxpose.xlu0.b32.cont [3/16] %v1372, 128
        %1389 = vxpose.xlu0.b32.cont [4/16] %v1373, 128
        %1390 = vxpose.xlu0.b32.cont [5/16] %v1374, 128
        %1391 = vxpose.xlu0.b32.cont [6/16] %v1375, 128
        %1392 = vxpose.xlu0.b32.cont [7/16] %v1376, 128
        %1393 = vxpose.xlu0.b32.cont [8/16] %v1377, 128
        %1394 = vxpose.xlu0.b32.cont [9/16] %v1378, 128
        %1395 = vxpose.xlu0.b32.cont [10/16] %v1379, 128
        %1396 = vxpose.xlu0.b32.cont [11/16] %v1380, 128
        %1397 = vxpose.xlu0.b32.cont [12/16] %v1381, 128
        %1398 = vxpose.xlu0.b32.cont [13/16] %v1382, 128
        %1399 = vxpose.xlu0.b32.cont [14/16] %v1383, 128
        %1400 = vxpose.xlu0.b32.cont [15/16] %v1384, 128
        %1401 = vxpose.xlu0.b32.end [16/16] %v1385, 128
        %v1402 = vpop.trf.xlu0
        %v1403 = vpop.trf.xlu0
        %v1404 = vpop.trf.xlu0
        %v1405 = vpop.trf.xlu0
        %v1406 = vpop.trf.xlu0
        %v1407 = vpop.trf.xlu0
        %v1408 = vpop.trf.xlu0
        %v1409 = vpop.trf.xlu0
        %v1410 = vpop.trf.xlu0
        %v1411 = vpop.trf.xlu0
        %v1412 = vpop.trf.xlu0
        %v1413 = vpop.trf.xlu0
        %v1414 = vpop.trf.xlu0
        %v1415 = vpop.trf.xlu0
        %v1416 = vpop.trf.xlu0
        %v1417 = vpop.trf.xlu0
        %s1418 = scalar_lea.vmem %s158, 256 [#allocation3]
        %1419 = vst [vmem:[%s1418] sm:$0xff] %v1402
        %1420 = vst [vmem:[%s1418 + $0x8] sm:$0xff] %v1403
        %1421 = vst [vmem:[%s1418 + $0x10] sm:$0xff] %v1404
        %1422 = vst [vmem:[%s1418 + $0x18] sm:$0xff] %v1405
        %1423 = vst [vmem:[%s1418 + $0x20] sm:$0xff] %v1406
        %1424 = vst [vmem:[%s1418 + $0x28] sm:$0xff] %v1407
        %1425 = vst [vmem:[%s1418 + $0x30] sm:$0xff] %v1408
        %1426 = vst [vmem:[%s1418 + $0x38] sm:$0xff] %v1409
        %1427 = vst [vmem:[%s1418 + $0x40] sm:$0xff] %v1410
        %1428 = vst [vmem:[%s1418 + $0x48] sm:$0xff] %v1411
        %1429 = vst [vmem:[%s1418 + $0x50] sm:$0xff] %v1412
        %1430 = vst [vmem:[%s1418 + $0x58] sm:$0xff] %v1413
        %1431 = vst [vmem:[%s1418 + $0x60] sm:$0xff] %v1414
        %1432 = vst [vmem:[%s1418 + $0x68] sm:$0xff] %v1415
        %1433 = vst [vmem:[%s1418 + $0x70] sm:$0xff] %v1416
        %1434 = vst [vmem:[%s1418 + $0x78] sm:$0xff] %v1417
        %v1435 = vld [vmem:[%s385] ss:$2 sm:$0xff]
        %v1436 = vld [vmem:[%s387] ss:$2 sm:$0xff]
        %v1437 = vld [vmem:[%s389] ss:$2 sm:$0xff]
        %v1438 = vld [vmem:[%s391] ss:$2 sm:$0xff]
        %v1439 = vld [vmem:[%s393] ss:$2 sm:$0xff]
        %v1440 = vld [vmem:[%s395] ss:$2 sm:$0xff]
        %v1441 = vld [vmem:[%s397] ss:$2 sm:$0xff]
        %v1442 = vld [vmem:[%s399] ss:$2 sm:$0xff]
        %v1443 = vld [vmem:[%s401] ss:$2 sm:$0xff]
        %v1444 = vld [vmem:[%s403] ss:$2 sm:$0xff]
        %v1445 = vld [vmem:[%s405] ss:$2 sm:$0xff]
        %v1446 = vld [vmem:[%s407] ss:$2 sm:$0xff]
        %v1447 = vld [vmem:[%s409] ss:$2 sm:$0xff]
        %v1448 = vld [vmem:[%s411] ss:$2 sm:$0xff]
        %v1449 = vld [vmem:[%s413] ss:$2 sm:$0xff]
        %v1450 = vld [vmem:[%s415] ss:$2 sm:$0xff]
        %1451 = vxpose.xlu0.b32.start [1/16] %v1435, 128
        %1452 = vxpose.xlu0.b32.cont [2/16] %v1436, 128
        %1453 = vxpose.xlu0.b32.cont [3/16] %v1437, 128
        %1454 = vxpose.xlu0.b32.cont [4/16] %v1438, 128
        %1455 = vxpose.xlu0.b32.cont [5/16] %v1439, 128
        %1456 = vxpose.xlu0.b32.cont [6/16] %v1440, 128
        %1457 = vxpose.xlu0.b32.cont [7/16] %v1441, 128
        %1458 = vxpose.xlu0.b32.cont [8/16] %v1442, 128
        %1459 = vxpose.xlu0.b32.cont [9/16] %v1443, 128
        %1460 = vxpose.xlu0.b32.cont [10/16] %v1444, 128
        %1461 = vxpose.xlu0.b32.cont [11/16] %v1445, 128
        %1462 = vxpose.xlu0.b32.cont [12/16] %v1446, 128
        %1463 = vxpose.xlu0.b32.cont [13/16] %v1447, 128
        %1464 = vxpose.xlu0.b32.cont [14/16] %v1448, 128
        %1465 = vxpose.xlu0.b32.cont [15/16] %v1449, 128
        %1466 = vxpose.xlu0.b32.end [16/16] %v1450, 128
        %v1467 = vpop.trf.xlu0
        %v1468 = vpop.trf.xlu0
        %v1469 = vpop.trf.xlu0
        %v1470 = vpop.trf.xlu0
        %v1471 = vpop.trf.xlu0
        %v1472 = vpop.trf.xlu0
        %v1473 = vpop.trf.xlu0
        %v1474 = vpop.trf.xlu0
        %v1475 = vpop.trf.xlu0
        %v1476 = vpop.trf.xlu0
        %v1477 = vpop.trf.xlu0
        %v1478 = vpop.trf.xlu0
        %v1479 = vpop.trf.xlu0
        %v1480 = vpop.trf.xlu0
        %v1481 = vpop.trf.xlu0
        %v1482 = vpop.trf.xlu0
        %s1483 = scalar_lea.vmem %s158, 768 [#allocation3]
        %1484 = vst [vmem:[%s1483] sm:$0xff] %v1467
        %1485 = vst [vmem:[%s1483 + $0x8] sm:$0xff] %v1468
        %1486 = vst [vmem:[%s1483 + $0x10] sm:$0xff] %v1469
        %1487 = vst [vmem:[%s1483 + $0x18] sm:$0xff] %v1470
        %1488 = vst [vmem:[%s1483 + $0x20] sm:$0xff] %v1471
        %1489 = vst [vmem:[%s1483 + $0x28] sm:$0xff] %v1472
        %1490 = vst [vmem:[%s1483 + $0x30] sm:$0xff] %v1473
        %1491 = vst [vmem:[%s1483 + $0x38] sm:$0xff] %v1474
        %1492 = vst [vmem:[%s1483 + $0x40] sm:$0xff] %v1475
        %1493 = vst [vmem:[%s1483 + $0x48] sm:$0xff] %v1476
        %1494 = vst [vmem:[%s1483 + $0x50] sm:$0xff] %v1477
        %1495 = vst [vmem:[%s1483 + $0x58] sm:$0xff] %v1478
        %1496 = vst [vmem:[%s1483 + $0x60] sm:$0xff] %v1479
        %1497 = vst [vmem:[%s1483 + $0x68] sm:$0xff] %v1480
        %1498 = vst [vmem:[%s1483 + $0x70] sm:$0xff] %v1481
        %1499 = vst [vmem:[%s1483 + $0x78] sm:$0xff] %v1482
        %v1500 = vld [vmem:[%s1241 + $0x10] sm:$0xff]
        %v1501 = vld [vmem:[%s1241 + $0x18] sm:$0xff]
        %v1502 = vld [vmem:[%s1241 + $0x30] sm:$0xff]
        %v1503 = vld [vmem:[%s1241 + $0x38] sm:$0xff]
        %v1504 = vld [vmem:[%s1241 + $0x50] sm:$0xff]
        %v1505 = vld [vmem:[%s1241 + $0x58] sm:$0xff]
        %v1506 = vld [vmem:[%s1241 + $0x70] sm:$0xff]
        %v1507 = vld [vmem:[%s1241 + $0x78] sm:$0xff]
        %v1508 = vld [vmem:[%s1241 + $0x90] sm:$0xff]
        %v1509 = vld [vmem:[%s1241 + $0x98] sm:$0xff]
        %v1510 = vld [vmem:[%s1241 + $0xb0] sm:$0xff]
        %v1511 = vld [vmem:[%s1241 + $0xb8] sm:$0xff]
        %v1512 = vld [vmem:[%s1241 + $0xd0] sm:$0xff]
        %v1513 = vld [vmem:[%s1241 + $0xd8] sm:$0xff]
        %v1514 = vld [vmem:[%s1241 + $0xf0] sm:$0xff]
        %v1515 = vld [vmem:[%s1241 + $0xf8] sm:$0xff]
        %v1516 = vld [vmem:[%s1241 + $0x110] sm:$0xff]
        %v1517 = vld [vmem:[%s1241 + $0x118] sm:$0xff]
        %v1518 = vld [vmem:[%s1241 + $0x130] sm:$0xff]
        %v1519 = vld [vmem:[%s1241 + $0x138] sm:$0xff]
        %v1520 = vld [vmem:[%s1241 + $0x150] sm:$0xff]
        %v1521 = vld [vmem:[%s1241 + $0x158] sm:$0xff]
        %v1522 = vld [vmem:[%s1241 + $0x170] sm:$0xff]
        %v1523 = vld [vmem:[%s1241 + $0x178] sm:$0xff]
        %v1524 = vld [vmem:[%s1241 + $0x190] sm:$0xff]
        %v1525 = vld [vmem:[%s1241 + $0x198] sm:$0xff]
        %v1526 = vld [vmem:[%s1241 + $0x1b0] sm:$0xff]
        %v1527 = vld [vmem:[%s1241 + $0x1b8] sm:$0xff]
        %v1528 = vld [vmem:[%s1241 + $0x1d0] sm:$0xff]
        %v1529 = vld [vmem:[%s1241 + $0x1d8] sm:$0xff]
        %v1530 = vld [vmem:[%s1241 + $0x1f0] sm:$0xff]
        %v1531 = vld [vmem:[%s1241 + $0x1f8] sm:$0xff]
        %1532 = vxpose.xlu0.b32.start [1/16] %v1500, 128
        %1533 = vxpose.xlu0.b32.cont [2/16] %v1502, 128
        %1534 = vxpose.xlu0.b32.cont [3/16] %v1504, 128
        %1535 = vxpose.xlu0.b32.cont [4/16] %v1506, 128
        %1536 = vxpose.xlu0.b32.cont [5/16] %v1508, 128
        %1537 = vxpose.xlu0.b32.cont [6/16] %v1510, 128
        %1538 = vxpose.xlu0.b32.cont [7/16] %v1512, 128
        %1539 = vxpose.xlu0.b32.cont [8/16] %v1514, 128
        %1540 = vxpose.xlu0.b32.cont [9/16] %v1516, 128
        %1541 = vxpose.xlu0.b32.cont [10/16] %v1518, 128
        %1542 = vxpose.xlu0.b32.cont [11/16] %v1520, 128
        %1543 = vxpose.xlu0.b32.cont [12/16] %v1522, 128
        %1544 = vxpose.xlu0.b32.cont [13/16] %v1524, 128
        %1545 = vxpose.xlu0.b32.cont [14/16] %v1526, 128
        %1546 = vxpose.xlu0.b32.cont [15/16] %v1528, 128
        %1547 = vxpose.xlu0.b32.end [16/16] %v1530, 128
        %v1548 = vpop.trf.xlu0
        %v1549 = vpop.trf.xlu0
        %v1550 = vpop.trf.xlu0
        %v1551 = vpop.trf.xlu0
        %v1552 = vpop.trf.xlu0
        %v1553 = vpop.trf.xlu0
        %v1554 = vpop.trf.xlu0
        %v1555 = vpop.trf.xlu0
        %v1556 = vpop.trf.xlu0
        %v1557 = vpop.trf.xlu0
        %v1558 = vpop.trf.xlu0
        %v1559 = vpop.trf.xlu0
        %v1560 = vpop.trf.xlu0
        %v1561 = vpop.trf.xlu0
        %v1562 = vpop.trf.xlu0
        %v1563 = vpop.trf.xlu0
        %1564 = vxpose.xlu0.b32.start [1/16] %v1501, 128
        %1565 = vxpose.xlu0.b32.cont [2/16] %v1503, 128
        %1566 = vxpose.xlu0.b32.cont [3/16] %v1505, 128
        %1567 = vxpose.xlu0.b32.cont [4/16] %v1507, 128
        %1568 = vxpose.xlu0.b32.cont [5/16] %v1509, 128
        %1569 = vxpose.xlu0.b32.cont [6/16] %v1511, 128
        %1570 = vxpose.xlu0.b32.cont [7/16] %v1513, 128
        %1571 = vxpose.xlu0.b32.cont [8/16] %v1515, 128
        %1572 = vxpose.xlu0.b32.cont [9/16] %v1517, 128
        %1573 = vxpose.xlu0.b32.cont [10/16] %v1519, 128
        %1574 = vxpose.xlu0.b32.cont [11/16] %v1521, 128
        %1575 = vxpose.xlu0.b32.cont [12/16] %v1523, 128
        %1576 = vxpose.xlu0.b32.cont [13/16] %v1525, 128
        %1577 = vxpose.xlu0.b32.cont [14/16] %v1527, 128
        %1578 = vxpose.xlu0.b32.cont [15/16] %v1529, 128
        %1579 = vxpose.xlu0.b32.end [16/16] %v1531, 128
        %v1580 = vpop.trf.xlu0
        %v1581 = vpop.trf.xlu0
        %v1582 = vpop.trf.xlu0
        %v1583 = vpop.trf.xlu0
        %v1584 = vpop.trf.xlu0
        %v1585 = vpop.trf.xlu0
        %v1586 = vpop.trf.xlu0
        %v1587 = vpop.trf.xlu0
        %v1588 = vpop.trf.xlu0
        %v1589 = vpop.trf.xlu0
        %v1590 = vpop.trf.xlu0
        %v1591 = vpop.trf.xlu0
        %v1592 = vpop.trf.xlu0
        %v1593 = vpop.trf.xlu0
        %v1594 = vpop.trf.xlu0
        %v1595 = vpop.trf.xlu0
        %1596 = vst [vmem:[#allocation2] sm:$0xff] %v1548
        %1597 = vst [vmem:[#allocation2 + $0x8] sm:$0xff] %v1549
        %1598 = vst [vmem:[#allocation2 + $0x10] sm:$0xff] %v1550
        %1599 = vst [vmem:[#allocation2 + $0x18] sm:$0xff] %v1551
        %1600 = vst [vmem:[#allocation2 + $0x20] sm:$0xff] %v1552
        %1601 = vst [vmem:[#allocation2 + $0x28] sm:$0xff] %v1553
        %1602 = vst [vmem:[#allocation2 + $0x30] sm:$0xff] %v1554
        %1603 = vst [vmem:[#allocation2 + $0x38] sm:$0xff] %v1555
        %1604 = vst [vmem:[#allocation2 + $0x40] sm:$0xff] %v1556
        %1605 = vst [vmem:[#allocation2 + $0x48] sm:$0xff] %v1557
        %1606 = vst [vmem:[#allocation2 + $0x50] sm:$0xff] %v1558
        %1607 = vst [vmem:[#allocation2 + $0x58] sm:$0xff] %v1559
        %1608 = vst [vmem:[#allocation2 + $0x60] sm:$0xff] %v1560
        %1609 = vst [vmem:[#allocation2 + $0x68] sm:$0xff] %v1561
        %1610 = vst [vmem:[#allocation2 + $0x70] sm:$0xff] %v1562
        %1611 = vst [vmem:[#allocation2 + $0x78] sm:$0xff] %v1563
        %1612 = vst [vmem:[#allocation2 + $0x80] sm:$0xff] %v1580
        %1613 = vst [vmem:[#allocation2 + $0x88] sm:$0xff] %v1581
        %1614 = vst [vmem:[#allocation2 + $0x90] sm:$0xff] %v1582
        %1615 = vst [vmem:[#allocation2 + $0x98] sm:$0xff] %v1583
        %1616 = vst [vmem:[#allocation2 + $0xa0] sm:$0xff] %v1584
        %1617 = vst [vmem:[#allocation2 + $0xa8] sm:$0xff] %v1585
        %1618 = vst [vmem:[#allocation2 + $0xb0] sm:$0xff] %v1586
        %1619 = vst [vmem:[#allocation2 + $0xb8] sm:$0xff] %v1587
        %1620 = vst [vmem:[#allocation2 + $0xc0] sm:$0xff] %v1588
        %1621 = vst [vmem:[#allocation2 + $0xc8] sm:$0xff] %v1589
        %1622 = vst [vmem:[#allocation2 + $0xd0] sm:$0xff] %v1590
        %1623 = vst [vmem:[#allocation2 + $0xd8] sm:$0xff] %v1591
        %1624 = vst [vmem:[#allocation2 + $0xe0] sm:$0xff] %v1592
        %1625 = vst [vmem:[#allocation2 + $0xe8] sm:$0xff] %v1593
        %1626 = vst [vmem:[#allocation2 + $0xf0] sm:$0xff] %v1594
        %1627 = vst [vmem:[#allocation2 + $0xf8] sm:$0xff] %v1595
        %v1628 = vld [vmem:[#allocation2] ss:$2 sm:$0xff]
        %v1629 = vld [vmem:[%s307] ss:$2 sm:$0xff]
        %v1630 = vld [vmem:[%s309] ss:$2 sm:$0xff]
        %v1631 = vld [vmem:[%s311] ss:$2 sm:$0xff]
        %v1632 = vld [vmem:[%s313] ss:$2 sm:$0xff]
        %v1633 = vld [vmem:[%s315] ss:$2 sm:$0xff]
        %v1634 = vld [vmem:[%s317] ss:$2 sm:$0xff]
        %v1635 = vld [vmem:[%s319] ss:$2 sm:$0xff]
        %v1636 = vld [vmem:[%s321] ss:$2 sm:$0xff]
        %v1637 = vld [vmem:[%s323] ss:$2 sm:$0xff]
        %v1638 = vld [vmem:[%s325] ss:$2 sm:$0xff]
        %v1639 = vld [vmem:[%s327] ss:$2 sm:$0xff]
        %v1640 = vld [vmem:[%s329] ss:$2 sm:$0xff]
        %v1641 = vld [vmem:[%s331] ss:$2 sm:$0xff]
        %v1642 = vld [vmem:[%s333] ss:$2 sm:$0xff]
        %v1643 = vld [vmem:[%s335] ss:$2 sm:$0xff]
        %1644 = vxpose.xlu0.b32.start [1/16] %v1628, 128
        %1645 = vxpose.xlu0.b32.cont [2/16] %v1629, 128
        %1646 = vxpose.xlu0.b32.cont [3/16] %v1630, 128
        %1647 = vxpose.xlu0.b32.cont [4/16] %v1631, 128
        %1648 = vxpose.xlu0.b32.cont [5/16] %v1632, 128
        %1649 = vxpose.xlu0.b32.cont [6/16] %v1633, 128
        %1650 = vxpose.xlu0.b32.cont [7/16] %v1634, 128
        %1651 = vxpose.xlu0.b32.cont [8/16] %v1635, 128
        %1652 = vxpose.xlu0.b32.cont [9/16] %v1636, 128
        %1653 = vxpose.xlu0.b32.cont [10/16] %v1637, 128
        %1654 = vxpose.xlu0.b32.cont [11/16] %v1638, 128
        %1655 = vxpose.xlu0.b32.cont [12/16] %v1639, 128
        %1656 = vxpose.xlu0.b32.cont [13/16] %v1640, 128
        %1657 = vxpose.xlu0.b32.cont [14/16] %v1641, 128
        %1658 = vxpose.xlu0.b32.cont [15/16] %v1642, 128
        %1659 = vxpose.xlu0.b32.end [16/16] %v1643, 128
        %v1660 = vpop.trf.xlu0
        %v1661 = vpop.trf.xlu0
        %v1662 = vpop.trf.xlu0
        %v1663 = vpop.trf.xlu0
        %v1664 = vpop.trf.xlu0
        %v1665 = vpop.trf.xlu0
        %v1666 = vpop.trf.xlu0
        %v1667 = vpop.trf.xlu0
        %v1668 = vpop.trf.xlu0
        %v1669 = vpop.trf.xlu0
        %v1670 = vpop.trf.xlu0
        %v1671 = vpop.trf.xlu0
        %v1672 = vpop.trf.xlu0
        %v1673 = vpop.trf.xlu0
        %v1674 = vpop.trf.xlu0
        %v1675 = vpop.trf.xlu0
        %s1676 = scalar_lea.vmem %s158, 1280 [#allocation3]
        %1677 = vst [vmem:[%s1676] sm:$0xff] %v1660
        %1678 = vst [vmem:[%s1676 + $0x8] sm:$0xff] %v1661
        %1679 = vst [vmem:[%s1676 + $0x10] sm:$0xff] %v1662
        %1680 = vst [vmem:[%s1676 + $0x18] sm:$0xff] %v1663
        %1681 = vst [vmem:[%s1676 + $0x20] sm:$0xff] %v1664
        %1682 = vst [vmem:[%s1676 + $0x28] sm:$0xff] %v1665
        %1683 = vst [vmem:[%s1676 + $0x30] sm:$0xff] %v1666
        %1684 = vst [vmem:[%s1676 + $0x38] sm:$0xff] %v1667
        %1685 = vst [vmem:[%s1676 + $0x40] sm:$0xff] %v1668
        %1686 = vst [vmem:[%s1676 + $0x48] sm:$0xff] %v1669
        %1687 = vst [vmem:[%s1676 + $0x50] sm:$0xff] %v1670
        %1688 = vst [vmem:[%s1676 + $0x58] sm:$0xff] %v1671
        %1689 = vst [vmem:[%s1676 + $0x60] sm:$0xff] %v1672
        %1690 = vst [vmem:[%s1676 + $0x68] sm:$0xff] %v1673
        %1691 = vst [vmem:[%s1676 + $0x70] sm:$0xff] %v1674
        %1692 = vst [vmem:[%s1676 + $0x78] sm:$0xff] %v1675
        %v1693 = vld [vmem:[%s385] ss:$2 sm:$0xff]
        %v1694 = vld [vmem:[%s387] ss:$2 sm:$0xff]
        %v1695 = vld [vmem:[%s389] ss:$2 sm:$0xff]
        %v1696 = vld [vmem:[%s391] ss:$2 sm:$0xff]
        %v1697 = vld [vmem:[%s393] ss:$2 sm:$0xff]
        %v1698 = vld [vmem:[%s395] ss:$2 sm:$0xff]
        %v1699 = vld [vmem:[%s397] ss:$2 sm:$0xff]
        %v1700 = vld [vmem:[%s399] ss:$2 sm:$0xff]
        %v1701 = vld [vmem:[%s401] ss:$2 sm:$0xff]
        %v1702 = vld [vmem:[%s403] ss:$2 sm:$0xff]
        %v1703 = vld [vmem:[%s405] ss:$2 sm:$0xff]
        %v1704 = vld [vmem:[%s407] ss:$2 sm:$0xff]
        %v1705 = vld [vmem:[%s409] ss:$2 sm:$0xff]
        %v1706 = vld [vmem:[%s411] ss:$2 sm:$0xff]
        %v1707 = vld [vmem:[%s413] ss:$2 sm:$0xff]
        %v1708 = vld [vmem:[%s415] ss:$2 sm:$0xff]
        %1709 = vxpose.xlu0.b32.start [1/16] %v1693, 128
        %1710 = vxpose.xlu0.b32.cont [2/16] %v1694, 128
        %1711 = vxpose.xlu0.b32.cont [3/16] %v1695, 128
        %1712 = vxpose.xlu0.b32.cont [4/16] %v1696, 128
        %1713 = vxpose.xlu0.b32.cont [5/16] %v1697, 128
        %1714 = vxpose.xlu0.b32.cont [6/16] %v1698, 128
        %1715 = vxpose.xlu0.b32.cont [7/16] %v1699, 128
        %1716 = vxpose.xlu0.b32.cont [8/16] %v1700, 128
        %1717 = vxpose.xlu0.b32.cont [9/16] %v1701, 128
        %1718 = vxpose.xlu0.b32.cont [10/16] %v1702, 128
        %1719 = vxpose.xlu0.b32.cont [11/16] %v1703, 128
        %1720 = vxpose.xlu0.b32.cont [12/16] %v1704, 128
        %1721 = vxpose.xlu0.b32.cont [13/16] %v1705, 128
        %1722 = vxpose.xlu0.b32.cont [14/16] %v1706, 128
        %1723 = vxpose.xlu0.b32.cont [15/16] %v1707, 128
        %1724 = vxpose.xlu0.b32.end [16/16] %v1708, 128
        %v1725 = vpop.trf.xlu0
        %v1726 = vpop.trf.xlu0
        %v1727 = vpop.trf.xlu0
        %v1728 = vpop.trf.xlu0
        %v1729 = vpop.trf.xlu0
        %v1730 = vpop.trf.xlu0
        %v1731 = vpop.trf.xlu0
        %v1732 = vpop.trf.xlu0
        %v1733 = vpop.trf.xlu0
        %v1734 = vpop.trf.xlu0
        %v1735 = vpop.trf.xlu0
        %v1736 = vpop.trf.xlu0
        %v1737 = vpop.trf.xlu0
        %v1738 = vpop.trf.xlu0
        %v1739 = vpop.trf.xlu0
        %v1740 = vpop.trf.xlu0
        %s1741 = scalar_lea.vmem %s158, 1792 [#allocation3]
        %1742 = vst [vmem:[%s1741] sm:$0xff] %v1725
        %1743 = vst [vmem:[%s1741 + $0x8] sm:$0xff] %v1726
        %1744 = vst [vmem:[%s1741 + $0x10] sm:$0xff] %v1727
        %1745 = vst [vmem:[%s1741 + $0x18] sm:$0xff] %v1728
        %1746 = vst [vmem:[%s1741 + $0x20] sm:$0xff] %v1729
        %1747 = vst [vmem:[%s1741 + $0x28] sm:$0xff] %v1730
        %1748 = vst [vmem:[%s1741 + $0x30] sm:$0xff] %v1731
        %1749 = vst [vmem:[%s1741 + $0x38] sm:$0xff] %v1732
        %1750 = vst [vmem:[%s1741 + $0x40] sm:$0xff] %v1733
        %1751 = vst [vmem:[%s1741 + $0x48] sm:$0xff] %v1734
        %1752 = vst [vmem:[%s1741 + $0x50] sm:$0xff] %v1735
        %1753 = vst [vmem:[%s1741 + $0x58] sm:$0xff] %v1736
        %1754 = vst [vmem:[%s1741 + $0x60] sm:$0xff] %v1737
        %1755 = vst [vmem:[%s1741 + $0x68] sm:$0xff] %v1738
        %1756 = vst [vmem:[%s1741 + $0x70] sm:$0xff] %v1739
        %1757 = vst [vmem:[%s1741 + $0x78] sm:$0xff] %v1740
        %s1758 = scalar_lea.vmem %s173, 1536
        %v1759 = vld [vmem:[%s1758] sm:$0xff]
        %v1760 = vld [vmem:[%s1758 + $0x8] sm:$0xff]
        %v1761 = vld [vmem:[%s1758 + $0x20] sm:$0xff]
        %v1762 = vld [vmem:[%s1758 + $0x28] sm:$0xff]
        %v1763 = vld [vmem:[%s1758 + $0x40] sm:$0xff]
        %v1764 = vld [vmem:[%s1758 + $0x48] sm:$0xff]
        %v1765 = vld [vmem:[%s1758 + $0x60] sm:$0xff]
        %v1766 = vld [vmem:[%s1758 + $0x68] sm:$0xff]
        %v1767 = vld [vmem:[%s1758 + $0x80] sm:$0xff]
        %v1768 = vld [vmem:[%s1758 + $0x88] sm:$0xff]
        %v1769 = vld [vmem:[%s1758 + $0xa0] sm:$0xff]
        %v1770 = vld [vmem:[%s1758 + $0xa8] sm:$0xff]
        %v1771 = vld [vmem:[%s1758 + $0xc0] sm:$0xff]
        %v1772 = vld [vmem:[%s1758 + $0xc8] sm:$0xff]
        %v1773 = vld [vmem:[%s1758 + $0xe0] sm:$0xff]
        %v1774 = vld [vmem:[%s1758 + $0xe8] sm:$0xff]
        %v1775 = vld [vmem:[%s1758 + $0x100] sm:$0xff]
        %v1776 = vld [vmem:[%s1758 + $0x108] sm:$0xff]
        %v1777 = vld [vmem:[%s1758 + $0x120] sm:$0xff]
        %v1778 = vld [vmem:[%s1758 + $0x128] sm:$0xff]
        %v1779 = vld [vmem:[%s1758 + $0x140] sm:$0xff]
        %v1780 = vld [vmem:[%s1758 + $0x148] sm:$0xff]
        %v1781 = vld [vmem:[%s1758 + $0x160] sm:$0xff]
        %v1782 = vld [vmem:[%s1758 + $0x168] sm:$0xff]
        %v1783 = vld [vmem:[%s1758 + $0x180] sm:$0xff]
        %v1784 = vld [vmem:[%s1758 + $0x188] sm:$0xff]
        %v1785 = vld [vmem:[%s1758 + $0x1a0] sm:$0xff]
        %v1786 = vld [vmem:[%s1758 + $0x1a8] sm:$0xff]
        %v1787 = vld [vmem:[%s1758 + $0x1c0] sm:$0xff]
        %v1788 = vld [vmem:[%s1758 + $0x1c8] sm:$0xff]
        %v1789 = vld [vmem:[%s1758 + $0x1e0] sm:$0xff]
        %v1790 = vld [vmem:[%s1758 + $0x1e8] sm:$0xff]
        %1791 = vxpose.xlu0.b32.start [1/16] %v1759, 128
        %1792 = vxpose.xlu0.b32.cont [2/16] %v1761, 128
        %1793 = vxpose.xlu0.b32.cont [3/16] %v1763, 128
        %1794 = vxpose.xlu0.b32.cont [4/16] %v1765, 128
        %1795 = vxpose.xlu0.b32.cont [5/16] %v1767, 128
        %1796 = vxpose.xlu0.b32.cont [6/16] %v1769, 128
        %1797 = vxpose.xlu0.b32.cont [7/16] %v1771, 128
        %1798 = vxpose.xlu0.b32.cont [8/16] %v1773, 128
        %1799 = vxpose.xlu0.b32.cont [9/16] %v1775, 128
        %1800 = vxpose.xlu0.b32.cont [10/16] %v1777, 128
        %1801 = vxpose.xlu0.b32.cont [11/16] %v1779, 128
        %1802 = vxpose.xlu0.b32.cont [12/16] %v1781, 128
        %1803 = vxpose.xlu0.b32.cont [13/16] %v1783, 128
        %1804 = vxpose.xlu0.b32.cont [14/16] %v1785, 128
        %1805 = vxpose.xlu0.b32.cont [15/16] %v1787, 128
        %1806 = vxpose.xlu0.b32.end [16/16] %v1789, 128
        %v1807 = vpop.trf.xlu0
        %v1808 = vpop.trf.xlu0
        %v1809 = vpop.trf.xlu0
        %v1810 = vpop.trf.xlu0
        %v1811 = vpop.trf.xlu0
        %v1812 = vpop.trf.xlu0
        %v1813 = vpop.trf.xlu0
        %v1814 = vpop.trf.xlu0
        %v1815 = vpop.trf.xlu0
        %v1816 = vpop.trf.xlu0
        %v1817 = vpop.trf.xlu0
        %v1818 = vpop.trf.xlu0
        %v1819 = vpop.trf.xlu0
        %v1820 = vpop.trf.xlu0
        %v1821 = vpop.trf.xlu0
        %v1822 = vpop.trf.xlu0
        %1823 = vxpose.xlu0.b32.start [1/16] %v1760, 128
        %1824 = vxpose.xlu0.b32.cont [2/16] %v1762, 128
        %1825 = vxpose.xlu0.b32.cont [3/16] %v1764, 128
        %1826 = vxpose.xlu0.b32.cont [4/16] %v1766, 128
        %1827 = vxpose.xlu0.b32.cont [5/16] %v1768, 128
        %1828 = vxpose.xlu0.b32.cont [6/16] %v1770, 128
        %1829 = vxpose.xlu0.b32.cont [7/16] %v1772, 128
        %1830 = vxpose.xlu0.b32.cont [8/16] %v1774, 128
        %1831 = vxpose.xlu0.b32.cont [9/16] %v1776, 128
        %1832 = vxpose.xlu0.b32.cont [10/16] %v1778, 128
        %1833 = vxpose.xlu0.b32.cont [11/16] %v1780, 128
        %1834 = vxpose.xlu0.b32.cont [12/16] %v1782, 128
        %1835 = vxpose.xlu0.b32.cont [13/16] %v1784, 128
        %1836 = vxpose.xlu0.b32.cont [14/16] %v1786, 128
        %1837 = vxpose.xlu0.b32.cont [15/16] %v1788, 128
        %1838 = vxpose.xlu0.b32.end [16/16] %v1790, 128
        %v1839 = vpop.trf.xlu0
        %v1840 = vpop.trf.xlu0
        %v1841 = vpop.trf.xlu0
        %v1842 = vpop.trf.xlu0
        %v1843 = vpop.trf.xlu0
        %v1844 = vpop.trf.xlu0
        %v1845 = vpop.trf.xlu0
        %v1846 = vpop.trf.xlu0
        %v1847 = vpop.trf.xlu0
        %v1848 = vpop.trf.xlu0
        %v1849 = vpop.trf.xlu0
        %v1850 = vpop.trf.xlu0
        %v1851 = vpop.trf.xlu0
        %v1852 = vpop.trf.xlu0
        %v1853 = vpop.trf.xlu0
        %v1854 = vpop.trf.xlu0
        %1855 = vst [vmem:[#allocation2] sm:$0xff] %v1807
        %1856 = vst [vmem:[#allocation2 + $0x8] sm:$0xff] %v1808
        %1857 = vst [vmem:[#allocation2 + $0x10] sm:$0xff] %v1809
        %1858 = vst [vmem:[#allocation2 + $0x18] sm:$0xff] %v1810
        %1859 = vst [vmem:[#allocation2 + $0x20] sm:$0xff] %v1811
        %1860 = vst [vmem:[#allocation2 + $0x28] sm:$0xff] %v1812
        %1861 = vst [vmem:[#allocation2 + $0x30] sm:$0xff] %v1813
        %1862 = vst [vmem:[#allocation2 + $0x38] sm:$0xff] %v1814
        %1863 = vst [vmem:[#allocation2 + $0x40] sm:$0xff] %v1815
        %1864 = vst [vmem:[#allocation2 + $0x48] sm:$0xff] %v1816
        %1865 = vst [vmem:[#allocation2 + $0x50] sm:$0xff] %v1817
        %1866 = vst [vmem:[#allocation2 + $0x58] sm:$0xff] %v1818
        %1867 = vst [vmem:[#allocation2 + $0x60] sm:$0xff] %v1819
        %1868 = vst [vmem:[#allocation2 + $0x68] sm:$0xff] %v1820
        %1869 = vst [vmem:[#allocation2 + $0x70] sm:$0xff] %v1821
        %1870 = vst [vmem:[#allocation2 + $0x78] sm:$0xff] %v1822
        %1871 = vst [vmem:[#allocation2 + $0x80] sm:$0xff] %v1839
        %1872 = vst [vmem:[#allocation2 + $0x88] sm:$0xff] %v1840
        %1873 = vst [vmem:[#allocation2 + $0x90] sm:$0xff] %v1841
        %1874 = vst [vmem:[#allocation2 + $0x98] sm:$0xff] %v1842
        %1875 = vst [vmem:[#allocation2 + $0xa0] sm:$0xff] %v1843
        %1876 = vst [vmem:[#allocation2 + $0xa8] sm:$0xff] %v1844
        %1877 = vst [vmem:[#allocation2 + $0xb0] sm:$0xff] %v1845
        %1878 = vst [vmem:[#allocation2 + $0xb8] sm:$0xff] %v1846
        %1879 = vst [vmem:[#allocation2 + $0xc0] sm:$0xff] %v1847
        %1880 = vst [vmem:[#allocation2 + $0xc8] sm:$0xff] %v1848
        %1881 = vst [vmem:[#allocation2 + $0xd0] sm:$0xff] %v1849
        %1882 = vst [vmem:[#allocation2 + $0xd8] sm:$0xff] %v1850
        %1883 = vst [vmem:[#allocation2 + $0xe0] sm:$0xff] %v1851
        %1884 = vst [vmem:[#allocation2 + $0xe8] sm:$0xff] %v1852
        %1885 = vst [vmem:[#allocation2 + $0xf0] sm:$0xff] %v1853
        %1886 = vst [vmem:[#allocation2 + $0xf8] sm:$0xff] %v1854
        %v1887 = vld [vmem:[#allocation2] ss:$2 sm:$0xff]
        %v1888 = vld [vmem:[%s307] ss:$2 sm:$0xff]
        %v1889 = vld [vmem:[%s309] ss:$2 sm:$0xff]
        %v1890 = vld [vmem:[%s311] ss:$2 sm:$0xff]
        %v1891 = vld [vmem:[%s313] ss:$2 sm:$0xff]
        %v1892 = vld [vmem:[%s315] ss:$2 sm:$0xff]
        %v1893 = vld [vmem:[%s317] ss:$2 sm:$0xff]
        %v1894 = vld [vmem:[%s319] ss:$2 sm:$0xff]
        %v1895 = vld [vmem:[%s321] ss:$2 sm:$0xff]
        %v1896 = vld [vmem:[%s323] ss:$2 sm:$0xff]
        %v1897 = vld [vmem:[%s325] ss:$2 sm:$0xff]
        %v1898 = vld [vmem:[%s327] ss:$2 sm:$0xff]
        %v1899 = vld [vmem:[%s329] ss:$2 sm:$0xff]
        %v1900 = vld [vmem:[%s331] ss:$2 sm:$0xff]
        %v1901 = vld [vmem:[%s333] ss:$2 sm:$0xff]
        %v1902 = vld [vmem:[%s335] ss:$2 sm:$0xff]
        %1903 = vxpose.xlu0.b32.start [1/16] %v1887, 128
        %1904 = vxpose.xlu0.b32.cont [2/16] %v1888, 128
        %1905 = vxpose.xlu0.b32.cont [3/16] %v1889, 128
        %1906 = vxpose.xlu0.b32.cont [4/16] %v1890, 128
        %1907 = vxpose.xlu0.b32.cont [5/16] %v1891, 128
        %1908 = vxpose.xlu0.b32.cont [6/16] %v1892, 128
        %1909 = vxpose.xlu0.b32.cont [7/16] %v1893, 128
        %1910 = vxpose.xlu0.b32.cont [8/16] %v1894, 128
        %1911 = vxpose.xlu0.b32.cont [9/16] %v1895, 128
        %1912 = vxpose.xlu0.b32.cont [10/16] %v1896, 128
        %1913 = vxpose.xlu0.b32.cont [11/16] %v1897, 128
        %1914 = vxpose.xlu0.b32.cont [12/16] %v1898, 128
        %1915 = vxpose.xlu0.b32.cont [13/16] %v1899, 128
        %1916 = vxpose.xlu0.b32.cont [14/16] %v1900, 128
        %1917 = vxpose.xlu0.b32.cont [15/16] %v1901, 128
        %1918 = vxpose.xlu0.b32.end [16/16] %v1902, 128
        %v1919 = vpop.trf.xlu0
        %v1920 = vpop.trf.xlu0
        %v1921 = vpop.trf.xlu0
        %v1922 = vpop.trf.xlu0
        %v1923 = vpop.trf.xlu0
        %v1924 = vpop.trf.xlu0
        %v1925 = vpop.trf.xlu0
        %v1926 = vpop.trf.xlu0
        %v1927 = vpop.trf.xlu0
        %v1928 = vpop.trf.xlu0
        %v1929 = vpop.trf.xlu0
        %v1930 = vpop.trf.xlu0
        %v1931 = vpop.trf.xlu0
        %v1932 = vpop.trf.xlu0
        %v1933 = vpop.trf.xlu0
        %v1934 = vpop.trf.xlu0
        %s1935 = scalar_lea.vmem %s158, 384 [#allocation3]
        %1936 = vst [vmem:[%s1935] sm:$0xff] %v1919
        %1937 = vst [vmem:[%s1935 + $0x8] sm:$0xff] %v1920
        %1938 = vst [vmem:[%s1935 + $0x10] sm:$0xff] %v1921
        %1939 = vst [vmem:[%s1935 + $0x18] sm:$0xff] %v1922
        %1940 = vst [vmem:[%s1935 + $0x20] sm:$0xff] %v1923
        %1941 = vst [vmem:[%s1935 + $0x28] sm:$0xff] %v1924
        %1942 = vst [vmem:[%s1935 + $0x30] sm:$0xff] %v1925
        %1943 = vst [vmem:[%s1935 + $0x38] sm:$0xff] %v1926
        %1944 = vst [vmem:[%s1935 + $0x40] sm:$0xff] %v1927
        %1945 = vst [vmem:[%s1935 + $0x48] sm:$0xff] %v1928
        %1946 = vst [vmem:[%s1935 + $0x50] sm:$0xff] %v1929
        %1947 = vst [vmem:[%s1935 + $0x58] sm:$0xff] %v1930
        %1948 = vst [vmem:[%s1935 + $0x60] sm:$0xff] %v1931
        %1949 = vst [vmem:[%s1935 + $0x68] sm:$0xff] %v1932
        %1950 = vst [vmem:[%s1935 + $0x70] sm:$0xff] %v1933
        %1951 = vst [vmem:[%s1935 + $0x78] sm:$0xff] %v1934
        %v1952 = vld [vmem:[%s385] ss:$2 sm:$0xff]
        %v1953 = vld [vmem:[%s387] ss:$2 sm:$0xff]
        %v1954 = vld [vmem:[%s389] ss:$2 sm:$0xff]
        %v1955 = vld [vmem:[%s391] ss:$2 sm:$0xff]
        %v1956 = vld [vmem:[%s393] ss:$2 sm:$0xff]
        %v1957 = vld [vmem:[%s395] ss:$2 sm:$0xff]
        %v1958 = vld [vmem:[%s397] ss:$2 sm:$0xff]
        %v1959 = vld [vmem:[%s399] ss:$2 sm:$0xff]
        %v1960 = vld [vmem:[%s401] ss:$2 sm:$0xff]
        %v1961 = vld [vmem:[%s403] ss:$2 sm:$0xff]
        %v1962 = vld [vmem:[%s405] ss:$2 sm:$0xff]
        %v1963 = vld [vmem:[%s407] ss:$2 sm:$0xff]
        %v1964 = vld [vmem:[%s409] ss:$2 sm:$0xff]
        %v1965 = vld [vmem:[%s411] ss:$2 sm:$0xff]
        %v1966 = vld [vmem:[%s413] ss:$2 sm:$0xff]
        %v1967 = vld [vmem:[%s415] ss:$2 sm:$0xff]
        %1968 = vxpose.xlu0.b32.start [1/16] %v1952, 128
        %1969 = vxpose.xlu0.b32.cont [2/16] %v1953, 128
        %1970 = vxpose.xlu0.b32.cont [3/16] %v1954, 128
        %1971 = vxpose.xlu0.b32.cont [4/16] %v1955, 128
        %1972 = vxpose.xlu0.b32.cont [5/16] %v1956, 128
        %1973 = vxpose.xlu0.b32.cont [6/16] %v1957, 128
        %1974 = vxpose.xlu0.b32.cont [7/16] %v1958, 128
        %1975 = vxpose.xlu0.b32.cont [8/16] %v1959, 128
        %1976 = vxpose.xlu0.b32.cont [9/16] %v1960, 128
        %1977 = vxpose.xlu0.b32.cont [10/16] %v1961, 128
        %1978 = vxpose.xlu0.b32.cont [11/16] %v1962, 128
        %1979 = vxpose.xlu0.b32.cont [12/16] %v1963, 128
        %1980 = vxpose.xlu0.b32.cont [13/16] %v1964, 128
        %1981 = vxpose.xlu0.b32.cont [14/16] %v1965, 128
        %1982 = vxpose.xlu0.b32.cont [15/16] %v1966, 128
        %1983 = vxpose.xlu0.b32.end [16/16] %v1967, 128
        %v1984 = vpop.trf.xlu0
        %v1985 = vpop.trf.xlu0
        %v1986 = vpop.trf.xlu0
        %v1987 = vpop.trf.xlu0
        %v1988 = vpop.trf.xlu0
        %v1989 = vpop.trf.xlu0
        %v1990 = vpop.trf.xlu0
        %v1991 = vpop.trf.xlu0
        %v1992 = vpop.trf.xlu0
        %v1993 = vpop.trf.xlu0
        %v1994 = vpop.trf.xlu0
        %v1995 = vpop.trf.xlu0
        %v1996 = vpop.trf.xlu0
        %v1997 = vpop.trf.xlu0
        %v1998 = vpop.trf.xlu0
        %v1999 = vpop.trf.xlu0
        %s2000 = scalar_lea.vmem %s158, 896 [#allocation3]
        %2001 = vst [vmem:[%s2000] sm:$0xff] %v1984
        %2002 = vst [vmem:[%s2000 + $0x8] sm:$0xff] %v1985
        %2003 = vst [vmem:[%s2000 + $0x10] sm:$0xff] %v1986
        %2004 = vst [vmem:[%s2000 + $0x18] sm:$0xff] %v1987
        %2005 = vst [vmem:[%s2000 + $0x20] sm:$0xff] %v1988
        %2006 = vst [vmem:[%s2000 + $0x28] sm:$0xff] %v1989
        %2007 = vst [vmem:[%s2000 + $0x30] sm:$0xff] %v1990
        %2008 = vst [vmem:[%s2000 + $0x38] sm:$0xff] %v1991
        %2009 = vst [vmem:[%s2000 + $0x40] sm:$0xff] %v1992
        %2010 = vst [vmem:[%s2000 + $0x48] sm:$0xff] %v1993
        %2011 = vst [vmem:[%s2000 + $0x50] sm:$0xff] %v1994
        %2012 = vst [vmem:[%s2000 + $0x58] sm:$0xff] %v1995
        %2013 = vst [vmem:[%s2000 + $0x60] sm:$0xff] %v1996
        %2014 = vst [vmem:[%s2000 + $0x68] sm:$0xff] %v1997
        %2015 = vst [vmem:[%s2000 + $0x70] sm:$0xff] %v1998
        %2016 = vst [vmem:[%s2000 + $0x78] sm:$0xff] %v1999
        %v2017 = vld [vmem:[%s1758 + $0x10] sm:$0xff]
        %v2018 = vld [vmem:[%s1758 + $0x18] sm:$0xff]
        %v2019 = vld [vmem:[%s1758 + $0x30] sm:$0xff]
        %v2020 = vld [vmem:[%s1758 + $0x38] sm:$0xff]
        %v2021 = vld [vmem:[%s1758 + $0x50] sm:$0xff]
        %v2022 = vld [vmem:[%s1758 + $0x58] sm:$0xff]
        %v2023 = vld [vmem:[%s1758 + $0x70] sm:$0xff]
        %v2024 = vld [vmem:[%s1758 + $0x78] sm:$0xff]
        %v2025 = vld [vmem:[%s1758 + $0x90] sm:$0xff]
        %v2026 = vld [vmem:[%s1758 + $0x98] sm:$0xff]
        %v2027 = vld [vmem:[%s1758 + $0xb0] sm:$0xff]
        %v2028 = vld [vmem:[%s1758 + $0xb8] sm:$0xff]
        %v2029 = vld [vmem:[%s1758 + $0xd0] sm:$0xff]
        %v2030 = vld [vmem:[%s1758 + $0xd8] sm:$0xff]
        %v2031 = vld [vmem:[%s1758 + $0xf0] sm:$0xff]
        %v2032 = vld [vmem:[%s1758 + $0xf8] sm:$0xff]
        %v2033 = vld [vmem:[%s1758 + $0x110] sm:$0xff]
        %v2034 = vld [vmem:[%s1758 + $0x118] sm:$0xff]
        %v2035 = vld [vmem:[%s1758 + $0x130] sm:$0xff]
        %v2036 = vld [vmem:[%s1758 + $0x138] sm:$0xff]
        %v2037 = vld [vmem:[%s1758 + $0x150] sm:$0xff]
        %v2038 = vld [vmem:[%s1758 + $0x158] sm:$0xff]
        %v2039 = vld [vmem:[%s1758 + $0x170] sm:$0xff]
        %v2040 = vld [vmem:[%s1758 + $0x178] sm:$0xff]
        %v2041 = vld [vmem:[%s1758 + $0x190] sm:$0xff]
        %v2042 = vld [vmem:[%s1758 + $0x198] sm:$0xff]
        %v2043 = vld [vmem:[%s1758 + $0x1b0] sm:$0xff]
        %v2044 = vld [vmem:[%s1758 + $0x1b8] sm:$0xff]
        %v2045 = vld [vmem:[%s1758 + $0x1d0] sm:$0xff]
        %v2046 = vld [vmem:[%s1758 + $0x1d8] sm:$0xff]
        %v2047 = vld [vmem:[%s1758 + $0x1f0] sm:$0xff]
        %v2048 = vld [vmem:[%s1758 + $0x1f8] sm:$0xff]
        %2049 = vxpose.xlu0.b32.start [1/16] %v2017, 128
        %2050 = vxpose.xlu0.b32.cont [2/16] %v2019, 128
        %2051 = vxpose.xlu0.b32.cont [3/16] %v2021, 128
        %2052 = vxpose.xlu0.b32.cont [4/16] %v2023, 128
        %2053 = vxpose.xlu0.b32.cont [5/16] %v2025, 128
        %2054 = vxpose.xlu0.b32.cont [6/16] %v2027, 128
        %2055 = vxpose.xlu0.b32.cont [7/16] %v2029, 128
        %2056 = vxpose.xlu0.b32.cont [8/16] %v2031, 128
        %2057 = vxpose.xlu0.b32.cont [9/16] %v2033, 128
        %2058 = vxpose.xlu0.b32.cont [10/16] %v2035, 128
        %2059 = vxpose.xlu0.b32.cont [11/16] %v2037, 128
        %2060 = vxpose.xlu0.b32.cont [12/16] %v2039, 128
        %2061 = vxpose.xlu0.b32.cont [13/16] %v2041, 128
        %2062 = vxpose.xlu0.b32.cont [14/16] %v2043, 128
        %2063 = vxpose.xlu0.b32.cont [15/16] %v2045, 128
        %2064 = vxpose.xlu0.b32.end [16/16] %v2047, 128
        %v2065 = vpop.trf.xlu0
        %v2066 = vpop.trf.xlu0
        %v2067 = vpop.trf.xlu0
        %v2068 = vpop.trf.xlu0
        %v2069 = vpop.trf.xlu0
        %v2070 = vpop.trf.xlu0
        %v2071 = vpop.trf.xlu0
        %v2072 = vpop.trf.xlu0
        %v2073 = vpop.trf.xlu0
        %v2074 = vpop.trf.xlu0
        %v2075 = vpop.trf.xlu0
        %v2076 = vpop.trf.xlu0
        %v2077 = vpop.trf.xlu0
        %v2078 = vpop.trf.xlu0
        %v2079 = vpop.trf.xlu0
        %v2080 = vpop.trf.xlu0
        %2081 = vxpose.xlu0.b32.start [1/16] %v2018, 128
        %2082 = vxpose.xlu0.b32.cont [2/16] %v2020, 128
        %2083 = vxpose.xlu0.b32.cont [3/16] %v2022, 128
        %2084 = vxpose.xlu0.b32.cont [4/16] %v2024, 128
        %2085 = vxpose.xlu0.b32.cont [5/16] %v2026, 128
        %2086 = vxpose.xlu0.b32.cont [6/16] %v2028, 128
        %2087 = vxpose.xlu0.b32.cont [7/16] %v2030, 128
        %2088 = vxpose.xlu0.b32.cont [8/16] %v2032, 128
        %2089 = vxpose.xlu0.b32.cont [9/16] %v2034, 128
        %2090 = vxpose.xlu0.b32.cont [10/16] %v2036, 128
        %2091 = vxpose.xlu0.b32.cont [11/16] %v2038, 128
        %2092 = vxpose.xlu0.b32.cont [12/16] %v2040, 128
        %2093 = vxpose.xlu0.b32.cont [13/16] %v2042, 128
        %2094 = vxpose.xlu0.b32.cont [14/16] %v2044, 128
        %2095 = vxpose.xlu0.b32.cont [15/16] %v2046, 128
        %2096 = vxpose.xlu0.b32.end [16/16] %v2048, 128
        %v2097 = vpop.trf.xlu0
        %v2098 = vpop.trf.xlu0
        %v2099 = vpop.trf.xlu0
        %v2100 = vpop.trf.xlu0
        %v2101 = vpop.trf.xlu0
        %v2102 = vpop.trf.xlu0
        %v2103 = vpop.trf.xlu0
        %v2104 = vpop.trf.xlu0
        %v2105 = vpop.trf.xlu0
        %v2106 = vpop.trf.xlu0
        %v2107 = vpop.trf.xlu0
        %v2108 = vpop.trf.xlu0
        %v2109 = vpop.trf.xlu0
        %v2110 = vpop.trf.xlu0
        %v2111 = vpop.trf.xlu0
        %v2112 = vpop.trf.xlu0
        %2113 = vst [vmem:[#allocation2] sm:$0xff] %v2065
        %2114 = vst [vmem:[#allocation2 + $0x8] sm:$0xff] %v2066
        %2115 = vst [vmem:[#allocation2 + $0x10] sm:$0xff] %v2067
        %2116 = vst [vmem:[#allocation2 + $0x18] sm:$0xff] %v2068
        %2117 = vst [vmem:[#allocation2 + $0x20] sm:$0xff] %v2069
        %2118 = vst [vmem:[#allocation2 + $0x28] sm:$0xff] %v2070
        %2119 = vst [vmem:[#allocation2 + $0x30] sm:$0xff] %v2071
        %2120 = vst [vmem:[#allocation2 + $0x38] sm:$0xff] %v2072
        %2121 = vst [vmem:[#allocation2 + $0x40] sm:$0xff] %v2073
        %2122 = vst [vmem:[#allocation2 + $0x48] sm:$0xff] %v2074
        %2123 = vst [vmem:[#allocation2 + $0x50] sm:$0xff] %v2075
        %2124 = vst [vmem:[#allocation2 + $0x58] sm:$0xff] %v2076
        %2125 = vst [vmem:[#allocation2 + $0x60] sm:$0xff] %v2077
        %2126 = vst [vmem:[#allocation2 + $0x68] sm:$0xff] %v2078
        %2127 = vst [vmem:[#allocation2 + $0x70] sm:$0xff] %v2079
        %2128 = vst [vmem:[#allocation2 + $0x78] sm:$0xff] %v2080
        %2129 = vst [vmem:[#allocation2 + $0x80] sm:$0xff] %v2097
        %2130 = vst [vmem:[#allocation2 + $0x88] sm:$0xff] %v2098
        %2131 = vst [vmem:[#allocation2 + $0x90] sm:$0xff] %v2099
        %2132 = vst [vmem:[#allocation2 + $0x98] sm:$0xff] %v2100
        %2133 = vst [vmem:[#allocation2 + $0xa0] sm:$0xff] %v2101
        %2134 = vst [vmem:[#allocation2 + $0xa8] sm:$0xff] %v2102
        %2135 = vst [vmem:[#allocation2 + $0xb0] sm:$0xff] %v2103
        %2136 = vst [vmem:[#allocation2 + $0xb8] sm:$0xff] %v2104
        %2137 = vst [vmem:[#allocation2 + $0xc0] sm:$0xff] %v2105
        %2138 = vst [vmem:[#allocation2 + $0xc8] sm:$0xff] %v2106
        %2139 = vst [vmem:[#allocation2 + $0xd0] sm:$0xff] %v2107
        %2140 = vst [vmem:[#allocation2 + $0xd8] sm:$0xff] %v2108
        %2141 = vst [vmem:[#allocation2 + $0xe0] sm:$0xff] %v2109
        %2142 = vst [vmem:[#allocation2 + $0xe8] sm:$0xff] %v2110
        %2143 = vst [vmem:[#allocation2 + $0xf0] sm:$0xff] %v2111
        %2144 = vst [vmem:[#allocation2 + $0xf8] sm:$0xff] %v2112
        %v2145 = vld [vmem:[#allocation2] ss:$2 sm:$0xff]
        %v2146 = vld [vmem:[%s307] ss:$2 sm:$0xff]
        %v2147 = vld [vmem:[%s309] ss:$2 sm:$0xff]
        %v2148 = vld [vmem:[%s311] ss:$2 sm:$0xff]
        %v2149 = vld [vmem:[%s313] ss:$2 sm:$0xff]
        %v2150 = vld [vmem:[%s315] ss:$2 sm:$0xff]
        %v2151 = vld [vmem:[%s317] ss:$2 sm:$0xff]
        %v2152 = vld [vmem:[%s319] ss:$2 sm:$0xff]
        %v2153 = vld [vmem:[%s321] ss:$2 sm:$0xff]
        %v2154 = vld [vmem:[%s323] ss:$2 sm:$0xff]
        %v2155 = vld [vmem:[%s325] ss:$2 sm:$0xff]
        %v2156 = vld [vmem:[%s327] ss:$2 sm:$0xff]
        %v2157 = vld [vmem:[%s329] ss:$2 sm:$0xff]
        %v2158 = vld [vmem:[%s331] ss:$2 sm:$0xff]
        %v2159 = vld [vmem:[%s333] ss:$2 sm:$0xff]
        %v2160 = vld [vmem:[%s335] ss:$2 sm:$0xff]
        %2161 = vxpose.xlu0.b32.start [1/16] %v2145, 128
        %2162 = vxpose.xlu0.b32.cont [2/16] %v2146, 128
        %2163 = vxpose.xlu0.b32.cont [3/16] %v2147, 128
        %2164 = vxpose.xlu0.b32.cont [4/16] %v2148, 128
        %2165 = vxpose.xlu0.b32.cont [5/16] %v2149, 128
        %2166 = vxpose.xlu0.b32.cont [6/16] %v2150, 128
        %2167 = vxpose.xlu0.b32.cont [7/16] %v2151, 128
        %2168 = vxpose.xlu0.b32.cont [8/16] %v2152, 128
        %2169 = vxpose.xlu0.b32.cont [9/16] %v2153, 128
        %2170 = vxpose.xlu0.b32.cont [10/16] %v2154, 128
        %2171 = vxpose.xlu0.b32.cont [11/16] %v2155, 128
        %2172 = vxpose.xlu0.b32.cont [12/16] %v2156, 128
        %2173 = vxpose.xlu0.b32.cont [13/16] %v2157, 128
        %2174 = vxpose.xlu0.b32.cont [14/16] %v2158, 128
        %2175 = vxpose.xlu0.b32.cont [15/16] %v2159, 128
        %2176 = vxpose.xlu0.b32.end [16/16] %v2160, 128
        %v2177 = vpop.trf.xlu0
        %v2178 = vpop.trf.xlu0
        %v2179 = vpop.trf.xlu0
        %v2180 = vpop.trf.xlu0
        %v2181 = vpop.trf.xlu0
        %v2182 = vpop.trf.xlu0
        %v2183 = vpop.trf.xlu0
        %v2184 = vpop.trf.xlu0
        %v2185 = vpop.trf.xlu0
        %v2186 = vpop.trf.xlu0
        %v2187 = vpop.trf.xlu0
        %v2188 = vpop.trf.xlu0
        %v2189 = vpop.trf.xlu0
        %v2190 = vpop.trf.xlu0
        %v2191 = vpop.trf.xlu0
        %v2192 = vpop.trf.xlu0
        %s2193 = scalar_lea.vmem %s158, 1408 [#allocation3]
        %2194 = vst [vmem:[%s2193] sm:$0xff] %v2177
        %2195 = vst [vmem:[%s2193 + $0x8] sm:$0xff] %v2178
        %2196 = vst [vmem:[%s2193 + $0x10] sm:$0xff] %v2179
        %2197 = vst [vmem:[%s2193 + $0x18] sm:$0xff] %v2180
        %2198 = vst [vmem:[%s2193 + $0x20] sm:$0xff] %v2181
        %2199 = vst [vmem:[%s2193 + $0x28] sm:$0xff] %v2182
        %2200 = vst [vmem:[%s2193 + $0x30] sm:$0xff] %v2183
        %2201 = vst [vmem:[%s2193 + $0x38] sm:$0xff] %v2184
        %2202 = vst [vmem:[%s2193 + $0x40] sm:$0xff] %v2185
        %2203 = vst [vmem:[%s2193 + $0x48] sm:$0xff] %v2186
        %2204 = vst [vmem:[%s2193 + $0x50] sm:$0xff] %v2187
        %2205 = vst [vmem:[%s2193 + $0x58] sm:$0xff] %v2188
        %2206 = vst [vmem:[%s2193 + $0x60] sm:$0xff] %v2189
        %2207 = vst [vmem:[%s2193 + $0x68] sm:$0xff] %v2190
        %2208 = vst [vmem:[%s2193 + $0x70] sm:$0xff] %v2191
        %2209 = vst [vmem:[%s2193 + $0x78] sm:$0xff] %v2192
        %v2210 = vld [vmem:[%s385] ss:$2 sm:$0xff]
        %v2211 = vld [vmem:[%s387] ss:$2 sm:$0xff]
        %v2212 = vld [vmem:[%s389] ss:$2 sm:$0xff]
        %v2213 = vld [vmem:[%s391] ss:$2 sm:$0xff]
        %v2214 = vld [vmem:[%s393] ss:$2 sm:$0xff]
        %v2215 = vld [vmem:[%s395] ss:$2 sm:$0xff]
        %v2216 = vld [vmem:[%s397] ss:$2 sm:$0xff]
        %v2217 = vld [vmem:[%s399] ss:$2 sm:$0xff]
        %v2218 = vld [vmem:[%s401] ss:$2 sm:$0xff]
        %v2219 = vld [vmem:[%s403] ss:$2 sm:$0xff]
        %v2220 = vld [vmem:[%s405] ss:$2 sm:$0xff]
        %v2221 = vld [vmem:[%s407] ss:$2 sm:$0xff]
        %v2222 = vld [vmem:[%s409] ss:$2 sm:$0xff]
        %v2223 = vld [vmem:[%s411] ss:$2 sm:$0xff]
        %v2224 = vld [vmem:[%s413] ss:$2 sm:$0xff]
        %v2225 = vld [vmem:[%s415] ss:$2 sm:$0xff]
        %2226 = vxpose.xlu0.b32.start [1/16] %v2210, 128
        %2227 = vxpose.xlu0.b32.cont [2/16] %v2211, 128
        %2228 = vxpose.xlu0.b32.cont [3/16] %v2212, 128
        %2229 = vxpose.xlu0.b32.cont [4/16] %v2213, 128
        %2230 = vxpose.xlu0.b32.cont [5/16] %v2214, 128
        %2231 = vxpose.xlu0.b32.cont [6/16] %v2215, 128
        %2232 = vxpose.xlu0.b32.cont [7/16] %v2216, 128
        %2233 = vxpose.xlu0.b32.cont [8/16] %v2217, 128
        %2234 = vxpose.xlu0.b32.cont [9/16] %v2218, 128
        %2235 = vxpose.xlu0.b32.cont [10/16] %v2219, 128
        %2236 = vxpose.xlu0.b32.cont [11/16] %v2220, 128
        %2237 = vxpose.xlu0.b32.cont [12/16] %v2221, 128
        %2238 = vxpose.xlu0.b32.cont [13/16] %v2222, 128
        %2239 = vxpose.xlu0.b32.cont [14/16] %v2223, 128
        %2240 = vxpose.xlu0.b32.cont [15/16] %v2224, 128
        %2241 = vxpose.xlu0.b32.end [16/16] %v2225, 128
        %v2242 = vpop.trf.xlu0
        %v2243 = vpop.trf.xlu0
        %v2244 = vpop.trf.xlu0
        %v2245 = vpop.trf.xlu0
        %v2246 = vpop.trf.xlu0
        %v2247 = vpop.trf.xlu0
        %v2248 = vpop.trf.xlu0
        %v2249 = vpop.trf.xlu0
        %v2250 = vpop.trf.xlu0
        %v2251 = vpop.trf.xlu0
        %v2252 = vpop.trf.xlu0
        %v2253 = vpop.trf.xlu0
        %v2254 = vpop.trf.xlu0
        %v2255 = vpop.trf.xlu0
        %v2256 = vpop.trf.xlu0
        %v2257 = vpop.trf.xlu0
        %s2258 = scalar_lea.vmem %s158, 1920 [#allocation3]
        %2259 = vst [vmem:[%s2258] sm:$0xff] %v2242
        %2260 = vst [vmem:[%s2258 + $0x8] sm:$0xff] %v2243
        %2261 = vst [vmem:[%s2258 + $0x10] sm:$0xff] %v2244
        %2262 = vst [vmem:[%s2258 + $0x18] sm:$0xff] %v2245
        %2263 = vst [vmem:[%s2258 + $0x20] sm:$0xff] %v2246
        %2264 = vst [vmem:[%s2258 + $0x28] sm:$0xff] %v2247
        %2265 = vst [vmem:[%s2258 + $0x30] sm:$0xff] %v2248
        %2266 = vst [vmem:[%s2258 + $0x38] sm:$0xff] %v2249
        %2267 = vst [vmem:[%s2258 + $0x40] sm:$0xff] %v2250
        %2268 = vst [vmem:[%s2258 + $0x48] sm:$0xff] %v2251
        %2269 = vst [vmem:[%s2258 + $0x50] sm:$0xff] %v2252
        %2270 = vst [vmem:[%s2258 + $0x58] sm:$0xff] %v2253
        %2271 = vst [vmem:[%s2258 + $0x60] sm:$0xff] %v2254
        %2272 = vst [vmem:[%s2258 + $0x68] sm:$0xff] %v2255
        %2273 = vst [vmem:[%s2258 + $0x70] sm:$0xff] %v2256
        %2274 = vst [vmem:[%s2258 + $0x78] sm:$0xff] %v2257
        %s2275 = sand.u32 %s76, 1
        %s2276 = scalar_lea.sflag [#allocation4], %s2275
        %s2277 = sand.u32 %s76, 1
        %s2278 = smul.addr %s2277, 2048
        %s2279 = scalar_lea.vmem [#allocation3], %s2278
        // Predicated region
        $region25: #{space_to_depth.1} parent=23 // pred_check
          %p2280 = pneg %p86
        $region26: #{space_to_depth.1} parent=23 // pred_check_branch
          %2282 = sbr.rel (%p2280) target = $region28
        $region27: #{space_to_depth.1} parent=23 // pred_region
          %s2283 = smul.u32 4, %s21
          %s2284 = smul.u32 16, %s22
          %s2286 = ssub.s32 32768, 32768
          %2287 = vsyncadd %s2276, %s2286
          %s2288 = smul.addr %s2283, 16
          %s2289 = sadd.s32 %s2284, %s2288
          %s2290 = smul.addr %s20, 256
          %s2291 = sadd.s32 %s2289, %s2290
          %s2292 = smul.addr %s2291, 128
          %s2293 = scalar_lea.hbm %s1, %s2292
          %s2294 = sshll.u32 %s2279, 4
          %s2295 = int_to_ptr.vmem [resolvable:$true] %s2294
          %2300 = dma.vmem_to_hbm [thread:$0]  %s2295, 32768, %s2293, %s2276, 128, 128, 8
        $region28: #{space_to_depth.1} parent=23 // pred_fallthru
          _
      $region24: #{space_to_depth.1} parent=5 // pred_fallthru
        _
      %p2301 = scmp.le.s32.totalorder 2, %s10
      // Predicated region
      $region29: #{space_to_depth.1} parent=5 // pred_check
        %p2302 = pneg %p2301
      $region30: #{space_to_depth.1} parent=5 // pred_check_branch
        %2304 = sbr.rel (%p2302) target = $region32
      $region31: #{space_to_depth.1} parent=5 // pred_region
        %s2305 = ssub.s32 %s10, 2
        // Predicated region
        $region33: #{space_to_depth.1} parent=31 // pred_check
          %p2306 = pneg %p92
        $region34: #{space_to_depth.1} parent=31 // pred_check_branch
          %2308 = sbr.rel (%p2306) target = $region36
        $region35: #{space_to_depth.1} parent=31 // pred_region
          %s2309 = sand.u32 %s77, 1
          %s2310 = scalar_lea.sflag [#allocation4], %s2309
          %s2311 = sand.u32 %s77, 1
          %s2312 = smul.addr %s2311, 2048
          %s2313 = scalar_lea.vmem [#allocation3], %s2312
          %2314 = dma.done %s2310, 32768
        $region36: #{space_to_depth.1} parent=31 // pred_fallthru
          _
      $region32: #{space_to_depth.1} parent=5 // pred_fallthru
        _
    $region6: #{space_to_depth.1} parent=1 // loop_footer
      %s14 = sadd.s32 1, %s10
    $region7: #{space_to_depth.1} parent=1 // loop_footer_branch
      %9 = sbr.rel target = $region3
    $region8: #{space_to_depth.1} parent=1 // loop_exit
      _
    %2315 = vsyncpa [#allocation4], 1
    %s2316 = scalar_lea.sflag [#allocation4], 1
    %2317 = vsyncpa %s2316, 1

</llo_original>
